<compile_context>
chip_gen: v7x
topology: tpu7x:2x2x1
jax: 0.10.0
libtpu: 0.0.40
codegen_flags: <defaults>
</compile_context>

<pallas_src>
import functools

import jax
import jax.numpy as jnp
from jax import lax
from jax.experimental import pallas as pl
from jax.experimental.pallas import tpu as pltpu


# --------------------------------------------------------------------------
# Kernel
# --------------------------------------------------------------------------
def _attack_kernel(x_ref, onehot_ref, w_ref, b_ref, adv_ref, logits_ref, *,
                   eps, attack_rate, num_steps, true_batch):
  x = x_ref[...]              # (TB, D)  original image tile (flattened, f32)
  onehot = onehot_ref[...]    # (TB, Kp) one-hot target (padded classes = 0)
  w = w_ref[...]              # (Kp, D)  normalization-folded weights (bf16)
  b = b_ref[...]              # (1, Kp)  folded bias (padded classes = -1e9)

  mm_dtype = w.dtype
  inv_b = 1.0 / float(true_batch)

  def forward(adv):
    # logits = adv @ w.T + b   (contract D; rhs-transposed dot_general, no
    # materialized W^T and no second weight copy)
    return lax.dot_general(
        adv.astype(mm_dtype), w,
        dimension_numbers=(((1,), (1,)), ((), ())),
        preferred_element_type=jnp.float32) + b

  def body(_, carry):
    adv, _prev_logits = carry
    logits = forward(adv)                                   # model(norm(adv))

    # CrossEntropyLoss(reduction='none').mean() backward:
    #   dL/dlogits = (softmax(logits) - onehot) / B
    m = jnp.max(logits, axis=-1, keepdims=True)
    e = jnp.exp(logits - m)
    denom = jnp.sum(e, axis=-1, keepdims=True)
    p = e * pl.reciprocal(denom, approx=True)               # EUP, off VPU path
    dlogits = (p - onehot) * inv_b

    # chain rule through the (normalization-folded) linear model:
    #   dadv = dlogits @ w_eff    (contract Kp; same single weight tensor)
    dadv = lax.dot_general(
        dlogits.astype(mm_dtype), w,
        dimension_numbers=(((1,), (0,)), ((), ())),
        preferred_element_type=jnp.float32)

    # torch.autograd.grad(-loss) => grad = -dadv.
    # L2Attack.apply_attack_iteration: adv += attack_rate * grad / ||grad||_2
    # Since ||grad|| == ||dadv||, fuse the sign into the scalar factor:
    g_inv = lax.rsqrt(jnp.sum(dadv * dadv, axis=-1, keepdims=True) + 1e-24)
    adv_new = adv - (attack_rate * g_inv) * dadv

    # L2Attack.project_back: project (adv - x) into the eps L2-ball
    delta = adv_new - x
    d_inv = lax.rsqrt(jnp.sum(delta * delta, axis=-1, keepdims=True) + 1e-24)
    scale = jnp.minimum(1.0, eps * d_inv)
    return x + delta * scale, logits

  # No wasted initial forward: carry logits start at zeros (num_steps >= 1).
  init = (x, jnp.zeros_like(onehot))
  adv, logits = lax.fori_loop(0, num_steps, body, init, unroll=True)

  adv_ref[...] = adv
  # `output` of the torch module is the forward pass from the LAST attack
  # iteration (i.e. on the adv image *before* the final update).
  logits_ref[...] = logits


# --------------------------------------------------------------------------
# Helpers / wrapper
# --------------------------------------------------------------------------
def _fold_normalization(w, b, mean, std, C, H, Wd):
  """Fold (x - mean)/std into the linear layer: x @ w_eff.T + b_eff."""
  D = C * H * Wd
  mean_vec = jnp.broadcast_to(mean.astype(jnp.float32)[:, None, None],
                              (C, H, Wd)).reshape(D)
  std_vec = jnp.broadcast_to(std.astype(jnp.float32)[:, None, None],
                             (C, H, Wd)).reshape(D)
  w_eff = w.astype(jnp.float32) * (1.0 / std_vec)[None, :]      # (K, D)
  b_eff = b.astype(jnp.float32) - w_eff @ mean_vec               # (K,)
  return w_eff, b_eff


def model_attacker_forward(x_nchw, target_class, w, b, mean, std, *,
                           eps, attack_rate=0.01, num_steps=8,
                           class_pad=128, matmul_dtype=jnp.bfloat16):
  """Returns (output_logits, adv_image) just like ModelAttacker.forward."""
  B, C, H, Wd = x_nchw.shape
  D = C * H * Wd
  K = w.shape[0]
  Kp = class_pad
  assert Kp >= K and Kp % 128 == 0, "class_pad must be >= K and multiple of 128"
  assert num_steps >= 1

  # --- fold normalization into a single effective weight / bias -----------
  w_eff, b_eff = _fold_normalization(w, b, mean, std, C, H, Wd)
  w_pad = jnp.zeros((Kp, D), jnp.float32).at[:K].set(w_eff)
  b_pad = jnp.full((1, Kp), -1e9, jnp.float32).at[0, :K].set(b_eff)
  w_mm = w_pad.astype(matmul_dtype)          # single bf16 copy for the MXU

  # --- pad batch to 8-sublane multiple; tile batch over the grid ----------
  x_flat = x_nchw.reshape(B, D).astype(jnp.float32)
  onehot = jax.nn.one_hot(target_class, Kp, dtype=jnp.float32)
  Bp = ((B + 7) // 8) * 8
  if Bp <= 128:
    TB = Bp
  else:
    TB = 128
    Bp = ((Bp + TB - 1) // TB) * TB
  num_tiles = Bp // TB
  x_pad = jnp.zeros((Bp, D), jnp.float32).at[:B].set(x_flat)
  onehot_pad = jnp.zeros((Bp, Kp), jnp.float32).at[:B].set(onehot)

  # --- VMEM budget (double-buffered pipeline copies + f32 temps) ----------
  mm_isz = jnp.dtype(matmul_dtype).itemsize
  est = (2 * (Kp * D * mm_isz                       # weights
              + TB * D * 4 + TB * Kp * 4            # x + onehot tiles
              + TB * D * 4 + TB * Kp * 4            # adv + logits tiles
              + Kp * 4)                             # bias
         + 10 * TB * D * 4                          # in-kernel f32 temps
         + (2 << 20))
  vmem_limit = int(min(max(est, 4 << 20), 64 << 20))

  kernel = functools.partial(_attack_kernel, eps=float(eps),
                             attack_rate=float(attack_rate),
                             num_steps=int(num_steps), true_batch=B)

  adv_flat, logits_pad = pl.pallas_call(
      kernel,
      grid=(num_tiles,),
      in_specs=[
          pl.BlockSpec((TB, D), lambda i: (i, 0)),    # x (batch-tiled)
          pl.BlockSpec((TB, Kp), lambda i: (i, 0)),   # onehot (batch-tiled)
          pl.BlockSpec((Kp, D), lambda i: (0, 0)),    # folded W (resident)
          pl.BlockSpec((1, Kp), lambda i: (0, 0)),    # folded bias (resident)
      ],
      out_specs=[
          pl.BlockSpec((TB, D), lambda i: (i, 0)),
          pl.BlockSpec((TB, Kp), lambda i: (i, 0)),
      ],
      out_shape=(
          jax.ShapeDtypeStruct((Bp, D), jnp.float32),
          jax.ShapeDtypeStruct((Bp, Kp), jnp.float32),
      ),
      compiler_params=pltpu.CompilerParams(
          dimension_semantics=("parallel",),
          vmem_limit_bytes=vmem_limit),
  )(x_pad, onehot_pad, w_mm, b_pad)

  output = logits_pad[:B, :K]
  adv_image = adv_flat[:B].reshape(B, C, H, Wd)
  return output, adv_image


# --------------------------------------------------------------------------
# Pure-JAX reference (same math, same dtype choices) for the self-check
# --------------------------------------------------------------------------
def _reference(x_nchw, target_class, w, b, mean, std, *, eps, attack_rate,
               num_steps, matmul_dtype=jnp.bfloat16):
  B, C, H, Wd = x_nchw.shape
  D = C * H * Wd
  K = w.shape[0]
  x_flat = x_nchw.reshape(B, D).astype(jnp.float32)
  w_eff, b_eff = _fold_normalization(w, b, mean, std, C, H, Wd)
  w_mm = w_eff.astype(matmul_dtype)
  onehot = jax.nn.one_hot(target_class, K, dtype=jnp.float32)

  adv = x_flat
  logits = None
  for _ in range(num_steps):
    logits = lax.dot_general(adv.astype(matmul_dtype), w_mm,
                             (((1,), (1,)), ((), ())),
                             preferred_element_type=jnp.float32) + b_eff[None, :]
    p = jax.nn.softmax(logits, axis=-1)
    dlogits = (p - onehot) / B
    grad = -lax.dot_general(dlogits.astype(matmul_dtype), w_mm,
                            (((1,), (0,)), ((), ())),
                            preferred_element_type=jnp.float32)
    g_inv = lax.rsqrt(jnp.sum(grad * grad, -1, keepdims=True) + 1e-24)
    adv = adv + (attack_rate * g_inv) * grad
    delta = adv - x_flat
    d_inv = lax.rsqrt(jnp.sum(delta * delta, -1, keepdims=True) + 1e-24)
    adv = x_flat + delta * jnp.minimum(1.0, eps * d_inv)
  return logits, adv.reshape(x_nchw.shape)


# --------------------------------------------------------------------------
if __name__ == "__main__":
  B, C, H, Wd = 2, 3, 16, 16
  K = 10
  eps, attack_rate, num_steps = 0.5, 0.01, 8

  key = jax.random.PRNGKey(0)
  kx, kt, kw, kb = jax.random.split(key, 4)
  x = jax.random.normal(kx, (B, C, H, Wd), jnp.float32)
  target = jax.random.randint(kt, (B,), 0, K)
  w = jax.random.normal(kw, (K, C * H * Wd), jnp.float32) * 0.05
  b = jax.random.normal(kb, (K,), jnp.float32) * 0.1
  mean = jnp.array([0.485, 0.456, 0.406], jnp.float32)
  std = jnp.array([0.229, 0.224, 0.225], jnp.float32)

  output, adv_image = model_attacker_forward(
      x, target, w, b, mean, std,
      eps=eps, attack_rate=attack_rate, num_steps=num_steps)
  output, adv_image = jax.block_until_ready((output, adv_image))

  ref_out, ref_adv = _reference(
      x, target, w, b, mean, std,
      eps=eps, attack_rate=attack_rate, num_steps=num_steps)

  assert output.shape == (B, K) and adv_image.shape == (B, C, H, Wd)
  assert bool(jnp.all(jnp.isfinite(output))) and bool(
      jnp.all(jnp.isfinite(adv_image)))
  # perturbation respects the eps L2-ball
  delta_norm = jnp.sqrt(jnp.sum((adv_image - x).reshape(B, -1) ** 2, axis=-1))
  assert bool(jnp.all(delta_norm <= eps + 1e-4))
  # matches the pure-JAX reference
  assert jnp.allclose(adv_image, ref_adv, rtol=1e-2, atol=1e-2)
  assert jnp.allclose(output, ref_out, rtol=1e-2, atol=1e-2)

  print("KERNEL_OK")
</pallas_src>

<mosaic_0001>
module attributes {stable_mosaic.version = 11 : i64} {
  func.func @_attack_kernel(%arg0: i32, %arg1: memref<8x768xf32, #tpu.memory_space<vmem>>, %arg2: memref<8x128xf32, #tpu.memory_space<vmem>>, %arg3: memref<128x768xbf16, #tpu.memory_space<vmem>>, %arg4: memref<1x128xf32, #tpu.memory_space<vmem>>, %arg5: memref<8x768xf32, #tpu.memory_space<vmem>>, %arg6: memref<8x128xf32, #tpu.memory_space<vmem>>) attributes {dimension_semantics = [#tpu.dimension_semantics<parallel>], iteration_bounds = array<i64: 1>, scalar_prefetch = 0 : i64, scratch_operands = 0 : i64, tpu.core_type = #tpu.core_type<tc>, window_params = [{transform_indices = @transform_0, window_bounds = array<i64: 8, 768>}, {transform_indices = @transform_1, window_bounds = array<i64: 8, 128>}, {pipeline_mode = #tpu.pipeline_mode<synchronous>, transform_indices = @transform_2, window_bounds = array<i64: 128, 768>}, {pipeline_mode = #tpu.pipeline_mode<synchronous>, transform_indices = @transform_3, window_bounds = array<i64: 1, 128>}, {transform_indices = @transform_4, window_bounds = array<i64: 8, 768>}, {transform_indices = @transform_5, window_bounds = array<i64: 8, 128>}]} {
    %c0 = arith.constant 0 : index
    %c0_0 = arith.constant 0 : index
    %0 = vector.load %arg1[%c0, %c0_0] : memref<8x768xf32, #tpu.memory_space<vmem>>, vector<8x768xf32>
    %c0_1 = arith.constant 0 : index
    %c0_2 = arith.constant 0 : index
    %1 = vector.load %arg2[%c0_1, %c0_2] : memref<8x128xf32, #tpu.memory_space<vmem>>, vector<8x128xf32>
    %c0_3 = arith.constant 0 : index
    %c0_4 = arith.constant 0 : index
    %2 = vector.load %arg3[%c0_3, %c0_4] : memref<128x768xbf16, #tpu.memory_space<vmem>>, vector<128x768xbf16>
    %c0_5 = arith.constant 0 : index
    %c0_6 = arith.constant 0 : index
    %3 = vector.load %arg4[%c0_5, %c0_6] : memref<1x128xf32, #tpu.memory_space<vmem>>, vector<1x128xf32>
    %cst = arith.constant 0.000000e+00 : f32
    %4 = vector.broadcast %cst : f32 to vector<8x128xf32>
    %c0_i32 = arith.constant 0 : i32
    %5 = arith.truncf %0 : vector<8x768xf32> to vector<8x768xbf16>
    %cst_7 = arith.constant dense<0.000000e+00> : vector<8x128xf32>
    %6 = tpu.matmul %5, %2, %cst_7 {dimension_numbers = #tpu.dot_dimension_numbers<[1], [1], [0], [0], [0, 0, 1, 0], [], []>} : vector<8x768xbf16>, vector<128x768xbf16>, vector<8x128xf32> -> vector<8x128xf32>
    %7 = vector.broadcast %3 : vector<1x128xf32> to vector<8x128xf32>
    %8 = arith.addf %6, %7 : vector<8x128xf32>
    %cst_8 = arith.constant dense<0xFF800000> : vector<8xf32>
    %9 = vector.multi_reduction <maximumf>, %8, %cst_8 [1] : vector<8x128xf32> to vector<8xf32>
    %10 = vector.shape_cast %9 : vector<8xf32> to vector<8x1xf32>
    %11 = vector.broadcast %10 : vector<8x1xf32> to vector<8x128xf32>
    %12 = arith.subf %8, %11 : vector<8x128xf32>
    %13 = math.exp %12 : vector<8x128xf32>
    %cst_9 = arith.constant dense<0.000000e+00> : vector<8xf32>
    %14 = vector.multi_reduction <add>, %13, %cst_9 [1] : vector<8x128xf32> to vector<8xf32>
    %15 = vector.shape_cast %14 : vector<8xf32> to vector<8x1xf32>
    %16 = tpu.reciprocal %15 {approx = true} : vector<8x1xf32> -> vector<8x1xf32>
    %17 = vector.broadcast %16 : vector<8x1xf32> to vector<8x128xf32>
    %18 = arith.mulf %13, %17 : vector<8x128xf32>
    %19 = arith.subf %18, %1 : vector<8x128xf32>
    %cst_10 = arith.constant 5.000000e-01 : f32
    %20 = vector.broadcast %cst_10 : f32 to vector<8x128xf32>
    %21 = arith.mulf %19, %20 : vector<8x128xf32>
    %22 = arith.truncf %21 : vector<8x128xf32> to vector<8x128xbf16>
    %cst_11 = arith.constant dense<0.000000e+00> : vector<8x768xf32>
    %23 = tpu.matmul %22, %2, %cst_11 {dimension_numbers = #tpu.dot_dimension_numbers<[1], [0], [0], [1], [0, 0, 1, 1], [], []>} : vector<8x128xbf16>, vector<128x768xbf16>, vector<8x768xf32> -> vector<8x768xf32>
    %24 = arith.mulf %23, %23 : vector<8x768xf32>
    %cst_12 = arith.constant dense<0.000000e+00> : vector<8xf32>
    %25 = vector.multi_reduction <add>, %24, %cst_12 [1] : vector<8x768xf32> to vector<8xf32>
    %26 = vector.shape_cast %25 : vector<8xf32> to vector<8x1xf32>
    %cst_13 = arith.constant 1.000000e-24 : f32
    %27 = vector.broadcast %cst_13 : f32 to vector<8x1xf32>
    %28 = arith.addf %26, %27 : vector<8x1xf32>
    %29 = math.rsqrt %28 : vector<8x1xf32>
    %cst_14 = arith.constant 0.00999999977 : f32
    %30 = vector.broadcast %cst_14 : f32 to vector<8x1xf32>
    %31 = arith.mulf %30, %29 : vector<8x1xf32>
    %32 = vector.broadcast %31 : vector<8x1xf32> to vector<8x768xf32>
    %33 = arith.mulf %32, %23 : vector<8x768xf32>
    %34 = arith.subf %0, %33 : vector<8x768xf32>
    %35 = arith.subf %34, %0 : vector<8x768xf32>
    %36 = arith.mulf %35, %35 : vector<8x768xf32>
    %cst_15 = arith.constant dense<0.000000e+00> : vector<8xf32>
    %37 = vector.multi_reduction <add>, %36, %cst_15 [1] : vector<8x768xf32> to vector<8xf32>
    %38 = vector.shape_cast %37 : vector<8xf32> to vector<8x1xf32>
    %cst_16 = arith.constant 1.000000e-24 : f32
    %39 = vector.broadcast %cst_16 : f32 to vector<8x1xf32>
    %40 = arith.addf %38, %39 : vector<8x1xf32>
    %41 = math.rsqrt %40 : vector<8x1xf32>
    %cst_17 = arith.constant 5.000000e-01 : f32
    %42 = vector.broadcast %cst_17 : f32 to vector<8x1xf32>
    %43 = arith.mulf %42, %41 : vector<8x1xf32>
    %cst_18 = arith.constant 1.000000e+00 : f32
    %44 = vector.broadcast %cst_18 : f32 to vector<8x1xf32>
    %45 = arith.minimumf %44, %43 : vector<8x1xf32>
    %46 = vector.broadcast %45 : vector<8x1xf32> to vector<8x768xf32>
    %47 = arith.mulf %35, %46 : vector<8x768xf32>
    %48 = arith.addf %0, %47 : vector<8x768xf32>
    %c1_i32 = arith.constant 1 : i32
    %49 = arith.truncf %48 : vector<8x768xf32> to vector<8x768xbf16>
    %cst_19 = arith.constant dense<0.000000e+00> : vector<8x128xf32>
    %50 = tpu.matmul %49, %2, %cst_19 {dimension_numbers = #tpu.dot_dimension_numbers<[1], [1], [0], [0], [0, 0, 1, 0], [], []>} : vector<8x768xbf16>, vector<128x768xbf16>, vector<8x128xf32> -> vector<8x128xf32>
    %51 = vector.broadcast %3 : vector<1x128xf32> to vector<8x128xf32>
    %52 = arith.addf %50, %51 : vector<8x128xf32>
    %cst_20 = arith.constant dense<0xFF800000> : vector<8xf32>
    %53 = vector.multi_reduction <maximumf>, %52, %cst_20 [1] : vector<8x128xf32> to vector<8xf32>
    %54 = vector.shape_cast %53 : vector<8xf32> to vector<8x1xf32>
    %55 = vector.broadcast %54 : vector<8x1xf32> to vector<8x128xf32>
    %56 = arith.subf %52, %55 : vector<8x128xf32>
    %57 = math.exp %56 : vector<8x128xf32>
    %cst_21 = arith.constant dense<0.000000e+00> : vector<8xf32>
    %58 = vector.multi_reduction <add>, %57, %cst_21 [1] : vector<8x128xf32> to vector<8xf32>
    %59 = vector.shape_cast %58 : vector<8xf32> to vector<8x1xf32>
    %60 = tpu.reciprocal %59 {approx = true} : vector<8x1xf32> -> vector<8x1xf32>
    %61 = vector.broadcast %60 : vector<8x1xf32> to vector<8x128xf32>
    %62 = arith.mulf %57, %61 : vector<8x128xf32>
    %63 = arith.subf %62, %1 : vector<8x128xf32>
    %cst_22 = arith.constant 5.000000e-01 : f32
    %64 = vector.broadcast %cst_22 : f32 to vector<8x128xf32>
    %65 = arith.mulf %63, %64 : vector<8x128xf32>
    %66 = arith.truncf %65 : vector<8x128xf32> to vector<8x128xbf16>
    %cst_23 = arith.constant dense<0.000000e+00> : vector<8x768xf32>
    %67 = tpu.matmul %66, %2, %cst_23 {dimension_numbers = #tpu.dot_dimension_numbers<[1], [0], [0], [1], [0, 0, 1, 1], [], []>} : vector<8x128xbf16>, vector<128x768xbf16>, vector<8x768xf32> -> vector<8x768xf32>
    %68 = arith.mulf %67, %67 : vector<8x768xf32>
    %cst_24 = arith.constant dense<0.000000e+00> : vector<8xf32>
    %69 = vector.multi_reduction <add>, %68, %cst_24 [1] : vector<8x768xf32> to vector<8xf32>
    %70 = vector.shape_cast %69 : vector<8xf32> to vector<8x1xf32>
    %cst_25 = arith.constant 1.000000e-24 : f32
    %71 = vector.broadcast %cst_25 : f32 to vector<8x1xf32>
    %72 = arith.addf %70, %71 : vector<8x1xf32>
    %73 = math.rsqrt %72 : vector<8x1xf32>
    %cst_26 = arith.constant 0.00999999977 : f32
    %74 = vector.broadcast %cst_26 : f32 to vector<8x1xf32>
    %75 = arith.mulf %74, %73 : vector<8x1xf32>
    %76 = vector.broadcast %75 : vector<8x1xf32> to vector<8x768xf32>
    %77 = arith.mulf %76, %67 : vector<8x768xf32>
    %78 = arith.subf %48, %77 : vector<8x768xf32>
    %79 = arith.subf %78, %0 : vector<8x768xf32>
    %80 = arith.mulf %79, %79 : vector<8x768xf32>
    %cst_27 = arith.constant dense<0.000000e+00> : vector<8xf32>
    %81 = vector.multi_reduction <add>, %80, %cst_27 [1] : vector<8x768xf32> to vector<8xf32>
    %82 = vector.shape_cast %81 : vector<8xf32> to vector<8x1xf32>
    %cst_28 = arith.constant 1.000000e-24 : f32
    %83 = vector.broadcast %cst_28 : f32 to vector<8x1xf32>
    %84 = arith.addf %82, %83 : vector<8x1xf32>
    %85 = math.rsqrt %84 : vector<8x1xf32>
    %cst_29 = arith.constant 5.000000e-01 : f32
    %86 = vector.broadcast %cst_29 : f32 to vector<8x1xf32>
    %87 = arith.mulf %86, %85 : vector<8x1xf32>
    %cst_30 = arith.constant 1.000000e+00 : f32
    %88 = vector.broadcast %cst_30 : f32 to vector<8x1xf32>
    %89 = arith.minimumf %88, %87 : vector<8x1xf32>
    %90 = vector.broadcast %89 : vector<8x1xf32> to vector<8x768xf32>
    %91 = arith.mulf %79, %90 : vector<8x768xf32>
    %92 = arith.addf %0, %91 : vector<8x768xf32>
    %c2_i32 = arith.constant 2 : i32
    %93 = arith.truncf %92 : vector<8x768xf32> to vector<8x768xbf16>
    %cst_31 = arith.constant dense<0.000000e+00> : vector<8x128xf32>
    %94 = tpu.matmul %93, %2, %cst_31 {dimension_numbers = #tpu.dot_dimension_numbers<[1], [1], [0], [0], [0, 0, 1, 0], [], []>} : vector<8x768xbf16>, vector<128x768xbf16>, vector<8x128xf32> -> vector<8x128xf32>
    %95 = vector.broadcast %3 : vector<1x128xf32> to vector<8x128xf32>
    %96 = arith.addf %94, %95 : vector<8x128xf32>
    %cst_32 = arith.constant dense<0xFF800000> : vector<8xf32>
    %97 = vector.multi_reduction <maximumf>, %96, %cst_32 [1] : vector<8x128xf32> to vector<8xf32>
    %98 = vector.shape_cast %97 : vector<8xf32> to vector<8x1xf32>
    %99 = vector.broadcast %98 : vector<8x1xf32> to vector<8x128xf32>
    %100 = arith.subf %96, %99 : vector<8x128xf32>
    %101 = math.exp %100 : vector<8x128xf32>
    %cst_33 = arith.constant dense<0.000000e+00> : vector<8xf32>
    %102 = vector.multi_reduction <add>, %101, %cst_33 [1] : vector<8x128xf32> to vector<8xf32>
    %103 = vector.shape_cast %102 : vector<8xf32> to vector<8x1xf32>
    %104 = tpu.reciprocal %103 {approx = true} : vector<8x1xf32> -> vector<8x1xf32>
    %105 = vector.broadcast %104 : vector<8x1xf32> to vector<8x128xf32>
    %106 = arith.mulf %101, %105 : vector<8x128xf32>
    %107 = arith.subf %106, %1 : vector<8x128xf32>
    %cst_34 = arith.constant 5.000000e-01 : f32
    %108 = vector.broadcast %cst_34 : f32 to vector<8x128xf32>
    %109 = arith.mulf %107, %108 : vector<8x128xf32>
    %110 = arith.truncf %109 : vector<8x128xf32> to vector<8x128xbf16>
    %cst_35 = arith.constant dense<0.000000e+00> : vector<8x768xf32>
    %111 = tpu.matmul %110, %2, %cst_35 {dimension_numbers = #tpu.dot_dimension_numbers<[1], [0], [0], [1], [0, 0, 1, 1], [], []>} : vector<8x128xbf16>, vector<128x768xbf16>, vector<8x768xf32> -> vector<8x768xf32>
    %112 = arith.mulf %111, %111 : vector<8x768xf32>
    %cst_36 = arith.constant dense<0.000000e+00> : vector<8xf32>
    %113 = vector.multi_reduction <add>, %112, %cst_36 [1] : vector<8x768xf32> to vector<8xf32>
    %114 = vector.shape_cast %113 : vector<8xf32> to vector<8x1xf32>
    %cst_37 = arith.constant 1.000000e-24 : f32
    %115 = vector.broadcast %cst_37 : f32 to vector<8x1xf32>
    %116 = arith.addf %114, %115 : vector<8x1xf32>
    %117 = math.rsqrt %116 : vector<8x1xf32>
    %cst_38 = arith.constant 0.00999999977 : f32
    %118 = vector.broadcast %cst_38 : f32 to vector<8x1xf32>
    %119 = arith.mulf %118, %117 : vector<8x1xf32>
    %120 = vector.broadcast %119 : vector<8x1xf32> to vector<8x768xf32>
    %121 = arith.mulf %120, %111 : vector<8x768xf32>
    %122 = arith.subf %92, %121 : vector<8x768xf32>
    %123 = arith.subf %122, %0 : vector<8x768xf32>
    %124 = arith.mulf %123, %123 : vector<8x768xf32>
    %cst_39 = arith.constant dense<0.000000e+00> : vector<8xf32>
    %125 = vector.multi_reduction <add>, %124, %cst_39 [1] : vector<8x768xf32> to vector<8xf32>
    %126 = vector.shape_cast %125 : vector<8xf32> to vector<8x1xf32>
    %cst_40 = arith.constant 1.000000e-24 : f32
    %127 = vector.broadcast %cst_40 : f32 to vector<8x1xf32>
    %128 = arith.addf %126, %127 : vector<8x1xf32>
    %129 = math.rsqrt %128 : vector<8x1xf32>
    %cst_41 = arith.constant 5.000000e-01 : f32
    %130 = vector.broadcast %cst_41 : f32 to vector<8x1xf32>
    %131 = arith.mulf %130, %129 : vector<8x1xf32>
    %cst_42 = arith.constant 1.000000e+00 : f32
    %132 = vector.broadcast %cst_42 : f32 to vector<8x1xf32>
    %133 = arith.minimumf %132, %131 : vector<8x1xf32>
    %134 = vector.broadcast %133 : vector<8x1xf32> to vector<8x768xf32>
    %135 = arith.mulf %123, %134 : vector<8x768xf32>
    %136 = arith.addf %0, %135 : vector<8x768xf32>
    %c3_i32 = arith.constant 3 : i32
    %137 = arith.truncf %136 : vector<8x768xf32> to vector<8x768xbf16>
    %cst_43 = arith.constant dense<0.000000e+00> : vector<8x128xf32>
    %138 = tpu.matmul %137, %2, %cst_43 {dimension_numbers = #tpu.dot_dimension_numbers<[1], [1], [0], [0], [0, 0, 1, 0], [], []>} : vector<8x768xbf16>, vector<128x768xbf16>, vector<8x128xf32> -> vector<8x128xf32>
    %139 = vector.broadcast %3 : vector<1x128xf32> to vector<8x128xf32>
    %140 = arith.addf %138, %139 : vector<8x128xf32>
    %cst_44 = arith.constant dense<0xFF800000> : vector<8xf32>
    %141 = vector.multi_reduction <maximumf>, %140, %cst_44 [1] : vector<8x128xf32> to vector<8xf32>
    %142 = vector.shape_cast %141 : vector<8xf32> to vector<8x1xf32>
    %143 = vector.broadcast %142 : vector<8x1xf32> to vector<8x128xf32>
    %144 = arith.subf %140, %143 : vector<8x128xf32>
    %145 = math.exp %144 : vector<8x128xf32>
    %cst_45 = arith.constant dense<0.000000e+00> : vector<8xf32>
    %146 = vector.multi_reduction <add>, %145, %cst_45 [1] : vector<8x128xf32> to vector<8xf32>
    %147 = vector.shape_cast %146 : vector<8xf32> to vector<8x1xf32>
    %148 = tpu.reciprocal %147 {approx = true} : vector<8x1xf32> -> vector<8x1xf32>
    %149 = vector.broadcast %148 : vector<8x1xf32> to vector<8x128xf32>
    %150 = arith.mulf %145, %149 : vector<8x128xf32>
    %151 = arith.subf %150, %1 : vector<8x128xf32>
    %cst_46 = arith.constant 5.000000e-01 : f32
    %152 = vector.broadcast %cst_46 : f32 to vector<8x128xf32>
    %153 = arith.mulf %151, %152 : vector<8x128xf32>
    %154 = arith.truncf %153 : vector<8x128xf32> to vector<8x128xbf16>
    %cst_47 = arith.constant dense<0.000000e+00> : vector<8x768xf32>
    %155 = tpu.matmul %154, %2, %cst_47 {dimension_numbers = #tpu.dot_dimension_numbers<[1], [0], [0], [1], [0, 0, 1, 1], [], []>} : vector<8x128xbf16>, vector<128x768xbf16>, vector<8x768xf32> -> vector<8x768xf32>
    %156 = arith.mulf %155, %155 : vector<8x768xf32>
    %cst_48 = arith.constant dense<0.000000e+00> : vector<8xf32>
    %157 = vector.multi_reduction <add>, %156, %cst_48 [1] : vector<8x768xf32> to vector<8xf32>
    %158 = vector.shape_cast %157 : vector<8xf32> to vector<8x1xf32>
    %cst_49 = arith.constant 1.000000e-24 : f32
    %159 = vector.broadcast %cst_49 : f32 to vector<8x1xf32>
    %160 = arith.addf %158, %159 : vector<8x1xf32>
    %161 = math.rsqrt %160 : vector<8x1xf32>
    %cst_50 = arith.constant 0.00999999977 : f32
    %162 = vector.broadcast %cst_50 : f32 to vector<8x1xf32>
    %163 = arith.mulf %162, %161 : vector<8x1xf32>
    %164 = vector.broadcast %163 : vector<8x1xf32> to vector<8x768xf32>
    %165 = arith.mulf %164, %155 : vector<8x768xf32>
    %166 = arith.subf %136, %165 : vector<8x768xf32>
    %167 = arith.subf %166, %0 : vector<8x768xf32>
    %168 = arith.mulf %167, %167 : vector<8x768xf32>
    %cst_51 = arith.constant dense<0.000000e+00> : vector<8xf32>
    %169 = vector.multi_reduction <add>, %168, %cst_51 [1] : vector<8x768xf32> to vector<8xf32>
    %170 = vector.shape_cast %169 : vector<8xf32> to vector<8x1xf32>
    %cst_52 = arith.constant 1.000000e-24 : f32
    %171 = vector.broadcast %cst_52 : f32 to vector<8x1xf32>
    %172 = arith.addf %170, %171 : vector<8x1xf32>
    %173 = math.rsqrt %172 : vector<8x1xf32>
    %cst_53 = arith.constant 5.000000e-01 : f32
    %174 = vector.broadcast %cst_53 : f32 to vector<8x1xf32>
    %175 = arith.mulf %174, %173 : vector<8x1xf32>
    %cst_54 = arith.constant 1.000000e+00 : f32
    %176 = vector.broadcast %cst_54 : f32 to vector<8x1xf32>
    %177 = arith.minimumf %176, %175 : vector<8x1xf32>
    %178 = vector.broadcast %177 : vector<8x1xf32> to vector<8x768xf32>
    %179 = arith.mulf %167, %178 : vector<8x768xf32>
    %180 = arith.addf %0, %179 : vector<8x768xf32>
    %c4_i32 = arith.constant 4 : i32
    %181 = arith.truncf %180 : vector<8x768xf32> to vector<8x768xbf16>
    %cst_55 = arith.constant dense<0.000000e+00> : vector<8x128xf32>
    %182 = tpu.matmul %181, %2, %cst_55 {dimension_numbers = #tpu.dot_dimension_numbers<[1], [1], [0], [0], [0, 0, 1, 0], [], []>} : vector<8x768xbf16>, vector<128x768xbf16>, vector<8x128xf32> -> vector<8x128xf32>
    %183 = vector.broadcast %3 : vector<1x128xf32> to vector<8x128xf32>
    %184 = arith.addf %182, %183 : vector<8x128xf32>
    %cst_56 = arith.constant dense<0xFF800000> : vector<8xf32>
    %185 = vector.multi_reduction <maximumf>, %184, %cst_56 [1] : vector<8x128xf32> to vector<8xf32>
    %186 = vector.shape_cast %185 : vector<8xf32> to vector<8x1xf32>
    %187 = vector.broadcast %186 : vector<8x1xf32> to vector<8x128xf32>
    %188 = arith.subf %184, %187 : vector<8x128xf32>
    %189 = math.exp %188 : vector<8x128xf32>
    %cst_57 = arith.constant dense<0.000000e+00> : vector<8xf32>
    %190 = vector.multi_reduction <add>, %189, %cst_57 [1] : vector<8x128xf32> to vector<8xf32>
    %191 = vector.shape_cast %190 : vector<8xf32> to vector<8x1xf32>
    %192 = tpu.reciprocal %191 {approx = true} : vector<8x1xf32> -> vector<8x1xf32>
    %193 = vector.broadcast %192 : vector<8x1xf32> to vector<8x128xf32>
    %194 = arith.mulf %189, %193 : vector<8x128xf32>
    %195 = arith.subf %194, %1 : vector<8x128xf32>
    %cst_58 = arith.constant 5.000000e-01 : f32
    %196 = vector.broadcast %cst_58 : f32 to vector<8x128xf32>
    %197 = arith.mulf %195, %196 : vector<8x128xf32>
    %198 = arith.truncf %197 : vector<8x128xf32> to vector<8x128xbf16>
    %cst_59 = arith.constant dense<0.000000e+00> : vector<8x768xf32>
    %199 = tpu.matmul %198, %2, %cst_59 {dimension_numbers = #tpu.dot_dimension_numbers<[1], [0], [0], [1], [0, 0, 1, 1], [], []>} : vector<8x128xbf16>, vector<128x768xbf16>, vector<8x768xf32> -> vector<8x768xf32>
    %200 = arith.mulf %199, %199 : vector<8x768xf32>
    %cst_60 = arith.constant dense<0.000000e+00> : vector<8xf32>
    %201 = vector.multi_reduction <add>, %200, %cst_60 [1] : vector<8x768xf32> to vector<8xf32>
    %202 = vector.shape_cast %201 : vector<8xf32> to vector<8x1xf32>
    %cst_61 = arith.constant 1.000000e-24 : f32
    %203 = vector.broadcast %cst_61 : f32 to vector<8x1xf32>
    %204 = arith.addf %202, %203 : vector<8x1xf32>
    %205 = math.rsqrt %204 : vector<8x1xf32>
    %cst_62 = arith.constant 0.00999999977 : f32
    %206 = vector.broadcast %cst_62 : f32 to vector<8x1xf32>
    %207 = arith.mulf %206, %205 : vector<8x1xf32>
    %208 = vector.broadcast %207 : vector<8x1xf32> to vector<8x768xf32>
    %209 = arith.mulf %208, %199 : vector<8x768xf32>
    %210 = arith.subf %180, %209 : vector<8x768xf32>
    %211 = arith.subf %210, %0 : vector<8x768xf32>
    %212 = arith.mulf %211, %211 : vector<8x768xf32>
    %cst_63 = arith.constant dense<0.000000e+00> : vector<8xf32>
    %213 = vector.multi_reduction <add>, %212, %cst_63 [1] : vector<8x768xf32> to vector<8xf32>
    %214 = vector.shape_cast %213 : vector<8xf32> to vector<8x1xf32>
    %cst_64 = arith.constant 1.000000e-24 : f32
    %215 = vector.broadcast %cst_64 : f32 to vector<8x1xf32>
    %216 = arith.addf %214, %215 : vector<8x1xf32>
    %217 = math.rsqrt %216 : vector<8x1xf32>
    %cst_65 = arith.constant 5.000000e-01 : f32
    %218 = vector.broadcast %cst_65 : f32 to vector<8x1xf32>
    %219 = arith.mulf %218, %217 : vector<8x1xf32>
    %cst_66 = arith.constant 1.000000e+00 : f32
    %220 = vector.broadcast %cst_66 : f32 to vector<8x1xf32>
    %221 = arith.minimumf %220, %219 : vector<8x1xf32>
    %222 = vector.broadcast %221 : vector<8x1xf32> to vector<8x768xf32>
    %223 = arith.mulf %211, %222 : vector<8x768xf32>
    %224 = arith.addf %0, %223 : vector<8x768xf32>
    %c5_i32 = arith.constant 5 : i32
    %225 = arith.truncf %224 : vector<8x768xf32> to vector<8x768xbf16>
    %cst_67 = arith.constant dense<0.000000e+00> : vector<8x128xf32>
    %226 = tpu.matmul %225, %2, %cst_67 {dimension_numbers = #tpu.dot_dimension_numbers<[1], [1], [0], [0], [0, 0, 1, 0], [], []>} : vector<8x768xbf16>, vector<128x768xbf16>, vector<8x128xf32> -> vector<8x128xf32>
    %227 = vector.broadcast %3 : vector<1x128xf32> to vector<8x128xf32>
    %228 = arith.addf %226, %227 : vector<8x128xf32>
    %cst_68 = arith.constant dense<0xFF800000> : vector<8xf32>
    %229 = vector.multi_reduction <maximumf>, %228, %cst_68 [1] : vector<8x128xf32> to vector<8xf32>
    %230 = vector.shape_cast %229 : vector<8xf32> to vector<8x1xf32>
    %231 = vector.broadcast %230 : vector<8x1xf32> to vector<8x128xf32>
    %232 = arith.subf %228, %231 : vector<8x128xf32>
    %233 = math.exp %232 : vector<8x128xf32>
    %cst_69 = arith.constant dense<0.000000e+00> : vector<8xf32>
    %234 = vector.multi_reduction <add>, %233, %cst_69 [1] : vector<8x128xf32> to vector<8xf32>
    %235 = vector.shape_cast %234 : vector<8xf32> to vector<8x1xf32>
    %236 = tpu.reciprocal %235 {approx = true} : vector<8x1xf32> -> vector<8x1xf32>
    %237 = vector.broadcast %236 : vector<8x1xf32> to vector<8x128xf32>
    %238 = arith.mulf %233, %237 : vector<8x128xf32>
    %239 = arith.subf %238, %1 : vector<8x128xf32>
    %cst_70 = arith.constant 5.000000e-01 : f32
    %240 = vector.broadcast %cst_70 : f32 to vector<8x128xf32>
    %241 = arith.mulf %239, %240 : vector<8x128xf32>
    %242 = arith.truncf %241 : vector<8x128xf32> to vector<8x128xbf16>
    %cst_71 = arith.constant dense<0.000000e+00> : vector<8x768xf32>
    %243 = tpu.matmul %242, %2, %cst_71 {dimension_numbers = #tpu.dot_dimension_numbers<[1], [0], [0], [1], [0, 0, 1, 1], [], []>} : vector<8x128xbf16>, vector<128x768xbf16>, vector<8x768xf32> -> vector<8x768xf32>
    %244 = arith.mulf %243, %243 : vector<8x768xf32>
    %cst_72 = arith.constant dense<0.000000e+00> : vector<8xf32>
    %245 = vector.multi_reduction <add>, %244, %cst_72 [1] : vector<8x768xf32> to vector<8xf32>
    %246 = vector.shape_cast %245 : vector<8xf32> to vector<8x1xf32>
    %cst_73 = arith.constant 1.000000e-24 : f32
    %247 = vector.broadcast %cst_73 : f32 to vector<8x1xf32>
    %248 = arith.addf %246, %247 : vector<8x1xf32>
    %249 = math.rsqrt %248 : vector<8x1xf32>
    %cst_74 = arith.constant 0.00999999977 : f32
    %250 = vector.broadcast %cst_74 : f32 to vector<8x1xf32>
    %251 = arith.mulf %250, %249 : vector<8x1xf32>
    %252 = vector.broadcast %251 : vector<8x1xf32> to vector<8x768xf32>
    %253 = arith.mulf %252, %243 : vector<8x768xf32>
    %254 = arith.subf %224, %253 : vector<8x768xf32>
    %255 = arith.subf %254, %0 : vector<8x768xf32>
    %256 = arith.mulf %255, %255 : vector<8x768xf32>
    %cst_75 = arith.constant dense<0.000000e+00> : vector<8xf32>
    %257 = vector.multi_reduction <add>, %256, %cst_75 [1] : vector<8x768xf32> to vector<8xf32>
    %258 = vector.shape_cast %257 : vector<8xf32> to vector<8x1xf32>
    %cst_76 = arith.constant 1.000000e-24 : f32
    %259 = vector.broadcast %cst_76 : f32 to vector<8x1xf32>
    %260 = arith.addf %258, %259 : vector<8x1xf32>
    %261 = math.rsqrt %260 : vector<8x1xf32>
    %cst_77 = arith.constant 5.000000e-01 : f32
    %262 = vector.broadcast %cst_77 : f32 to vector<8x1xf32>
    %263 = arith.mulf %262, %261 : vector<8x1xf32>
    %cst_78 = arith.constant 1.000000e+00 : f32
    %264 = vector.broadcast %cst_78 : f32 to vector<8x1xf32>
    %265 = arith.minimumf %264, %263 : vector<8x1xf32>
    %266 = vector.broadcast %265 : vector<8x1xf32> to vector<8x768xf32>
    %267 = arith.mulf %255, %266 : vector<8x768xf32>
    %268 = arith.addf %0, %267 : vector<8x768xf32>
    %c6_i32 = arith.constant 6 : i32
    %269 = arith.truncf %268 : vector<8x768xf32> to vector<8x768xbf16>
    %cst_79 = arith.constant dense<0.000000e+00> : vector<8x128xf32>
    %270 = tpu.matmul %269, %2, %cst_79 {dimension_numbers = #tpu.dot_dimension_numbers<[1], [1], [0], [0], [0, 0, 1, 0], [], []>} : vector<8x768xbf16>, vector<128x768xbf16>, vector<8x128xf32> -> vector<8x128xf32>
    %271 = vector.broadcast %3 : vector<1x128xf32> to vector<8x128xf32>
    %272 = arith.addf %270, %271 : vector<8x128xf32>
    %cst_80 = arith.constant dense<0xFF800000> : vector<8xf32>
    %273 = vector.multi_reduction <maximumf>, %272, %cst_80 [1] : vector<8x128xf32> to vector<8xf32>
    %274 = vector.shape_cast %273 : vector<8xf32> to vector<8x1xf32>
    %275 = vector.broadcast %274 : vector<8x1xf32> to vector<8x128xf32>
    %276 = arith.subf %272, %275 : vector<8x128xf32>
    %277 = math.exp %276 : vector<8x128xf32>
    %cst_81 = arith.constant dense<0.000000e+00> : vector<8xf32>
    %278 = vector.multi_reduction <add>, %277, %cst_81 [1] : vector<8x128xf32> to vector<8xf32>
    %279 = vector.shape_cast %278 : vector<8xf32> to vector<8x1xf32>
    %280 = tpu.reciprocal %279 {approx = true} : vector<8x1xf32> -> vector<8x1xf32>
    %281 = vector.broadcast %280 : vector<8x1xf32> to vector<8x128xf32>
    %282 = arith.mulf %277, %281 : vector<8x128xf32>
    %283 = arith.subf %282, %1 : vector<8x128xf32>
    %cst_82 = arith.constant 5.000000e-01 : f32
    %284 = vector.broadcast %cst_82 : f32 to vector<8x128xf32>
    %285 = arith.mulf %283, %284 : vector<8x128xf32>
    %286 = arith.truncf %285 : vector<8x128xf32> to vector<8x128xbf16>
    %cst_83 = arith.constant dense<0.000000e+00> : vector<8x768xf32>
    %287 = tpu.matmul %286, %2, %cst_83 {dimension_numbers = #tpu.dot_dimension_numbers<[1], [0], [0], [1], [0, 0, 1, 1], [], []>} : vector<8x128xbf16>, vector<128x768xbf16>, vector<8x768xf32> -> vector<8x768xf32>
    %288 = arith.mulf %287, %287 : vector<8x768xf32>
    %cst_84 = arith.constant dense<0.000000e+00> : vector<8xf32>
    %289 = vector.multi_reduction <add>, %288, %cst_84 [1] : vector<8x768xf32> to vector<8xf32>
    %290 = vector.shape_cast %289 : vector<8xf32> to vector<8x1xf32>
    %cst_85 = arith.constant 1.000000e-24 : f32
    %291 = vector.broadcast %cst_85 : f32 to vector<8x1xf32>
    %292 = arith.addf %290, %291 : vector<8x1xf32>
    %293 = math.rsqrt %292 : vector<8x1xf32>
    %cst_86 = arith.constant 0.00999999977 : f32
    %294 = vector.broadcast %cst_86 : f32 to vector<8x1xf32>
    %295 = arith.mulf %294, %293 : vector<8x1xf32>
    %296 = vector.broadcast %295 : vector<8x1xf32> to vector<8x768xf32>
    %297 = arith.mulf %296, %287 : vector<8x768xf32>
    %298 = arith.subf %268, %297 : vector<8x768xf32>
    %299 = arith.subf %298, %0 : vector<8x768xf32>
    %300 = arith.mulf %299, %299 : vector<8x768xf32>
    %cst_87 = arith.constant dense<0.000000e+00> : vector<8xf32>
    %301 = vector.multi_reduction <add>, %300, %cst_87 [1] : vector<8x768xf32> to vector<8xf32>
    %302 = vector.shape_cast %301 : vector<8xf32> to vector<8x1xf32>
    %cst_88 = arith.constant 1.000000e-24 : f32
    %303 = vector.broadcast %cst_88 : f32 to vector<8x1xf32>
    %304 = arith.addf %302, %303 : vector<8x1xf32>
    %305 = math.rsqrt %304 : vector<8x1xf32>
    %cst_89 = arith.constant 5.000000e-01 : f32
    %306 = vector.broadcast %cst_89 : f32 to vector<8x1xf32>
    %307 = arith.mulf %306, %305 : vector<8x1xf32>
    %cst_90 = arith.constant 1.000000e+00 : f32
    %308 = vector.broadcast %cst_90 : f32 to vector<8x1xf32>
    %309 = arith.minimumf %308, %307 : vector<8x1xf32>
    %310 = vector.broadcast %309 : vector<8x1xf32> to vector<8x768xf32>
    %311 = arith.mulf %299, %310 : vector<8x768xf32>
    %312 = arith.addf %0, %311 : vector<8x768xf32>
    %c7_i32 = arith.constant 7 : i32
    %313 = arith.truncf %312 : vector<8x768xf32> to vector<8x768xbf16>
    %cst_91 = arith.constant dense<0.000000e+00> : vector<8x128xf32>
    %314 = tpu.matmul %313, %2, %cst_91 {dimension_numbers = #tpu.dot_dimension_numbers<[1], [1], [0], [0], [0, 0, 1, 0], [], []>} : vector<8x768xbf16>, vector<128x768xbf16>, vector<8x128xf32> -> vector<8x128xf32>
    %315 = vector.broadcast %3 : vector<1x128xf32> to vector<8x128xf32>
    %316 = arith.addf %314, %315 : vector<8x128xf32>
    %cst_92 = arith.constant dense<0xFF800000> : vector<8xf32>
    %317 = vector.multi_reduction <maximumf>, %316, %cst_92 [1] : vector<8x128xf32> to vector<8xf32>
    %318 = vector.shape_cast %317 : vector<8xf32> to vector<8x1xf32>
    %319 = vector.broadcast %318 : vector<8x1xf32> to vector<8x128xf32>
    %320 = arith.subf %316, %319 : vector<8x128xf32>
    %321 = math.exp %320 : vector<8x128xf32>
    %cst_93 = arith.constant dense<0.000000e+00> : vector<8xf32>
    %322 = vector.multi_reduction <add>, %321, %cst_93 [1] : vector<8x128xf32> to vector<8xf32>
    %323 = vector.shape_cast %322 : vector<8xf32> to vector<8x1xf32>
    %324 = tpu.reciprocal %323 {approx = true} : vector<8x1xf32> -> vector<8x1xf32>
    %325 = vector.broadcast %324 : vector<8x1xf32> to vector<8x128xf32>
    %326 = arith.mulf %321, %325 : vector<8x128xf32>
    %327 = arith.subf %326, %1 : vector<8x128xf32>
    %cst_94 = arith.constant 5.000000e-01 : f32
    %328 = vector.broadcast %cst_94 : f32 to vector<8x128xf32>
    %329 = arith.mulf %327, %328 : vector<8x128xf32>
    %330 = arith.truncf %329 : vector<8x128xf32> to vector<8x128xbf16>
    %cst_95 = arith.constant dense<0.000000e+00> : vector<8x768xf32>
    %331 = tpu.matmul %330, %2, %cst_95 {dimension_numbers = #tpu.dot_dimension_numbers<[1], [0], [0], [1], [0, 0, 1, 1], [], []>} : vector<8x128xbf16>, vector<128x768xbf16>, vector<8x768xf32> -> vector<8x768xf32>
    %332 = arith.mulf %331, %331 : vector<8x768xf32>
    %cst_96 = arith.constant dense<0.000000e+00> : vector<8xf32>
    %333 = vector.multi_reduction <add>, %332, %cst_96 [1] : vector<8x768xf32> to vector<8xf32>
    %334 = vector.shape_cast %333 : vector<8xf32> to vector<8x1xf32>
    %cst_97 = arith.constant 1.000000e-24 : f32
    %335 = vector.broadcast %cst_97 : f32 to vector<8x1xf32>
    %336 = arith.addf %334, %335 : vector<8x1xf32>
    %337 = math.rsqrt %336 : vector<8x1xf32>
    %cst_98 = arith.constant 0.00999999977 : f32
    %338 = vector.broadcast %cst_98 : f32 to vector<8x1xf32>
    %339 = arith.mulf %338, %337 : vector<8x1xf32>
    %340 = vector.broadcast %339 : vector<8x1xf32> to vector<8x768xf32>
    %341 = arith.mulf %340, %331 : vector<8x768xf32>
    %342 = arith.subf %312, %341 : vector<8x768xf32>
    %343 = arith.subf %342, %0 : vector<8x768xf32>
    %344 = arith.mulf %343, %343 : vector<8x768xf32>
    %cst_99 = arith.constant dense<0.000000e+00> : vector<8xf32>
    %345 = vector.multi_reduction <add>, %344, %cst_99 [1] : vector<8x768xf32> to vector<8xf32>
    %346 = vector.shape_cast %345 : vector<8xf32> to vector<8x1xf32>
    %cst_100 = arith.constant 1.000000e-24 : f32
    %347 = vector.broadcast %cst_100 : f32 to vector<8x1xf32>
    %348 = arith.addf %346, %347 : vector<8x1xf32>
    %349 = math.rsqrt %348 : vector<8x1xf32>
    %cst_101 = arith.constant 5.000000e-01 : f32
    %350 = vector.broadcast %cst_101 : f32 to vector<8x1xf32>
    %351 = arith.mulf %350, %349 : vector<8x1xf32>
    %cst_102 = arith.constant 1.000000e+00 : f32
    %352 = vector.broadcast %cst_102 : f32 to vector<8x1xf32>
    %353 = arith.minimumf %352, %351 : vector<8x1xf32>
    %354 = vector.broadcast %353 : vector<8x1xf32> to vector<8x768xf32>
    %355 = arith.mulf %343, %354 : vector<8x768xf32>
    %356 = arith.addf %0, %355 : vector<8x768xf32>
    %c0_103 = arith.constant 0 : index
    %c0_104 = arith.constant 0 : index
    %357 = vector.load %arg5[%c0_103, %c0_104] : memref<8x768xf32, #tpu.memory_space<vmem>>, vector<8x768xf32>
    tpu.vector_store %arg5[%c0_103, %c0_104], %356 {strides = array<i32>} : memref<8x768xf32, #tpu.memory_space<vmem>>, vector<8x768xf32>,
    %c0_105 = arith.constant 0 : index
    %c0_106 = arith.constant 0 : index
    %358 = vector.load %arg6[%c0_105, %c0_106] : memref<8x128xf32, #tpu.memory_space<vmem>>, vector<8x128xf32>
    tpu.vector_store %arg6[%c0_105, %c0_106], %316 {strides = array<i32>} : memref<8x128xf32, #tpu.memory_space<vmem>>, vector<8x128xf32>,
    return
  }
  func.func @transform_0(%arg0: i32) -> (i32, i32) {
    %c0_i32 = arith.constant 0 : i32
    %c0_i32_0 = arith.constant 0 : i32
    return %arg0, %c0_i32 : i32, i32
  }
  func.func @transform_1(%arg0: i32) -> (i32, i32) {
    %c0_i32 = arith.constant 0 : i32
    %c0_i32_0 = arith.constant 0 : i32
    return %arg0, %c0_i32 : i32, i32
  }
  func.func @transform_2(%arg0: i32) -> (i32, i32) {
    %c0_i32 = arith.constant 0 : i32
    %c0_i32_0 = arith.constant 0 : i32
    %c0_i32_1 = arith.constant 0 : i32
    return %c0_i32, %c0_i32_0 : i32, i32
  }
  func.func @transform_3(%arg0: i32) -> (i32, i32) {
    %c0_i32 = arith.constant 0 : i32
    %c0_i32_0 = arith.constant 0 : i32
    %c0_i32_1 = arith.constant 0 : i32
    return %c0_i32, %c0_i32_0 : i32, i32
  }
  func.func @transform_4(%arg0: i32) -> (i32, i32) {
    %c0_i32 = arith.constant 0 : i32
    %c0_i32_0 = arith.constant 0 : i32
    return %arg0, %c0_i32 : i32, i32
  }
  func.func @transform_5(%arg0: i32) -> (i32, i32) {
    %c0_i32 = arith.constant 0 : i32
    %c0_i32_0 = arith.constant 0 : i32
    return %arg0, %c0_i32 : i32, i32
  }
}

</mosaic_0001>

<llo_original>
// kernel: tpu_custom_call.1
$region0: #{tpu_custom_call.1}
  #allocation0 [shape = 'u32[]', space=smem, size = 0x4, offset = 0x4, fixed_abs, tag = 'smem constant byte address 0x4 - core index']
  #allocation1 [shape = 'u32[144,128]{1,0:T(1,128)}', space=vmem, size = 0x12000, scoped, tag = 'internal scratch']
  %s0 = inlined_call_operand.hbm [shape: f32[8,768], index: 0, kind: input, shape index: {}]
  %s1 = inlined_call_operand.hbm [shape: f32[8,128], index: 1, kind: input, shape index: {}]
  %s2 = inlined_call_operand.hbm [shape: bf16[128,768], index: 2, kind: input, shape index: {}]
  %s3 = inlined_call_operand.vmem [shape: f32[1,128], index: 3, kind: input, shape index: {}]
  %s4 = inlined_call_operand.hbm [shape: f32[8,768], index: 4, kind: output, shape index: {0}]
  %s5 = inlined_call_operand.hbm [shape: f32[8,128], index: 5, kind: output, shape index: {1}]
  %6 = xla_tuple %s4, %s5
  %s7 = sld [smem:[#allocation0]]
  $region46: #{tpu_custom_call.1} parent=0
    _
  %s9 = ssub.s32 1, %s7
  %s10 = scalar_select 0, %s9, %s7
  $region1: #{tpu_custom_call.1} parent=0
    #allocation2 [shape = 'u8[24576]{0}', space=vmem, size = 0x6000, scoped, tag = 'input window, operand 0, single buffered']
    #allocation3 [shape = 's32[1]{0}', space=sflag, size = 0x4, scoped, tag = 'scoped memory for tpu_custom_call.1']
    #allocation4 [shape = 's32[1]{0}', space=sflag, size = 0x4, scoped, tag = 'scoped memory for tpu_custom_call.1']
    #allocation5 [shape = 'u8[4096]{0}', space=vmem, size = 0x1000, scoped, tag = 'input window, operand 1, single buffered']
    #allocation6 [shape = 's32[1]{0}', space=sflag, size = 0x4, scoped, tag = 'scoped memory for tpu_custom_call.1']
    #allocation7 [shape = 'u8[196608]{0}', space=vmem, size = 0x30000, scoped, tag = 'input window, operand 2, single buffered']
    #allocation8 [shape = 'u8[24576]{0}', space=vmem, size = 0x6000, scoped, tag = 'output window, operand 0, single buffered']
    #allocation9 [shape = 'u8[4096]{0}', space=vmem, size = 0x1000, scoped, tag = 'output window, operand 1, single buffered']
    #allocation10 [shape = 's32[1]{0}', space=sflag, size = 0x4, scoped, tag = 'scoped memory for tpu_custom_call.1']
    %11 = vsyncpa [#allocation3], 0
    %12 = vsyncpa [#allocation6], 0
    %13 = vsyncpa [#allocation4], 0
    %14 = vsyncpa [#allocation10], 0
    // Predicated region
    $region2: #{tpu_custom_call.1} parent=1 // pred_check
      _
    $region3: #{tpu_custom_call.1} parent=1 // pred_check_branch
      %16 = sbr.rel (0) target = $region5
    $region4: #{tpu_custom_call.1} parent=1 // pred_region
      %s18 = ssub.s32 768, 768
      %19 = vsyncadd [#allocation3], %s18
      %s21 = sshll.u32 [#allocation2], 4
      %s22 = int_to_ptr.vmem [resolvable:$true] %s21
      %24 = dma.hbm_to_vmem [thread:$0]  %s0, 768, %s22, [#allocation3]
    $region5: #{tpu_custom_call.1} parent=1 // pred_fallthru
      _
    // Predicated region
    $region6: #{tpu_custom_call.1} parent=1 // pred_check
      _
    $region7: #{tpu_custom_call.1} parent=1 // pred_check_branch
      %26 = sbr.rel (0) target = $region9
    $region8: #{tpu_custom_call.1} parent=1 // pred_region
      %s28 = ssub.s32 128, 128
      %29 = vsyncadd [#allocation6], %s28
      %s31 = sshll.u32 [#allocation5], 4
      %s32 = int_to_ptr.vmem [resolvable:$true] %s31
      %34 = dma.hbm_to_vmem [thread:$0]  %s1, 128, %s32, [#allocation6]
    $region9: #{tpu_custom_call.1} parent=1 // pred_fallthru
      _
    // Predicated region
    $region10: #{tpu_custom_call.1} parent=1 // pred_check
      _
    $region11: #{tpu_custom_call.1} parent=1 // pred_check_branch
      %36 = sbr.rel (0) target = $region13
    $region12: #{tpu_custom_call.1} parent=1 // pred_region
      %s38 = ssub.s32 6144, 6144
      %39 = vsyncadd [#allocation6], %s38
      %s40 = sshll.u32 [#allocation7], 4
      %s41 = int_to_ptr.vmem [resolvable:$true] %s40
      %46 = dma.hbm_to_vmem [thread:$0]  %s2, 6144, %s41, [#allocation6], 384, 384, 24
    $region13: #{tpu_custom_call.1} parent=1 // pred_fallthru
      _
    // Predicated region
    $region14: #{tpu_custom_call.1} parent=1 // pred_check
      _
    $region15: #{tpu_custom_call.1} parent=1 // pred_check_branch
      %48 = sbr.rel (0) target = $region17
    $region16: #{tpu_custom_call.1} parent=1 // pred_region
      _
    $region17: #{tpu_custom_call.1} parent=1 // pred_fallthru
      _
    // Predicated region
    $region18: #{tpu_custom_call.1} parent=1 // pred_check
      _
    $region19: #{tpu_custom_call.1} parent=1 // pred_check_branch
      %50 = sbr.rel (0) target = $region21
    $region20: #{tpu_custom_call.1} parent=1 // pred_region
      %51 = dma.done [#allocation3], 768
    $region21: #{tpu_custom_call.1} parent=1 // pred_fallthru
      _
    // Predicated region
    $region22: #{tpu_custom_call.1} parent=1 // pred_check
      _
    $region23: #{tpu_custom_call.1} parent=1 // pred_check_branch
      %53 = sbr.rel (0) target = $region25
    $region24: #{tpu_custom_call.1} parent=1 // pred_region
      %54 = dma.done [#allocation6], 128
    $region25: #{tpu_custom_call.1} parent=1 // pred_fallthru
      _
    // Predicated region
    $region26: #{tpu_custom_call.1} parent=1 // pred_check
      _
    $region27: #{tpu_custom_call.1} parent=1 // pred_check_branch
      %56 = sbr.rel (0) target = $region29
    $region28: #{tpu_custom_call.1} parent=1 // pred_region
      %57 = dma.done [#allocation6], 6144
    $region29: #{tpu_custom_call.1} parent=1 // pred_fallthru
      _
    %v59 = vld [vmem:[#allocation2] sm:$0xff]
    %v60 = vld [vmem:[#allocation2 + $0x8] sm:$0xff]
    %v61 = vld [vmem:[#allocation2 + $0x10] sm:$0xff]
    %v62 = vld [vmem:[#allocation2 + $0x18] sm:$0xff]
    %v63 = vld [vmem:[#allocation2 + $0x20] sm:$0xff]
    %v64 = vld [vmem:[#allocation2 + $0x28] sm:$0xff]
    %v65 = vld [vmem:[#allocation5] sm:$0xff]
    %v66 = vld [vmem:[#allocation7] sm:$0xff]
    %v67 = vld [vmem:[#allocation7 + $0x8] sm:$0xff]
    %v68 = vld [vmem:[#allocation7 + $0x10] sm:$0xff]
    %v69 = vld [vmem:[#allocation7 + $0x18] sm:$0xff]
    %v70 = vld [vmem:[#allocation7 + $0x20] sm:$0xff]
    %v71 = vld [vmem:[#allocation7 + $0x28] sm:$0xff]
    %v72 = vld [vmem:[#allocation7 + $0x30] sm:$0xff]
    %v73 = vld [vmem:[#allocation7 + $0x38] sm:$0xff]
    %v74 = vld [vmem:[#allocation7 + $0x40] sm:$0xff]
    %v75 = vld [vmem:[#allocation7 + $0x48] sm:$0xff]
    %v76 = vld [vmem:[#allocation7 + $0x50] sm:$0xff]
    %v77 = vld [vmem:[#allocation7 + $0x58] sm:$0xff]
    %v78 = vld [vmem:[#allocation7 + $0x60] sm:$0xff]
    %v79 = vld [vmem:[#allocation7 + $0x68] sm:$0xff]
    %v80 = vld [vmem:[#allocation7 + $0x70] sm:$0xff]
    %v81 = vld [vmem:[#allocation7 + $0x78] sm:$0xff]
    %v82 = vld [vmem:[#allocation7 + $0x80] sm:$0xff]
    %v83 = vld [vmem:[#allocation7 + $0x88] sm:$0xff]
    %v84 = vld [vmem:[#allocation7 + $0x90] sm:$0xff]
    %v85 = vld [vmem:[#allocation7 + $0x98] sm:$0xff]
    %v86 = vld [vmem:[#allocation7 + $0xa0] sm:$0xff]
    %v87 = vld [vmem:[#allocation7 + $0xa8] sm:$0xff]
    %v88 = vld [vmem:[#allocation7 + $0xb0] sm:$0xff]
    %v89 = vld [vmem:[#allocation7 + $0xb8] sm:$0xff]
    %v90 = vld [vmem:[#allocation7 + $0xc0] sm:$0xff]
    %v91 = vld [vmem:[#allocation7 + $0xc8] sm:$0xff]
    %v92 = vld [vmem:[#allocation7 + $0xd0] sm:$0xff]
    %v93 = vld [vmem:[#allocation7 + $0xd8] sm:$0xff]
    %v94 = vld [vmem:[#allocation7 + $0xe0] sm:$0xff]
    %v95 = vld [vmem:[#allocation7 + $0xe8] sm:$0xff]
    %v96 = vld [vmem:[#allocation7 + $0xf0] sm:$0xff]
    %v97 = vld [vmem:[#allocation7 + $0xf8] sm:$0xff]
    %v98 = vld [vmem:[#allocation7 + $0x100] sm:$0xff]
    %v99 = vld [vmem:[#allocation7 + $0x108] sm:$0xff]
    %v100 = vld [vmem:[#allocation7 + $0x110] sm:$0xff]
    %v101 = vld [vmem:[#allocation7 + $0x118] sm:$0xff]
    %v102 = vld [vmem:[#allocation7 + $0x120] sm:$0xff]
    %v103 = vld [vmem:[#allocation7 + $0x128] sm:$0xff]
    %v104 = vld [vmem:[#allocation7 + $0x130] sm:$0xff]
    %v105 = vld [vmem:[#allocation7 + $0x138] sm:$0xff]
    %v106 = vld [vmem:[#allocation7 + $0x140] sm:$0xff]
    %v107 = vld [vmem:[#allocation7 + $0x148] sm:$0xff]
    %v108 = vld [vmem:[#allocation7 + $0x150] sm:$0xff]
    %v109 = vld [vmem:[#allocation7 + $0x158] sm:$0xff]
    %v110 = vld [vmem:[#allocation7 + $0x160] sm:$0xff]
    %v111 = vld [vmem:[#allocation7 + $0x168] sm:$0xff]
    %v112 = vld [vmem:[#allocation7 + $0x170] sm:$0xff]
    %v113 = vld [vmem:[#allocation7 + $0x178] sm:$0xff]
    %v114 = vld [vmem:[%s3] sm:$0x1]
    %v115 = vpack.c.bf16 %v59, %v59
    %v116 = vpack.c.bf16 %v60, %v60
    %v117 = vpack.c.bf16 %v61, %v61
    %v118 = vpack.c.bf16 %v62, %v62
    %v119 = vpack.c.bf16 %v63, %v63
    %v120 = vpack.c.bf16 %v64, %v64
    %v122 = vlaneseq
    %v123 = vshrl.u32 %v122, 7
    %v124 = vsub.s32 0, %v123
    %v125 = vrot.slane %v114, %v124
    %v175 = vunpack.c.l.b16 %v66
    %v176 = vunpack.c.h.b16 %v66
    %v177 = vunpack.c.l.b16 %v67
    %v178 = vunpack.c.h.b16 %v67
    %v179 = vunpack.c.l.b16 %v68
    %v180 = vunpack.c.h.b16 %v68
    %v181 = vunpack.c.l.b16 %v69
    %v182 = vunpack.c.h.b16 %v69
    %v183 = vunpack.c.l.b16 %v70
    %v184 = vunpack.c.h.b16 %v70
    %v185 = vunpack.c.l.b16 %v71
    %v186 = vunpack.c.h.b16 %v71
    %v187 = vunpack.c.l.b16 %v72
    %v188 = vunpack.c.h.b16 %v72
    %v189 = vunpack.c.l.b16 %v73
    %v190 = vunpack.c.h.b16 %v73
    %v191 = vunpack.c.l.b16 %v74
    %v192 = vunpack.c.h.b16 %v74
    %v193 = vunpack.c.l.b16 %v75
    %v194 = vunpack.c.h.b16 %v75
    %v195 = vunpack.c.l.b16 %v76
    %v196 = vunpack.c.h.b16 %v76
    %v197 = vunpack.c.l.b16 %v77
    %v198 = vunpack.c.h.b16 %v77
    %v199 = vunpack.c.l.b16 %v78
    %v200 = vunpack.c.h.b16 %v78
    %v201 = vunpack.c.l.b16 %v79
    %v202 = vunpack.c.h.b16 %v79
    %v203 = vunpack.c.l.b16 %v80
    %v204 = vunpack.c.h.b16 %v80
    %v205 = vunpack.c.l.b16 %v81
    %v206 = vunpack.c.h.b16 %v81
    %v207 = vunpack.c.l.b16 %v82
    %v208 = vunpack.c.h.b16 %v82
    %v209 = vunpack.c.l.b16 %v83
    %v210 = vunpack.c.h.b16 %v83
    %v211 = vunpack.c.l.b16 %v84
    %v212 = vunpack.c.h.b16 %v84
    %v213 = vunpack.c.l.b16 %v85
    %v214 = vunpack.c.h.b16 %v85
    %v215 = vunpack.c.l.b16 %v86
    %v216 = vunpack.c.h.b16 %v86
    %v217 = vunpack.c.l.b16 %v87
    %v218 = vunpack.c.h.b16 %v87
    %v219 = vunpack.c.l.b16 %v88
    %v220 = vunpack.c.h.b16 %v88
    %v221 = vunpack.c.l.b16 %v89
    %v222 = vunpack.c.h.b16 %v89
    %v223 = vunpack.c.l.b16 %v90
    %v224 = vunpack.c.h.b16 %v90
    %v225 = vunpack.c.l.b16 %v91
    %v226 = vunpack.c.h.b16 %v91
    %v227 = vunpack.c.l.b16 %v92
    %v228 = vunpack.c.h.b16 %v92
    %v229 = vunpack.c.l.b16 %v93
    %v230 = vunpack.c.h.b16 %v93
    %v231 = vunpack.c.l.b16 %v94
    %v232 = vunpack.c.h.b16 %v94
    %v233 = vunpack.c.l.b16 %v95
    %v234 = vunpack.c.h.b16 %v95
    %v235 = vunpack.c.l.b16 %v96
    %v236 = vunpack.c.h.b16 %v96
    %v237 = vunpack.c.l.b16 %v97
    %v238 = vunpack.c.h.b16 %v97
    %v239 = vunpack.c.l.b16 %v98
    %v240 = vunpack.c.h.b16 %v98
    %v241 = vunpack.c.l.b16 %v99
    %v242 = vunpack.c.h.b16 %v99
    %v243 = vunpack.c.l.b16 %v100
    %v244 = vunpack.c.h.b16 %v100
    %v245 = vunpack.c.l.b16 %v101
    %v246 = vunpack.c.h.b16 %v101
    %v247 = vunpack.c.l.b16 %v102
    %v248 = vunpack.c.h.b16 %v102
    %v249 = vunpack.c.l.b16 %v103
    %v250 = vunpack.c.h.b16 %v103
    %v251 = vunpack.c.l.b16 %v104
    %v252 = vunpack.c.h.b16 %v104
    %v253 = vunpack.c.l.b16 %v105
    %v254 = vunpack.c.h.b16 %v105
    %v255 = vunpack.c.l.b16 %v106
    %v256 = vunpack.c.h.b16 %v106
    %v257 = vunpack.c.l.b16 %v107
    %v258 = vunpack.c.h.b16 %v107
    %v259 = vunpack.c.l.b16 %v108
    %v260 = vunpack.c.h.b16 %v108
    %v261 = vunpack.c.l.b16 %v109
    %v262 = vunpack.c.h.b16 %v109
    %v263 = vunpack.c.l.b16 %v110
    %v264 = vunpack.c.h.b16 %v110
    %v265 = vunpack.c.l.b16 %v111
    %v266 = vunpack.c.h.b16 %v111
    %v267 = vunpack.c.l.b16 %v112
    %v268 = vunpack.c.h.b16 %v112
    %v269 = vunpack.c.l.b16 %v113
    %v270 = vunpack.c.h.b16 %v113
    %v271 = vpack.c.b16 %v181, %v175
    %v272 = vpack.c.b16 %v182, %v176
    %v273 = vpack.c.b16 %v183, %v177
    %v274 = vpack.c.b16 %v184, %v178
    %v275 = vpack.c.b16 %v185, %v179
    %v276 = vpack.c.b16 %v186, %v180
    %v277 = vpack.c.b16 %v193, %v187
    %v278 = vpack.c.b16 %v194, %v188
    %v279 = vpack.c.b16 %v195, %v189
    %v280 = vpack.c.b16 %v196, %v190
    %v281 = vpack.c.b16 %v197, %v191
    %v282 = vpack.c.b16 %v198, %v192
    %v283 = vpack.c.b16 %v205, %v199
    %v284 = vpack.c.b16 %v206, %v200
    %v285 = vpack.c.b16 %v207, %v201
    %v286 = vpack.c.b16 %v208, %v202
    %v287 = vpack.c.b16 %v209, %v203
    %v288 = vpack.c.b16 %v210, %v204
    %v289 = vpack.c.b16 %v217, %v211
    %v290 = vpack.c.b16 %v218, %v212
    %v291 = vpack.c.b16 %v219, %v213
    %v292 = vpack.c.b16 %v220, %v214
    %v293 = vpack.c.b16 %v221, %v215
    %v294 = vpack.c.b16 %v222, %v216
    %v295 = vpack.c.b16 %v229, %v223
    %v296 = vpack.c.b16 %v230, %v224
    %v297 = vpack.c.b16 %v231, %v225
    %v298 = vpack.c.b16 %v232, %v226
    %v299 = vpack.c.b16 %v233, %v227
    %v300 = vpack.c.b16 %v234, %v228
    %v301 = vpack.c.b16 %v241, %v235
    %v302 = vpack.c.b16 %v242, %v236
    %v303 = vpack.c.b16 %v243, %v237
    %v304 = vpack.c.b16 %v244, %v238
    %v305 = vpack.c.b16 %v245, %v239
    %v306 = vpack.c.b16 %v246, %v240
    %v307 = vpack.c.b16 %v253, %v247
    %v308 = vpack.c.b16 %v254, %v248
    %v309 = vpack.c.b16 %v255, %v249
    %v310 = vpack.c.b16 %v256, %v250
    %v311 = vpack.c.b16 %v257, %v251
    %v312 = vpack.c.b16 %v258, %v252
    %v313 = vpack.c.b16 %v265, %v259
    %v314 = vpack.c.b16 %v266, %v260
    %v315 = vpack.c.b16 %v267, %v261
    %v316 = vpack.c.b16 %v268, %v262
    %v317 = vpack.c.b16 %v269, %v263
    %v318 = vpack.c.b16 %v270, %v264
    %367 = vmatprep.subr.bf16.mxu0 %v272
    %368 = vmatpush1.bf16.xpose.msra.mxu0 %v271
    %369 = vmatprep.subr.bf16.mxu0 %v278
    %370 = vmatpush1.bf16.xpose.msra.mxu0 %v277
    %371 = vmatprep.subr.bf16.mxu0 %v284
    %372 = vmatpush1.bf16.xpose.msra.mxu0 %v283
    %373 = vmatprep.subr.bf16.mxu0 %v290
    %374 = vmatpush1.bf16.xpose.msra.mxu0 %v289
    %375 = vmatprep.subr.bf16.mxu0 %v296
    %376 = vmatpush1.bf16.xpose.msra.mxu0 %v295
    %377 = vmatprep.subr.bf16.mxu0 %v302
    %378 = vmatpush1.bf16.xpose.msra.mxu0 %v301
    %379 = vmatprep.subr.bf16.mxu0 %v308
    %380 = vmatpush1.bf16.xpose.msra.mxu0 %v307
    %381 = vmatprep.subr.bf16.mxu0 %v314
    %382 = vmatpush1.bf16.xpose.msra.mxu0 %v313
    %383 = vmatprep.subr.bf16.mxu0 0
    %384 = vmatpush1.bf16.xpose.msra.mxu0 0
    %385 = vmatprep.subr.bf16.mxu0 0
    %386 = vmatpush1.bf16.xpose.msra.mxu0 0
    %387 = vmatprep.subr.bf16.mxu0 0
    %388 = vmatpush1.bf16.xpose.msra.mxu0 0
    %389 = vmatprep.subr.bf16.mxu0 0
    %390 = vmatpush1.bf16.xpose.msra.mxu0 0
    %391 = vmatprep.subr.bf16.mxu0 0
    %392 = vmatpush1.bf16.xpose.msra.mxu0 0
    %393 = vmatprep.subr.bf16.mxu0 0
    %394 = vmatpush1.bf16.xpose.msra.mxu0 0
    %395 = vmatprep.subr.bf16.mxu0 0
    %396 = vmatpush1.bf16.xpose.msra.mxu0 0
    %397 = vmatprep.subr.bf16.mxu0 0
    %398 = vmatpush1.bf16.xpose.msra.mxu0 0
    %399 = vmatprep.mubr.bf16.mxu0 %v116
    %400 = vmatmul.mubr.bf16.gmra.mrb[0].mxu0 %v115
    %v401 = vpop.f32.mrb[0].mxu0
    %v402 = vadd.f32 %v125, %v401
    %v403 = vpop.f32.mrb[0].mxu0
    %v404 = vpop.f32.mrb[0].mxu0
    %v405 = vpop.f32.mrb[0].mxu0
    %406 = vdwg.mxu0
    %407 = vmatprep.subr.bf16.mxu0 %v274
    %408 = vmatpush1.bf16.xpose.msra.mxu0 %v273
    %409 = vmatprep.subr.bf16.mxu0 %v280
    %410 = vmatpush1.bf16.xpose.msra.mxu0 %v279
    %411 = vmatprep.subr.bf16.mxu0 %v286
    %412 = vmatpush1.bf16.xpose.msra.mxu0 %v285
    %413 = vmatprep.subr.bf16.mxu0 %v292
    %414 = vmatpush1.bf16.xpose.msra.mxu0 %v291
    %415 = vmatprep.subr.bf16.mxu0 %v298
    %416 = vmatpush1.bf16.xpose.msra.mxu0 %v297
    %417 = vmatprep.subr.bf16.mxu0 %v304
    %418 = vmatpush1.bf16.xpose.msra.mxu0 %v303
    %419 = vmatprep.subr.bf16.mxu0 %v310
    %420 = vmatpush1.bf16.xpose.msra.mxu0 %v309
    %421 = vmatprep.subr.bf16.mxu0 %v316
    %422 = vmatpush1.bf16.xpose.msra.mxu0 %v315
    %423 = vmatprep.subr.bf16.mxu0 0
    %424 = vmatpush1.bf16.xpose.msra.mxu0 0
    %425 = vmatprep.subr.bf16.mxu0 0
    %426 = vmatpush1.bf16.xpose.msra.mxu0 0
    %427 = vmatprep.subr.bf16.mxu0 0
    %428 = vmatpush1.bf16.xpose.msra.mxu0 0
    %429 = vmatprep.subr.bf16.mxu0 0
    %430 = vmatpush1.bf16.xpose.msra.mxu0 0
    %431 = vmatprep.subr.bf16.mxu0 0
    %432 = vmatpush1.bf16.xpose.msra.mxu0 0
    %433 = vmatprep.subr.bf16.mxu0 0
    %434 = vmatpush1.bf16.xpose.msra.mxu0 0
    %435 = vmatprep.subr.bf16.mxu0 0
    %436 = vmatpush1.bf16.xpose.msra.mxu0 0
    %437 = vmatprep.subr.bf16.mxu0 0
    %438 = vmatpush1.bf16.xpose.msra.mxu0 0
    %439 = vmatprep.mubr.bf16.mxu0 %v118
    %440 = vmatmul.mubr.bf16.gmra.mrb[0].mxu0 %v117
    %v441 = vpop.f32.mrb[0].mxu0
    %v442 = vadd.f32 %v402, %v441
    %v443 = vpop.f32.mrb[0].mxu0
    %v444 = vpop.f32.mrb[0].mxu0
    %v445 = vpop.f32.mrb[0].mxu0
    %446 = vdwg.mxu0
    %447 = vmatprep.subr.bf16.mxu0 %v276
    %448 = vmatpush1.bf16.xpose.msra.mxu0 %v275
    %449 = vmatprep.subr.bf16.mxu0 %v282
    %450 = vmatpush1.bf16.xpose.msra.mxu0 %v281
    %451 = vmatprep.subr.bf16.mxu0 %v288
    %452 = vmatpush1.bf16.xpose.msra.mxu0 %v287
    %453 = vmatprep.subr.bf16.mxu0 %v294
    %454 = vmatpush1.bf16.xpose.msra.mxu0 %v293
    %455 = vmatprep.subr.bf16.mxu0 %v300
    %456 = vmatpush1.bf16.xpose.msra.mxu0 %v299
    %457 = vmatprep.subr.bf16.mxu0 %v306
    %458 = vmatpush1.bf16.xpose.msra.mxu0 %v305
    %459 = vmatprep.subr.bf16.mxu0 %v312
    %460 = vmatpush1.bf16.xpose.msra.mxu0 %v311
    %461 = vmatprep.subr.bf16.mxu0 %v318
    %462 = vmatpush1.bf16.xpose.msra.mxu0 %v317
    %463 = vmatprep.subr.bf16.mxu0 0
    %464 = vmatpush1.bf16.xpose.msra.mxu0 0
    %465 = vmatprep.subr.bf16.mxu0 0
    %466 = vmatpush1.bf16.xpose.msra.mxu0 0
    %467 = vmatprep.subr.bf16.mxu0 0
    %468 = vmatpush1.bf16.xpose.msra.mxu0 0
    %469 = vmatprep.subr.bf16.mxu0 0
    %470 = vmatpush1.bf16.xpose.msra.mxu0 0
    %471 = vmatprep.subr.bf16.mxu0 0
    %472 = vmatpush1.bf16.xpose.msra.mxu0 0
    %473 = vmatprep.subr.bf16.mxu0 0
    %474 = vmatpush1.bf16.xpose.msra.mxu0 0
    %475 = vmatprep.subr.bf16.mxu0 0
    %476 = vmatpush1.bf16.xpose.msra.mxu0 0
    %477 = vmatprep.subr.bf16.mxu0 0
    %478 = vmatpush1.bf16.xpose.msra.mxu0 0
    %479 = vmatprep.mubr.bf16.mxu0 %v120
    %480 = vmatmul.mubr.bf16.gmra.mrb[0].mxu0 %v119
    %v481 = vpop.f32.mrb[0].mxu0
    %v482 = vadd.f32 %v442, %v481
    %v483 = vpop.f32.mrb[0].mxu0
    %v484 = vpop.f32.mrb[0].mxu0
    %v485 = vpop.f32.mrb[0].mxu0
    %486 = vdwg.mxu0
    %487 = vmax.xlane.f32.xlu0 %v482
    %v488 = vpop.xlane.xlu0 %487
    %v489 = vsub.f32 %v482, %v488
    %v490 = vmul.f32 %v489, 1.442695
    %v491 = vpow.pop %v490
    %492 = vadd.xlane.f32.xlu0 %v491
    %v493 = vpop.xlane.xlu0 %492
    %v494 = vrcp.pop %v493
    %v495 = vmul.f32 %v491, %v494
    %v496 = vsub.f32 %v495, %v65
    %v497 = vmul.f32 %v496, 0.5
    %v498 = vpack.c.bf16 %v497, %v497
    %499 = vmatprep.subr.bf16.mxu0 %v272
    %500 = vmatpush1.bf16.msra.mxu0 %v271
    %501 = vmatprep.subr.bf16.mxu0 %v278
    %502 = vmatpush1.bf16.msra.mxu0 %v277
    %503 = vmatprep.subr.bf16.mxu0 %v284
    %504 = vmatpush1.bf16.msra.mxu0 %v283
    %505 = vmatprep.subr.bf16.mxu0 %v290
    %506 = vmatpush1.bf16.msra.mxu0 %v289
    %507 = vmatprep.subr.bf16.mxu0 %v296
    %508 = vmatpush1.bf16.msra.mxu0 %v295
    %509 = vmatprep.subr.bf16.mxu0 %v302
    %510 = vmatpush1.bf16.msra.mxu0 %v301
    %511 = vmatprep.subr.bf16.mxu0 %v308
    %512 = vmatpush1.bf16.msra.mxu0 %v307
    %513 = vmatprep.subr.bf16.mxu0 %v314
    %514 = vmatpush1.bf16.msra.mxu0 %v313
    %515 = vmatprep.subr.bf16.mxu0 0
    %516 = vmatpush1.bf16.msra.mxu0 0
    %517 = vmatprep.subr.bf16.mxu0 0
    %518 = vmatpush1.bf16.msra.mxu0 0
    %519 = vmatprep.subr.bf16.mxu0 0
    %520 = vmatpush1.bf16.msra.mxu0 0
    %521 = vmatprep.subr.bf16.mxu0 0
    %522 = vmatpush1.bf16.msra.mxu0 0
    %523 = vmatprep.subr.bf16.mxu0 0
    %524 = vmatpush1.bf16.msra.mxu0 0
    %525 = vmatprep.subr.bf16.mxu0 0
    %526 = vmatpush1.bf16.msra.mxu0 0
    %527 = vmatprep.subr.bf16.mxu0 0
    %528 = vmatpush1.bf16.msra.mxu0 0
    %529 = vmatprep.subr.bf16.mxu0 0
    %530 = vmatpush1.bf16.msra.mxu0 0
    %531 = vmatprep.mubr.bf16.mxu0 0
    %532 = vmatmul.mubr.bf16.gmra.mrb[0].mxu0 %v498
    %v533 = vpop.f32.mrb[0].mxu0
    %v534 = vadd.f32 0.0, %v533
    %v535 = vpop.f32.mrb[0].mxu0
    %v536 = vadd.f32 0.0, %v535
    %v537 = vpop.f32.mrb[0].mxu0
    %v538 = vpop.f32.mrb[0].mxu0
    %539 = vdwg.mxu0
    %540 = vmatprep.subr.bf16.mxu0 %v274
    %541 = vmatpush1.bf16.msra.mxu0 %v273
    %542 = vmatprep.subr.bf16.mxu0 %v280
    %543 = vmatpush1.bf16.msra.mxu0 %v279
    %544 = vmatprep.subr.bf16.mxu0 %v286
    %545 = vmatpush1.bf16.msra.mxu0 %v285
    %546 = vmatprep.subr.bf16.mxu0 %v292
    %547 = vmatpush1.bf16.msra.mxu0 %v291
    %548 = vmatprep.subr.bf16.mxu0 %v298
    %549 = vmatpush1.bf16.msra.mxu0 %v297
    %550 = vmatprep.subr.bf16.mxu0 %v304
    %551 = vmatpush1.bf16.msra.mxu0 %v303
    %552 = vmatprep.subr.bf16.mxu0 %v310
    %553 = vmatpush1.bf16.msra.mxu0 %v309
    %554 = vmatprep.subr.bf16.mxu0 %v316
    %555 = vmatpush1.bf16.msra.mxu0 %v315
    %556 = vmatprep.subr.bf16.mxu0 0
    %557 = vmatpush1.bf16.msra.mxu0 0
    %558 = vmatprep.subr.bf16.mxu0 0
    %559 = vmatpush1.bf16.msra.mxu0 0
    %560 = vmatprep.subr.bf16.mxu0 0
    %561 = vmatpush1.bf16.msra.mxu0 0
    %562 = vmatprep.subr.bf16.mxu0 0
    %563 = vmatpush1.bf16.msra.mxu0 0
    %564 = vmatprep.subr.bf16.mxu0 0
    %565 = vmatpush1.bf16.msra.mxu0 0
    %566 = vmatprep.subr.bf16.mxu0 0
    %567 = vmatpush1.bf16.msra.mxu0 0
    %568 = vmatprep.subr.bf16.mxu0 0
    %569 = vmatpush1.bf16.msra.mxu0 0
    %570 = vmatprep.subr.bf16.mxu0 0
    %571 = vmatpush1.bf16.msra.mxu0 0
    %572 = vmatprep.mubr.bf16.mxu0 0
    %573 = vmatmul.mubr.bf16.gmra.mrb[0].mxu0 %v498
    %v574 = vpop.f32.mrb[0].mxu0
    %v575 = vadd.f32 0.0, %v574
    %v576 = vpop.f32.mrb[0].mxu0
    %v577 = vadd.f32 0.0, %v576
    %v578 = vpop.f32.mrb[0].mxu0
    %v579 = vpop.f32.mrb[0].mxu0
    %580 = vdwg.mxu0
    %581 = vmatprep.subr.bf16.mxu0 %v276
    %582 = vmatpush1.bf16.msra.mxu0 %v275
    %583 = vmatprep.subr.bf16.mxu0 %v282
    %584 = vmatpush1.bf16.msra.mxu0 %v281
    %585 = vmatprep.subr.bf16.mxu0 %v288
    %586 = vmatpush1.bf16.msra.mxu0 %v287
    %587 = vmatprep.subr.bf16.mxu0 %v294
    %588 = vmatpush1.bf16.msra.mxu0 %v293
    %589 = vmatprep.subr.bf16.mxu0 %v300
    %590 = vmatpush1.bf16.msra.mxu0 %v299
    %591 = vmatprep.subr.bf16.mxu0 %v306
    %592 = vmatpush1.bf16.msra.mxu0 %v305
    %593 = vmatprep.subr.bf16.mxu0 %v312
    %594 = vmatpush1.bf16.msra.mxu0 %v311
    %595 = vmatprep.subr.bf16.mxu0 %v318
    %596 = vmatpush1.bf16.msra.mxu0 %v317
    %597 = vmatprep.subr.bf16.mxu0 0
    %598 = vmatpush1.bf16.msra.mxu0 0
    %599 = vmatprep.subr.bf16.mxu0 0
    %600 = vmatpush1.bf16.msra.mxu0 0
    %601 = vmatprep.subr.bf16.mxu0 0
    %602 = vmatpush1.bf16.msra.mxu0 0
    %603 = vmatprep.subr.bf16.mxu0 0
    %604 = vmatpush1.bf16.msra.mxu0 0
    %605 = vmatprep.subr.bf16.mxu0 0
    %606 = vmatpush1.bf16.msra.mxu0 0
    %607 = vmatprep.subr.bf16.mxu0 0
    %608 = vmatpush1.bf16.msra.mxu0 0
    %609 = vmatprep.subr.bf16.mxu0 0
    %610 = vmatpush1.bf16.msra.mxu0 0
    %611 = vmatprep.subr.bf16.mxu0 0
    %612 = vmatpush1.bf16.msra.mxu0 0
    %613 = vmatprep.mubr.bf16.mxu0 0
    %614 = vmatmul.mubr.bf16.gmra.mrb[0].mxu0 %v498
    %v615 = vpop.f32.mrb[0].mxu0
    %v616 = vadd.f32 0.0, %v615
    %v617 = vpop.f32.mrb[0].mxu0
    %v618 = vadd.f32 0.0, %v617
    %v619 = vpop.f32.mrb[0].mxu0
    %v620 = vpop.f32.mrb[0].mxu0
    %621 = vdwg.mxu0
    %v622 = vmul.f32 %v534, %v534
    %v623 = vmul.f32 %v536, %v536
    %v624 = vmul.f32 %v575, %v575
    %v625 = vmul.f32 %v577, %v577
    %v626 = vmul.f32 %v616, %v616
    %v627 = vmul.f32 %v618, %v618
    %v628 = vadd.f32 %v622, %v623
    %v629 = vadd.f32 %v628, %v624
    %v630 = vadd.f32 %v629, %v625
    %v631 = vadd.f32 %v630, %v626
    %v632 = vadd.f32 %v631, %v627
    %633 = vadd.xlane.f32.xlu0 %v632
    %v634 = vpop.xlane.xlu0 %633
    %v635 = vadd.f32 %v634, 1e-24
    %v636 = vrsqrt.pop %v635
    %v637 = vmul.f32 %v636, 0.01
    %v638 = vmul.f32 %v637, %v534
    %v639 = vmul.f32 %v637, %v536
    %v640 = vmul.f32 %v637, %v575
    %v641 = vmul.f32 %v637, %v577
    %v642 = vmul.f32 %v637, %v616
    %v643 = vmul.f32 %v637, %v618
    %v644 = vsub.f32 %v59, %v638
    %v645 = vsub.f32 %v60, %v639
    %v646 = vsub.f32 %v61, %v640
    %v647 = vsub.f32 %v62, %v641
    %v648 = vsub.f32 %v63, %v642
    %v649 = vsub.f32 %v64, %v643
    %v650 = vsub.f32 %v644, %v59
    %v651 = vsub.f32 %v645, %v60
    %v652 = vsub.f32 %v646, %v61
    %v653 = vsub.f32 %v647, %v62
    %v654 = vsub.f32 %v648, %v63
    %v655 = vsub.f32 %v649, %v64
    %v656 = vmul.f32 %v650, %v650
    %v657 = vmul.f32 %v651, %v651
    %v658 = vmul.f32 %v652, %v652
    %v659 = vmul.f32 %v653, %v653
    %v660 = vmul.f32 %v654, %v654
    %v661 = vmul.f32 %v655, %v655
    %v662 = vadd.f32 %v656, %v657
    %v663 = vadd.f32 %v662, %v658
    %v664 = vadd.f32 %v663, %v659
    %v665 = vadd.f32 %v664, %v660
    %v666 = vadd.f32 %v665, %v661
    %667 = vadd.xlane.f32.xlu0 %v666
    %v668 = vpop.xlane.xlu0 %667
    %v669 = vadd.f32 %v668, 1e-24
    %v670 = vrsqrt.pop %v669
    %v671 = vmul.f32 %v670, 0.5
    %v672 = vmin.f32 %v671, 1.0
    %v673 = vmul.f32 %v650, %v672
    %v674 = vmul.f32 %v651, %v672
    %v675 = vmul.f32 %v652, %v672
    %v676 = vmul.f32 %v653, %v672
    %v677 = vmul.f32 %v654, %v672
    %v678 = vmul.f32 %v655, %v672
    %v679 = vadd.f32 %v59, %v673
    %v680 = vadd.f32 %v60, %v674
    %v681 = vadd.f32 %v61, %v675
    %v682 = vadd.f32 %v62, %v676
    %v683 = vadd.f32 %v63, %v677
    %v684 = vadd.f32 %v64, %v678
    %v685 = vpack.c.bf16 %v679, %v679
    %v686 = vpack.c.bf16 %v680, %v680
    %v687 = vpack.c.bf16 %v681, %v681
    %v688 = vpack.c.bf16 %v682, %v682
    %v689 = vpack.c.bf16 %v683, %v683
    %v690 = vpack.c.bf16 %v684, %v684
    %691 = vmatprep.subr.bf16.mxu0 %v272
    %692 = vmatpush1.bf16.xpose.msra.mxu0 %v271
    %693 = vmatprep.subr.bf16.mxu0 %v278
    %694 = vmatpush1.bf16.xpose.msra.mxu0 %v277
    %695 = vmatprep.subr.bf16.mxu0 %v284
    %696 = vmatpush1.bf16.xpose.msra.mxu0 %v283
    %697 = vmatprep.subr.bf16.mxu0 %v290
    %698 = vmatpush1.bf16.xpose.msra.mxu0 %v289
    %699 = vmatprep.subr.bf16.mxu0 %v296
    %700 = vmatpush1.bf16.xpose.msra.mxu0 %v295
    %701 = vmatprep.subr.bf16.mxu0 %v302
    %702 = vmatpush1.bf16.xpose.msra.mxu0 %v301
    %703 = vmatprep.subr.bf16.mxu0 %v308
    %704 = vmatpush1.bf16.xpose.msra.mxu0 %v307
    %705 = vmatprep.subr.bf16.mxu0 %v314
    %706 = vmatpush1.bf16.xpose.msra.mxu0 %v313
    %707 = vmatprep.subr.bf16.mxu0 0
    %708 = vmatpush1.bf16.xpose.msra.mxu0 0
    %709 = vmatprep.subr.bf16.mxu0 0
    %710 = vmatpush1.bf16.xpose.msra.mxu0 0
    %711 = vmatprep.subr.bf16.mxu0 0
    %712 = vmatpush1.bf16.xpose.msra.mxu0 0
    %713 = vmatprep.subr.bf16.mxu0 0
    %714 = vmatpush1.bf16.xpose.msra.mxu0 0
    %715 = vmatprep.subr.bf16.mxu0 0
    %716 = vmatpush1.bf16.xpose.msra.mxu0 0
    %717 = vmatprep.subr.bf16.mxu0 0
    %718 = vmatpush1.bf16.xpose.msra.mxu0 0
    %719 = vmatprep.subr.bf16.mxu0 0
    %720 = vmatpush1.bf16.xpose.msra.mxu0 0
    %721 = vmatprep.subr.bf16.mxu0 0
    %722 = vmatpush1.bf16.xpose.msra.mxu0 0
    %723 = vmatprep.mubr.bf16.mxu0 %v686
    %724 = vmatmul.mubr.bf16.gmra.mrb[0].mxu0 %v685
    %v725 = vpop.f32.mrb[0].mxu0
    %v726 = vadd.f32 %v125, %v725
    %v727 = vpop.f32.mrb[0].mxu0
    %v728 = vpop.f32.mrb[0].mxu0
    %v729 = vpop.f32.mrb[0].mxu0
    %730 = vdwg.mxu0
    %731 = vmatprep.subr.bf16.mxu0 %v274
    %732 = vmatpush1.bf16.xpose.msra.mxu0 %v273
    %733 = vmatprep.subr.bf16.mxu0 %v280
    %734 = vmatpush1.bf16.xpose.msra.mxu0 %v279
    %735 = vmatprep.subr.bf16.mxu0 %v286
    %736 = vmatpush1.bf16.xpose.msra.mxu0 %v285
    %737 = vmatprep.subr.bf16.mxu0 %v292
    %738 = vmatpush1.bf16.xpose.msra.mxu0 %v291
    %739 = vmatprep.subr.bf16.mxu0 %v298
    %740 = vmatpush1.bf16.xpose.msra.mxu0 %v297
    %741 = vmatprep.subr.bf16.mxu0 %v304
    %742 = vmatpush1.bf16.xpose.msra.mxu0 %v303
    %743 = vmatprep.subr.bf16.mxu0 %v310
    %744 = vmatpush1.bf16.xpose.msra.mxu0 %v309
    %745 = vmatprep.subr.bf16.mxu0 %v316
    %746 = vmatpush1.bf16.xpose.msra.mxu0 %v315
    %747 = vmatprep.subr.bf16.mxu0 0
    %748 = vmatpush1.bf16.xpose.msra.mxu0 0
    %749 = vmatprep.subr.bf16.mxu0 0
    %750 = vmatpush1.bf16.xpose.msra.mxu0 0
    %751 = vmatprep.subr.bf16.mxu0 0
    %752 = vmatpush1.bf16.xpose.msra.mxu0 0
    %753 = vmatprep.subr.bf16.mxu0 0
    %754 = vmatpush1.bf16.xpose.msra.mxu0 0
    %755 = vmatprep.subr.bf16.mxu0 0
    %756 = vmatpush1.bf16.xpose.msra.mxu0 0
    %757 = vmatprep.subr.bf16.mxu0 0
    %758 = vmatpush1.bf16.xpose.msra.mxu0 0
    %759 = vmatprep.subr.bf16.mxu0 0
    %760 = vmatpush1.bf16.xpose.msra.mxu0 0
    %761 = vmatprep.subr.bf16.mxu0 0
    %762 = vmatpush1.bf16.xpose.msra.mxu0 0
    %763 = vmatprep.mubr.bf16.mxu0 %v688
    %764 = vmatmul.mubr.bf16.gmra.mrb[0].mxu0 %v687
    %v765 = vpop.f32.mrb[0].mxu0
    %v766 = vadd.f32 %v726, %v765
    %v767 = vpop.f32.mrb[0].mxu0
    %v768 = vpop.f32.mrb[0].mxu0
    %v769 = vpop.f32.mrb[0].mxu0
    %770 = vdwg.mxu0
    %771 = vmatprep.subr.bf16.mxu0 %v276
    %772 = vmatpush1.bf16.xpose.msra.mxu0 %v275
    %773 = vmatprep.subr.bf16.mxu0 %v282
    %774 = vmatpush1.bf16.xpose.msra.mxu0 %v281
    %775 = vmatprep.subr.bf16.mxu0 %v288
    %776 = vmatpush1.bf16.xpose.msra.mxu0 %v287
    %777 = vmatprep.subr.bf16.mxu0 %v294
    %778 = vmatpush1.bf16.xpose.msra.mxu0 %v293
    %779 = vmatprep.subr.bf16.mxu0 %v300
    %780 = vmatpush1.bf16.xpose.msra.mxu0 %v299
    %781 = vmatprep.subr.bf16.mxu0 %v306
    %782 = vmatpush1.bf16.xpose.msra.mxu0 %v305
    %783 = vmatprep.subr.bf16.mxu0 %v312
    %784 = vmatpush1.bf16.xpose.msra.mxu0 %v311
    %785 = vmatprep.subr.bf16.mxu0 %v318
    %786 = vmatpush1.bf16.xpose.msra.mxu0 %v317
    %787 = vmatprep.subr.bf16.mxu0 0
    %788 = vmatpush1.bf16.xpose.msra.mxu0 0
    %789 = vmatprep.subr.bf16.mxu0 0
    %790 = vmatpush1.bf16.xpose.msra.mxu0 0
    %791 = vmatprep.subr.bf16.mxu0 0
    %792 = vmatpush1.bf16.xpose.msra.mxu0 0
    %793 = vmatprep.subr.bf16.mxu0 0
    %794 = vmatpush1.bf16.xpose.msra.mxu0 0
    %795 = vmatprep.subr.bf16.mxu0 0
    %796 = vmatpush1.bf16.xpose.msra.mxu0 0
    %797 = vmatprep.subr.bf16.mxu0 0
    %798 = vmatpush1.bf16.xpose.msra.mxu0 0
    %799 = vmatprep.subr.bf16.mxu0 0
    %800 = vmatpush1.bf16.xpose.msra.mxu0 0
    %801 = vmatprep.subr.bf16.mxu0 0
    %802 = vmatpush1.bf16.xpose.msra.mxu0 0
    %803 = vmatprep.mubr.bf16.mxu0 %v690
    %804 = vmatmul.mubr.bf16.gmra.mrb[0].mxu0 %v689
    %v805 = vpop.f32.mrb[0].mxu0
    %v806 = vadd.f32 %v766, %v805
    %v807 = vpop.f32.mrb[0].mxu0
    %v808 = vpop.f32.mrb[0].mxu0
    %v809 = vpop.f32.mrb[0].mxu0
    %810 = vdwg.mxu0
    %811 = vmax.xlane.f32.xlu0 %v806
    %v812 = vpop.xlane.xlu0 %811
    %v813 = vsub.f32 %v806, %v812
    %v814 = vmul.f32 %v813, 1.442695
    %v815 = vpow.pop %v814
    %816 = vadd.xlane.f32.xlu0 %v815
    %v817 = vpop.xlane.xlu0 %816
    %v818 = vrcp.pop %v817
    %v819 = vmul.f32 %v815, %v818
    %v820 = vsub.f32 %v819, %v65
    %v821 = vmul.f32 %v820, 0.5
    %v822 = vpack.c.bf16 %v821, %v821
    %823 = vmatprep.subr.bf16.mxu0 %v272
    %824 = vmatpush1.bf16.msra.mxu0 %v271
    %825 = vmatprep.subr.bf16.mxu0 %v278
    %826 = vmatpush1.bf16.msra.mxu0 %v277
    %827 = vmatprep.subr.bf16.mxu0 %v284
    %828 = vmatpush1.bf16.msra.mxu0 %v283
    %829 = vmatprep.subr.bf16.mxu0 %v290
    %830 = vmatpush1.bf16.msra.mxu0 %v289
    %831 = vmatprep.subr.bf16.mxu0 %v296
    %832 = vmatpush1.bf16.msra.mxu0 %v295
    %833 = vmatprep.subr.bf16.mxu0 %v302
    %834 = vmatpush1.bf16.msra.mxu0 %v301
    %835 = vmatprep.subr.bf16.mxu0 %v308
    %836 = vmatpush1.bf16.msra.mxu0 %v307
    %837 = vmatprep.subr.bf16.mxu0 %v314
    %838 = vmatpush1.bf16.msra.mxu0 %v313
    %839 = vmatprep.subr.bf16.mxu0 0
    %840 = vmatpush1.bf16.msra.mxu0 0
    %841 = vmatprep.subr.bf16.mxu0 0
    %842 = vmatpush1.bf16.msra.mxu0 0
    %843 = vmatprep.subr.bf16.mxu0 0
    %844 = vmatpush1.bf16.msra.mxu0 0
    %845 = vmatprep.subr.bf16.mxu0 0
    %846 = vmatpush1.bf16.msra.mxu0 0
    %847 = vmatprep.subr.bf16.mxu0 0
    %848 = vmatpush1.bf16.msra.mxu0 0
    %849 = vmatprep.subr.bf16.mxu0 0
    %850 = vmatpush1.bf16.msra.mxu0 0
    %851 = vmatprep.subr.bf16.mxu0 0
    %852 = vmatpush1.bf16.msra.mxu0 0
    %853 = vmatprep.subr.bf16.mxu0 0
    %854 = vmatpush1.bf16.msra.mxu0 0
    %855 = vmatprep.mubr.bf16.mxu0 0
    %856 = vmatmul.mubr.bf16.gmra.mrb[0].mxu0 %v822
    %v857 = vpop.f32.mrb[0].mxu0
    %v858 = vadd.f32 0.0, %v857
    %v859 = vpop.f32.mrb[0].mxu0
    %v860 = vadd.f32 0.0, %v859
    %v861 = vpop.f32.mrb[0].mxu0
    %v862 = vpop.f32.mrb[0].mxu0
    %863 = vdwg.mxu0
    %864 = vmatprep.subr.bf16.mxu0 %v274
    %865 = vmatpush1.bf16.msra.mxu0 %v273
    %866 = vmatprep.subr.bf16.mxu0 %v280
    %867 = vmatpush1.bf16.msra.mxu0 %v279
    %868 = vmatprep.subr.bf16.mxu0 %v286
    %869 = vmatpush1.bf16.msra.mxu0 %v285
    %870 = vmatprep.subr.bf16.mxu0 %v292
    %871 = vmatpush1.bf16.msra.mxu0 %v291
    %872 = vmatprep.subr.bf16.mxu0 %v298
    %873 = vmatpush1.bf16.msra.mxu0 %v297
    %874 = vmatprep.subr.bf16.mxu0 %v304
    %875 = vmatpush1.bf16.msra.mxu0 %v303
    %876 = vmatprep.subr.bf16.mxu0 %v310
    %877 = vmatpush1.bf16.msra.mxu0 %v309
    %878 = vmatprep.subr.bf16.mxu0 %v316
    %879 = vmatpush1.bf16.msra.mxu0 %v315
    %880 = vmatprep.subr.bf16.mxu0 0
    %881 = vmatpush1.bf16.msra.mxu0 0
    %882 = vmatprep.subr.bf16.mxu0 0
    %883 = vmatpush1.bf16.msra.mxu0 0
    %884 = vmatprep.subr.bf16.mxu0 0
    %885 = vmatpush1.bf16.msra.mxu0 0
    %886 = vmatprep.subr.bf16.mxu0 0
    %887 = vmatpush1.bf16.msra.mxu0 0
    %888 = vmatprep.subr.bf16.mxu0 0
    %889 = vmatpush1.bf16.msra.mxu0 0
    %890 = vmatprep.subr.bf16.mxu0 0
    %891 = vmatpush1.bf16.msra.mxu0 0
    %892 = vmatprep.subr.bf16.mxu0 0
    %893 = vmatpush1.bf16.msra.mxu0 0
    %894 = vmatprep.subr.bf16.mxu0 0
    %895 = vmatpush1.bf16.msra.mxu0 0
    %896 = vmatprep.mubr.bf16.mxu0 0
    %897 = vmatmul.mubr.bf16.gmra.mrb[0].mxu0 %v822
    %v898 = vpop.f32.mrb[0].mxu0
    %v899 = vadd.f32 0.0, %v898
    %v900 = vpop.f32.mrb[0].mxu0
    %v901 = vadd.f32 0.0, %v900
    %v902 = vpop.f32.mrb[0].mxu0
    %v903 = vpop.f32.mrb[0].mxu0
    %904 = vdwg.mxu0
    %905 = vmatprep.subr.bf16.mxu0 %v276
    %906 = vmatpush1.bf16.msra.mxu0 %v275
    %907 = vmatprep.subr.bf16.mxu0 %v282
    %908 = vmatpush1.bf16.msra.mxu0 %v281
    %909 = vmatprep.subr.bf16.mxu0 %v288
    %910 = vmatpush1.bf16.msra.mxu0 %v287
    %911 = vmatprep.subr.bf16.mxu0 %v294
    %912 = vmatpush1.bf16.msra.mxu0 %v293
    %913 = vmatprep.subr.bf16.mxu0 %v300
    %914 = vmatpush1.bf16.msra.mxu0 %v299
    %915 = vmatprep.subr.bf16.mxu0 %v306
    %916 = vmatpush1.bf16.msra.mxu0 %v305
    %917 = vmatprep.subr.bf16.mxu0 %v312
    %918 = vmatpush1.bf16.msra.mxu0 %v311
    %919 = vmatprep.subr.bf16.mxu0 %v318
    %920 = vmatpush1.bf16.msra.mxu0 %v317
    %921 = vmatprep.subr.bf16.mxu0 0
    %922 = vmatpush1.bf16.msra.mxu0 0
    %923 = vmatprep.subr.bf16.mxu0 0
    %924 = vmatpush1.bf16.msra.mxu0 0
    %925 = vmatprep.subr.bf16.mxu0 0
    %926 = vmatpush1.bf16.msra.mxu0 0
    %927 = vmatprep.subr.bf16.mxu0 0
    %928 = vmatpush1.bf16.msra.mxu0 0
    %929 = vmatprep.subr.bf16.mxu0 0
    %930 = vmatpush1.bf16.msra.mxu0 0
    %931 = vmatprep.subr.bf16.mxu0 0
    %932 = vmatpush1.bf16.msra.mxu0 0
    %933 = vmatprep.subr.bf16.mxu0 0
    %934 = vmatpush1.bf16.msra.mxu0 0
    %935 = vmatprep.subr.bf16.mxu0 0
    %936 = vmatpush1.bf16.msra.mxu0 0
    %937 = vmatprep.mubr.bf16.mxu0 0
    %938 = vmatmul.mubr.bf16.gmra.mrb[0].mxu0 %v822
    %v939 = vpop.f32.mrb[0].mxu0
    %v940 = vadd.f32 0.0, %v939
    %v941 = vpop.f32.mrb[0].mxu0
    %v942 = vadd.f32 0.0, %v941
    %v943 = vpop.f32.mrb[0].mxu0
    %v944 = vpop.f32.mrb[0].mxu0
    %945 = vdwg.mxu0
    %v946 = vmul.f32 %v858, %v858
    %v947 = vmul.f32 %v860, %v860
    %v948 = vmul.f32 %v899, %v899
    %v949 = vmul.f32 %v901, %v901
    %v950 = vmul.f32 %v940, %v940
    %v951 = vmul.f32 %v942, %v942
    %v952 = vadd.f32 %v946, %v947
    %v953 = vadd.f32 %v952, %v948
    %v954 = vadd.f32 %v953, %v949
    %v955 = vadd.f32 %v954, %v950
    %v956 = vadd.f32 %v955, %v951
    %957 = vadd.xlane.f32.xlu0 %v956
    %v958 = vpop.xlane.xlu0 %957
    %v959 = vadd.f32 %v958, 1e-24
    %v960 = vrsqrt.pop %v959
    %v961 = vmul.f32 %v960, 0.01
    %v962 = vmul.f32 %v961, %v858
    %v963 = vmul.f32 %v961, %v860
    %v964 = vmul.f32 %v961, %v899
    %v965 = vmul.f32 %v961, %v901
    %v966 = vmul.f32 %v961, %v940
    %v967 = vmul.f32 %v961, %v942
    %v968 = vsub.f32 %v679, %v962
    %v969 = vsub.f32 %v680, %v963
    %v970 = vsub.f32 %v681, %v964
    %v971 = vsub.f32 %v682, %v965
    %v972 = vsub.f32 %v683, %v966
    %v973 = vsub.f32 %v684, %v967
    %v974 = vsub.f32 %v968, %v59
    %v975 = vsub.f32 %v969, %v60
    %v976 = vsub.f32 %v970, %v61
    %v977 = vsub.f32 %v971, %v62
    %v978 = vsub.f32 %v972, %v63
    %v979 = vsub.f32 %v973, %v64
    %v980 = vmul.f32 %v974, %v974
    %v981 = vmul.f32 %v975, %v975
    %v982 = vmul.f32 %v976, %v976
    %v983 = vmul.f32 %v977, %v977
    %v984 = vmul.f32 %v978, %v978
    %v985 = vmul.f32 %v979, %v979
    %v986 = vadd.f32 %v980, %v981
    %v987 = vadd.f32 %v986, %v982
    %v988 = vadd.f32 %v987, %v983
    %v989 = vadd.f32 %v988, %v984
    %v990 = vadd.f32 %v989, %v985
    %991 = vadd.xlane.f32.xlu0 %v990
    %v992 = vpop.xlane.xlu0 %991
    %v993 = vadd.f32 %v992, 1e-24
    %v994 = vrsqrt.pop %v993
    %v995 = vmul.f32 %v994, 0.5
    %v996 = vmin.f32 %v995, 1.0
    %v997 = vmul.f32 %v974, %v996
    %v998 = vmul.f32 %v975, %v996
    %v999 = vmul.f32 %v976, %v996
    %v1000 = vmul.f32 %v977, %v996
    %v1001 = vmul.f32 %v978, %v996
    %v1002 = vmul.f32 %v979, %v996
    %v1003 = vadd.f32 %v59, %v997
    %v1004 = vadd.f32 %v60, %v998
    %v1005 = vadd.f32 %v61, %v999
    %v1006 = vadd.f32 %v62, %v1000
    %v1007 = vadd.f32 %v63, %v1001
    %v1008 = vadd.f32 %v64, %v1002
    %v1009 = vpack.c.bf16 %v1003, %v1003
    %v1010 = vpack.c.bf16 %v1004, %v1004
    %v1011 = vpack.c.bf16 %v1005, %v1005
    %v1012 = vpack.c.bf16 %v1006, %v1006
    %v1013 = vpack.c.bf16 %v1007, %v1007
    %v1014 = vpack.c.bf16 %v1008, %v1008
    %1015 = vmatprep.subr.bf16.mxu0 %v272
    %1016 = vmatpush1.bf16.xpose.msra.mxu0 %v271
    %1017 = vmatprep.subr.bf16.mxu0 %v278
    %1018 = vmatpush1.bf16.xpose.msra.mxu0 %v277
    %1019 = vmatprep.subr.bf16.mxu0 %v284
    %1020 = vmatpush1.bf16.xpose.msra.mxu0 %v283
    %1021 = vmatprep.subr.bf16.mxu0 %v290
    %1022 = vmatpush1.bf16.xpose.msra.mxu0 %v289
    %1023 = vmatprep.subr.bf16.mxu0 %v296
    %1024 = vmatpush1.bf16.xpose.msra.mxu0 %v295
    %1025 = vmatprep.subr.bf16.mxu0 %v302
    %1026 = vmatpush1.bf16.xpose.msra.mxu0 %v301
    %1027 = vmatprep.subr.bf16.mxu0 %v308
    %1028 = vmatpush1.bf16.xpose.msra.mxu0 %v307
    %1029 = vmatprep.subr.bf16.mxu0 %v314
    %1030 = vmatpush1.bf16.xpose.msra.mxu0 %v313
    %1031 = vmatprep.subr.bf16.mxu0 0
    %1032 = vmatpush1.bf16.xpose.msra.mxu0 0
    %1033 = vmatprep.subr.bf16.mxu0 0
    %1034 = vmatpush1.bf16.xpose.msra.mxu0 0
    %1035 = vmatprep.subr.bf16.mxu0 0
    %1036 = vmatpush1.bf16.xpose.msra.mxu0 0
    %1037 = vmatprep.subr.bf16.mxu0 0
    %1038 = vmatpush1.bf16.xpose.msra.mxu0 0
    %1039 = vmatprep.subr.bf16.mxu0 0
    %1040 = vmatpush1.bf16.xpose.msra.mxu0 0
    %1041 = vmatprep.subr.bf16.mxu0 0
    %1042 = vmatpush1.bf16.xpose.msra.mxu0 0
    %1043 = vmatprep.subr.bf16.mxu0 0
    %1044 = vmatpush1.bf16.xpose.msra.mxu0 0
    %1045 = vmatprep.subr.bf16.mxu0 0
    %1046 = vmatpush1.bf16.xpose.msra.mxu0 0
    %1047 = vmatprep.mubr.bf16.mxu0 %v1010
    %1048 = vmatmul.mubr.bf16.gmra.mrb[0].mxu0 %v1009
    %v1049 = vpop.f32.mrb[0].mxu0
    %v1050 = vadd.f32 %v125, %v1049
    %v1051 = vpop.f32.mrb[0].mxu0
    %v1052 = vpop.f32.mrb[0].mxu0
    %v1053 = vpop.f32.mrb[0].mxu0
    %1054 = vdwg.mxu0
    %1055 = vmatprep.subr.bf16.mxu0 %v274
    %1056 = vmatpush1.bf16.xpose.msra.mxu0 %v273
    %1057 = vmatprep.subr.bf16.mxu0 %v280
    %1058 = vmatpush1.bf16.xpose.msra.mxu0 %v279
    %1059 = vmatprep.subr.bf16.mxu0 %v286
    %1060 = vmatpush1.bf16.xpose.msra.mxu0 %v285
    %1061 = vmatprep.subr.bf16.mxu0 %v292
    %1062 = vmatpush1.bf16.xpose.msra.mxu0 %v291
    %1063 = vmatprep.subr.bf16.mxu0 %v298
    %1064 = vmatpush1.bf16.xpose.msra.mxu0 %v297
    %1065 = vmatprep.subr.bf16.mxu0 %v304
    %1066 = vmatpush1.bf16.xpose.msra.mxu0 %v303
    %1067 = vmatprep.subr.bf16.mxu0 %v310
    %1068 = vmatpush1.bf16.xpose.msra.mxu0 %v309
    %1069 = vmatprep.subr.bf16.mxu0 %v316
    %1070 = vmatpush1.bf16.xpose.msra.mxu0 %v315
    %1071 = vmatprep.subr.bf16.mxu0 0
    %1072 = vmatpush1.bf16.xpose.msra.mxu0 0
    %1073 = vmatprep.subr.bf16.mxu0 0
    %1074 = vmatpush1.bf16.xpose.msra.mxu0 0
    %1075 = vmatprep.subr.bf16.mxu0 0
    %1076 = vmatpush1.bf16.xpose.msra.mxu0 0
    %1077 = vmatprep.subr.bf16.mxu0 0
    %1078 = vmatpush1.bf16.xpose.msra.mxu0 0
    %1079 = vmatprep.subr.bf16.mxu0 0
    %1080 = vmatpush1.bf16.xpose.msra.mxu0 0
    %1081 = vmatprep.subr.bf16.mxu0 0
    %1082 = vmatpush1.bf16.xpose.msra.mxu0 0
    %1083 = vmatprep.subr.bf16.mxu0 0
    %1084 = vmatpush1.bf16.xpose.msra.mxu0 0
    %1085 = vmatprep.subr.bf16.mxu0 0
    %1086 = vmatpush1.bf16.xpose.msra.mxu0 0
    %1087 = vmatprep.mubr.bf16.mxu0 %v1012
    %1088 = vmatmul.mubr.bf16.gmra.mrb[0].mxu0 %v1011
    %v1089 = vpop.f32.mrb[0].mxu0
    %v1090 = vadd.f32 %v1050, %v1089
    %v1091 = vpop.f32.mrb[0].mxu0
    %v1092 = vpop.f32.mrb[0].mxu0
    %v1093 = vpop.f32.mrb[0].mxu0
    %1094 = vdwg.mxu0
    %1095 = vmatprep.subr.bf16.mxu0 %v276
    %1096 = vmatpush1.bf16.xpose.msra.mxu0 %v275
    %1097 = vmatprep.subr.bf16.mxu0 %v282
    %1098 = vmatpush1.bf16.xpose.msra.mxu0 %v281
    %1099 = vmatprep.subr.bf16.mxu0 %v288
    %1100 = vmatpush1.bf16.xpose.msra.mxu0 %v287
    %1101 = vmatprep.subr.bf16.mxu0 %v294
    %1102 = vmatpush1.bf16.xpose.msra.mxu0 %v293
    %1103 = vmatprep.subr.bf16.mxu0 %v300
    %1104 = vmatpush1.bf16.xpose.msra.mxu0 %v299
    %1105 = vmatprep.subr.bf16.mxu0 %v306
    %1106 = vmatpush1.bf16.xpose.msra.mxu0 %v305
    %1107 = vmatprep.subr.bf16.mxu0 %v312
    %1108 = vmatpush1.bf16.xpose.msra.mxu0 %v311
    %1109 = vmatprep.subr.bf16.mxu0 %v318
    %1110 = vmatpush1.bf16.xpose.msra.mxu0 %v317
    %1111 = vmatprep.subr.bf16.mxu0 0
    %1112 = vmatpush1.bf16.xpose.msra.mxu0 0
    %1113 = vmatprep.subr.bf16.mxu0 0
    %1114 = vmatpush1.bf16.xpose.msra.mxu0 0
    %1115 = vmatprep.subr.bf16.mxu0 0
    %1116 = vmatpush1.bf16.xpose.msra.mxu0 0
    %1117 = vmatprep.subr.bf16.mxu0 0
    %1118 = vmatpush1.bf16.xpose.msra.mxu0 0
    %1119 = vmatprep.subr.bf16.mxu0 0
    %1120 = vmatpush1.bf16.xpose.msra.mxu0 0
    %1121 = vmatprep.subr.bf16.mxu0 0
    %1122 = vmatpush1.bf16.xpose.msra.mxu0 0
    %1123 = vmatprep.subr.bf16.mxu0 0
    %1124 = vmatpush1.bf16.xpose.msra.mxu0 0
    %1125 = vmatprep.subr.bf16.mxu0 0
    %1126 = vmatpush1.bf16.xpose.msra.mxu0 0
    %1127 = vmatprep.mubr.bf16.mxu0 %v1014
    %1128 = vmatmul.mubr.bf16.gmra.mrb[0].mxu0 %v1013
    %v1129 = vpop.f32.mrb[0].mxu0
    %v1130 = vadd.f32 %v1090, %v1129
    %v1131 = vpop.f32.mrb[0].mxu0
    %v1132 = vpop.f32.mrb[0].mxu0
    %v1133 = vpop.f32.mrb[0].mxu0
    %1134 = vdwg.mxu0
    %1135 = vmax.xlane.f32.xlu0 %v1130
    %v1136 = vpop.xlane.xlu0 %1135
    %v1137 = vsub.f32 %v1130, %v1136
    %v1138 = vmul.f32 %v1137, 1.442695
    %v1139 = vpow.pop %v1138
    %1140 = vadd.xlane.f32.xlu0 %v1139
    %v1141 = vpop.xlane.xlu0 %1140
    %v1142 = vrcp.pop %v1141
    %v1143 = vmul.f32 %v1139, %v1142
    %v1144 = vsub.f32 %v1143, %v65
    %v1145 = vmul.f32 %v1144, 0.5
    %v1146 = vpack.c.bf16 %v1145, %v1145
    %1147 = vmatprep.subr.bf16.mxu0 %v272
    %1148 = vmatpush1.bf16.msra.mxu0 %v271
    %1149 = vmatprep.subr.bf16.mxu0 %v278
    %1150 = vmatpush1.bf16.msra.mxu0 %v277
    %1151 = vmatprep.subr.bf16.mxu0 %v284
    %1152 = vmatpush1.bf16.msra.mxu0 %v283
    %1153 = vmatprep.subr.bf16.mxu0 %v290
    %1154 = vmatpush1.bf16.msra.mxu0 %v289
    %1155 = vmatprep.subr.bf16.mxu0 %v296
    %1156 = vmatpush1.bf16.msra.mxu0 %v295
    %1157 = vmatprep.subr.bf16.mxu0 %v302
    %1158 = vmatpush1.bf16.msra.mxu0 %v301
    %1159 = vmatprep.subr.bf16.mxu0 %v308
    %1160 = vmatpush1.bf16.msra.mxu0 %v307
    %1161 = vmatprep.subr.bf16.mxu0 %v314
    %1162 = vmatpush1.bf16.msra.mxu0 %v313
    %1163 = vmatprep.subr.bf16.mxu0 0
    %1164 = vmatpush1.bf16.msra.mxu0 0
    %1165 = vmatprep.subr.bf16.mxu0 0
    %1166 = vmatpush1.bf16.msra.mxu0 0
    %1167 = vmatprep.subr.bf16.mxu0 0
    %1168 = vmatpush1.bf16.msra.mxu0 0
    %1169 = vmatprep.subr.bf16.mxu0 0
    %1170 = vmatpush1.bf16.msra.mxu0 0
    %1171 = vmatprep.subr.bf16.mxu0 0
    %1172 = vmatpush1.bf16.msra.mxu0 0
    %1173 = vmatprep.subr.bf16.mxu0 0
    %1174 = vmatpush1.bf16.msra.mxu0 0
    %1175 = vmatprep.subr.bf16.mxu0 0
    %1176 = vmatpush1.bf16.msra.mxu0 0
    %1177 = vmatprep.subr.bf16.mxu0 0
    %1178 = vmatpush1.bf16.msra.mxu0 0
    %1179 = vmatprep.mubr.bf16.mxu0 0
    %1180 = vmatmul.mubr.bf16.gmra.mrb[0].mxu0 %v1146
    %v1181 = vpop.f32.mrb[0].mxu0
    %v1182 = vadd.f32 0.0, %v1181
    %v1183 = vpop.f32.mrb[0].mxu0
    %v1184 = vadd.f32 0.0, %v1183
    %v1185 = vpop.f32.mrb[0].mxu0
    %v1186 = vpop.f32.mrb[0].mxu0
    %1187 = vdwg.mxu0
    %1188 = vmatprep.subr.bf16.mxu0 %v274
    %1189 = vmatpush1.bf16.msra.mxu0 %v273
    %1190 = vmatprep.subr.bf16.mxu0 %v280
    %1191 = vmatpush1.bf16.msra.mxu0 %v279
    %1192 = vmatprep.subr.bf16.mxu0 %v286
    %1193 = vmatpush1.bf16.msra.mxu0 %v285
    %1194 = vmatprep.subr.bf16.mxu0 %v292
    %1195 = vmatpush1.bf16.msra.mxu0 %v291
    %1196 = vmatprep.subr.bf16.mxu0 %v298
    %1197 = vmatpush1.bf16.msra.mxu0 %v297
    %1198 = vmatprep.subr.bf16.mxu0 %v304
    %1199 = vmatpush1.bf16.msra.mxu0 %v303
    %1200 = vmatprep.subr.bf16.mxu0 %v310
    %1201 = vmatpush1.bf16.msra.mxu0 %v309
    %1202 = vmatprep.subr.bf16.mxu0 %v316
    %1203 = vmatpush1.bf16.msra.mxu0 %v315
    %1204 = vmatprep.subr.bf16.mxu0 0
    %1205 = vmatpush1.bf16.msra.mxu0 0
    %1206 = vmatprep.subr.bf16.mxu0 0
    %1207 = vmatpush1.bf16.msra.mxu0 0
    %1208 = vmatprep.subr.bf16.mxu0 0
    %1209 = vmatpush1.bf16.msra.mxu0 0
    %1210 = vmatprep.subr.bf16.mxu0 0
    %1211 = vmatpush1.bf16.msra.mxu0 0
    %1212 = vmatprep.subr.bf16.mxu0 0
    %1213 = vmatpush1.bf16.msra.mxu0 0
    %1214 = vmatprep.subr.bf16.mxu0 0
    %1215 = vmatpush1.bf16.msra.mxu0 0
    %1216 = vmatprep.subr.bf16.mxu0 0
    %1217 = vmatpush1.bf16.msra.mxu0 0
    %1218 = vmatprep.subr.bf16.mxu0 0
    %1219 = vmatpush1.bf16.msra.mxu0 0
    %1220 = vmatprep.mubr.bf16.mxu0 0
    %1221 = vmatmul.mubr.bf16.gmra.mrb[0].mxu0 %v1146
    %v1222 = vpop.f32.mrb[0].mxu0
    %v1223 = vadd.f32 0.0, %v1222
    %v1224 = vpop.f32.mrb[0].mxu0
    %v1225 = vadd.f32 0.0, %v1224
    %v1226 = vpop.f32.mrb[0].mxu0
    %v1227 = vpop.f32.mrb[0].mxu0
    %1228 = vdwg.mxu0
    %1229 = vmatprep.subr.bf16.mxu0 %v276
    %1230 = vmatpush1.bf16.msra.mxu0 %v275
    %1231 = vmatprep.subr.bf16.mxu0 %v282
    %1232 = vmatpush1.bf16.msra.mxu0 %v281
    %1233 = vmatprep.subr.bf16.mxu0 %v288
    %1234 = vmatpush1.bf16.msra.mxu0 %v287
    %1235 = vmatprep.subr.bf16.mxu0 %v294
    %1236 = vmatpush1.bf16.msra.mxu0 %v293
    %1237 = vmatprep.subr.bf16.mxu0 %v300
    %1238 = vmatpush1.bf16.msra.mxu0 %v299
    %1239 = vmatprep.subr.bf16.mxu0 %v306
    %1240 = vmatpush1.bf16.msra.mxu0 %v305
    %1241 = vmatprep.subr.bf16.mxu0 %v312
    %1242 = vmatpush1.bf16.msra.mxu0 %v311
    %1243 = vmatprep.subr.bf16.mxu0 %v318
    %1244 = vmatpush1.bf16.msra.mxu0 %v317
    %1245 = vmatprep.subr.bf16.mxu0 0
    %1246 = vmatpush1.bf16.msra.mxu0 0
    %1247 = vmatprep.subr.bf16.mxu0 0
    %1248 = vmatpush1.bf16.msra.mxu0 0
    %1249 = vmatprep.subr.bf16.mxu0 0
    %1250 = vmatpush1.bf16.msra.mxu0 0
    %1251 = vmatprep.subr.bf16.mxu0 0
    %1252 = vmatpush1.bf16.msra.mxu0 0
    %1253 = vmatprep.subr.bf16.mxu0 0
    %1254 = vmatpush1.bf16.msra.mxu0 0
    %1255 = vmatprep.subr.bf16.mxu0 0
    %1256 = vmatpush1.bf16.msra.mxu0 0
    %1257 = vmatprep.subr.bf16.mxu0 0
    %1258 = vmatpush1.bf16.msra.mxu0 0
    %1259 = vmatprep.subr.bf16.mxu0 0
    %1260 = vmatpush1.bf16.msra.mxu0 0
    %1261 = vmatprep.mubr.bf16.mxu0 0
    %1262 = vmatmul.mubr.bf16.gmra.mrb[0].mxu0 %v1146
    %v1263 = vpop.f32.mrb[0].mxu0
    %v1264 = vadd.f32 0.0, %v1263
    %v1265 = vpop.f32.mrb[0].mxu0
    %v1266 = vadd.f32 0.0, %v1265
    %v1267 = vpop.f32.mrb[0].mxu0
    %v1268 = vpop.f32.mrb[0].mxu0
    %1269 = vdwg.mxu0
    %v1270 = vmul.f32 %v1182, %v1182
    %v1271 = vmul.f32 %v1184, %v1184
    %v1272 = vmul.f32 %v1223, %v1223
    %v1273 = vmul.f32 %v1225, %v1225
    %v1274 = vmul.f32 %v1264, %v1264
    %v1275 = vmul.f32 %v1266, %v1266
    %v1276 = vadd.f32 %v1270, %v1271
    %v1277 = vadd.f32 %v1276, %v1272
    %v1278 = vadd.f32 %v1277, %v1273
    %v1279 = vadd.f32 %v1278, %v1274
    %v1280 = vadd.f32 %v1279, %v1275
    %1281 = vadd.xlane.f32.xlu0 %v1280
    %v1282 = vpop.xlane.xlu0 %1281
    %v1283 = vadd.f32 %v1282, 1e-24
    %v1284 = vrsqrt.pop %v1283
    %v1285 = vmul.f32 %v1284, 0.01
    %v1286 = vmul.f32 %v1285, %v1182
    %v1287 = vmul.f32 %v1285, %v1184
    %v1288 = vmul.f32 %v1285, %v1223
    %v1289 = vmul.f32 %v1285, %v1225
    %v1290 = vmul.f32 %v1285, %v1264
    %v1291 = vmul.f32 %v1285, %v1266
    %v1292 = vsub.f32 %v1003, %v1286
    %v1293 = vsub.f32 %v1004, %v1287
    %v1294 = vsub.f32 %v1005, %v1288
    %v1295 = vsub.f32 %v1006, %v1289
    %v1296 = vsub.f32 %v1007, %v1290
    %v1297 = vsub.f32 %v1008, %v1291
    %v1298 = vsub.f32 %v1292, %v59
    %v1299 = vsub.f32 %v1293, %v60
    %v1300 = vsub.f32 %v1294, %v61
    %v1301 = vsub.f32 %v1295, %v62
    %v1302 = vsub.f32 %v1296, %v63
    %v1303 = vsub.f32 %v1297, %v64
    %v1304 = vmul.f32 %v1298, %v1298
    %v1305 = vmul.f32 %v1299, %v1299
    %v1306 = vmul.f32 %v1300, %v1300
    %v1307 = vmul.f32 %v1301, %v1301
    %v1308 = vmul.f32 %v1302, %v1302
    %v1309 = vmul.f32 %v1303, %v1303
    %v1310 = vadd.f32 %v1304, %v1305
    %v1311 = vadd.f32 %v1310, %v1306
    %v1312 = vadd.f32 %v1311, %v1307
    %v1313 = vadd.f32 %v1312, %v1308
    %v1314 = vadd.f32 %v1313, %v1309
    %1315 = vadd.xlane.f32.xlu0 %v1314
    %v1316 = vpop.xlane.xlu0 %1315
    %v1317 = vadd.f32 %v1316, 1e-24
    %v1318 = vrsqrt.pop %v1317
    %v1319 = vmul.f32 %v1318, 0.5
    %v1320 = vmin.f32 %v1319, 1.0
    %v1321 = vmul.f32 %v1298, %v1320
    %v1322 = vmul.f32 %v1299, %v1320
    %v1323 = vmul.f32 %v1300, %v1320
    %v1324 = vmul.f32 %v1301, %v1320
    %v1325 = vmul.f32 %v1302, %v1320
    %v1326 = vmul.f32 %v1303, %v1320
    %v1327 = vadd.f32 %v59, %v1321
    %v1328 = vadd.f32 %v60, %v1322
    %v1329 = vadd.f32 %v61, %v1323
    %v1330 = vadd.f32 %v62, %v1324
    %v1331 = vadd.f32 %v63, %v1325
    %v1332 = vadd.f32 %v64, %v1326
    %v1333 = vpack.c.bf16 %v1327, %v1327
    %v1334 = vpack.c.bf16 %v1328, %v1328
    %v1335 = vpack.c.bf16 %v1329, %v1329
    %v1336 = vpack.c.bf16 %v1330, %v1330
    %v1337 = vpack.c.bf16 %v1331, %v1331
    %v1338 = vpack.c.bf16 %v1332, %v1332
    %1339 = vmatprep.subr.bf16.mxu0 %v272
    %1340 = vmatpush1.bf16.xpose.msra.mxu0 %v271
    %1341 = vmatprep.subr.bf16.mxu0 %v278
    %1342 = vmatpush1.bf16.xpose.msra.mxu0 %v277
    %1343 = vmatprep.subr.bf16.mxu0 %v284
    %1344 = vmatpush1.bf16.xpose.msra.mxu0 %v283
    %1345 = vmatprep.subr.bf16.mxu0 %v290
    %1346 = vmatpush1.bf16.xpose.msra.mxu0 %v289
    %1347 = vmatprep.subr.bf16.mxu0 %v296
    %1348 = vmatpush1.bf16.xpose.msra.mxu0 %v295
    %1349 = vmatprep.subr.bf16.mxu0 %v302
    %1350 = vmatpush1.bf16.xpose.msra.mxu0 %v301
    %1351 = vmatprep.subr.bf16.mxu0 %v308
    %1352 = vmatpush1.bf16.xpose.msra.mxu0 %v307
    %1353 = vmatprep.subr.bf16.mxu0 %v314
    %1354 = vmatpush1.bf16.xpose.msra.mxu0 %v313
    %1355 = vmatprep.subr.bf16.mxu0 0
    %1356 = vmatpush1.bf16.xpose.msra.mxu0 0
    %1357 = vmatprep.subr.bf16.mxu0 0
    %1358 = vmatpush1.bf16.xpose.msra.mxu0 0
    %1359 = vmatprep.subr.bf16.mxu0 0
    %1360 = vmatpush1.bf16.xpose.msra.mxu0 0
    %1361 = vmatprep.subr.bf16.mxu0 0
    %1362 = vmatpush1.bf16.xpose.msra.mxu0 0
    %1363 = vmatprep.subr.bf16.mxu0 0
    %1364 = vmatpush1.bf16.xpose.msra.mxu0 0
    %1365 = vmatprep.subr.bf16.mxu0 0
    %1366 = vmatpush1.bf16.xpose.msra.mxu0 0
    %1367 = vmatprep.subr.bf16.mxu0 0
    %1368 = vmatpush1.bf16.xpose.msra.mxu0 0
    %1369 = vmatprep.subr.bf16.mxu0 0
    %1370 = vmatpush1.bf16.xpose.msra.mxu0 0
    %1371 = vmatprep.mubr.bf16.mxu0 %v1334
    %1372 = vmatmul.mubr.bf16.gmra.mrb[0].mxu0 %v1333
    %v1373 = vpop.f32.mrb[0].mxu0
    %v1374 = vadd.f32 %v125, %v1373
    %v1375 = vpop.f32.mrb[0].mxu0
    %v1376 = vpop.f32.mrb[0].mxu0
    %v1377 = vpop.f32.mrb[0].mxu0
    %1378 = vdwg.mxu0
    %1379 = vmatprep.subr.bf16.mxu0 %v274
    %1380 = vmatpush1.bf16.xpose.msra.mxu0 %v273
    %1381 = vmatprep.subr.bf16.mxu0 %v280
    %1382 = vmatpush1.bf16.xpose.msra.mxu0 %v279
    %1383 = vmatprep.subr.bf16.mxu0 %v286
    %1384 = vmatpush1.bf16.xpose.msra.mxu0 %v285
    %1385 = vmatprep.subr.bf16.mxu0 %v292
    %1386 = vmatpush1.bf16.xpose.msra.mxu0 %v291
    %1387 = vmatprep.subr.bf16.mxu0 %v298
    %1388 = vmatpush1.bf16.xpose.msra.mxu0 %v297
    %1389 = vmatprep.subr.bf16.mxu0 %v304
    %1390 = vmatpush1.bf16.xpose.msra.mxu0 %v303
    %1391 = vmatprep.subr.bf16.mxu0 %v310
    %1392 = vmatpush1.bf16.xpose.msra.mxu0 %v309
    %1393 = vmatprep.subr.bf16.mxu0 %v316
    %1394 = vmatpush1.bf16.xpose.msra.mxu0 %v315
    %1395 = vmatprep.subr.bf16.mxu0 0
    %1396 = vmatpush1.bf16.xpose.msra.mxu0 0
    %1397 = vmatprep.subr.bf16.mxu0 0
    %1398 = vmatpush1.bf16.xpose.msra.mxu0 0
    %1399 = vmatprep.subr.bf16.mxu0 0
    %1400 = vmatpush1.bf16.xpose.msra.mxu0 0
    %1401 = vmatprep.subr.bf16.mxu0 0
    %1402 = vmatpush1.bf16.xpose.msra.mxu0 0
    %1403 = vmatprep.subr.bf16.mxu0 0
    %1404 = vmatpush1.bf16.xpose.msra.mxu0 0
    %1405 = vmatprep.subr.bf16.mxu0 0
    %1406 = vmatpush1.bf16.xpose.msra.mxu0 0
    %1407 = vmatprep.subr.bf16.mxu0 0
    %1408 = vmatpush1.bf16.xpose.msra.mxu0 0
    %1409 = vmatprep.subr.bf16.mxu0 0
    %1410 = vmatpush1.bf16.xpose.msra.mxu0 0
    %1411 = vmatprep.mubr.bf16.mxu0 %v1336
    %1412 = vmatmul.mubr.bf16.gmra.mrb[0].mxu0 %v1335
    %v1413 = vpop.f32.mrb[0].mxu0
    %v1414 = vadd.f32 %v1374, %v1413
    %v1415 = vpop.f32.mrb[0].mxu0
    %v1416 = vpop.f32.mrb[0].mxu0
    %v1417 = vpop.f32.mrb[0].mxu0
    %1418 = vdwg.mxu0
    %1419 = vmatprep.subr.bf16.mxu0 %v276
    %1420 = vmatpush1.bf16.xpose.msra.mxu0 %v275
    %1421 = vmatprep.subr.bf16.mxu0 %v282
    %1422 = vmatpush1.bf16.xpose.msra.mxu0 %v281
    %1423 = vmatprep.subr.bf16.mxu0 %v288
    %1424 = vmatpush1.bf16.xpose.msra.mxu0 %v287
    %1425 = vmatprep.subr.bf16.mxu0 %v294
    %1426 = vmatpush1.bf16.xpose.msra.mxu0 %v293
    %1427 = vmatprep.subr.bf16.mxu0 %v300
    %1428 = vmatpush1.bf16.xpose.msra.mxu0 %v299
    %1429 = vmatprep.subr.bf16.mxu0 %v306
    %1430 = vmatpush1.bf16.xpose.msra.mxu0 %v305
    %1431 = vmatprep.subr.bf16.mxu0 %v312
    %1432 = vmatpush1.bf16.xpose.msra.mxu0 %v311
    %1433 = vmatprep.subr.bf16.mxu0 %v318
    %1434 = vmatpush1.bf16.xpose.msra.mxu0 %v317
    %1435 = vmatprep.subr.bf16.mxu0 0
    %1436 = vmatpush1.bf16.xpose.msra.mxu0 0
    %1437 = vmatprep.subr.bf16.mxu0 0
    %1438 = vmatpush1.bf16.xpose.msra.mxu0 0
    %1439 = vmatprep.subr.bf16.mxu0 0
    %1440 = vmatpush1.bf16.xpose.msra.mxu0 0
    %1441 = vmatprep.subr.bf16.mxu0 0
    %1442 = vmatpush1.bf16.xpose.msra.mxu0 0
    %1443 = vmatprep.subr.bf16.mxu0 0
    %1444 = vmatpush1.bf16.xpose.msra.mxu0 0
    %1445 = vmatprep.subr.bf16.mxu0 0
    %1446 = vmatpush1.bf16.xpose.msra.mxu0 0
    %1447 = vmatprep.subr.bf16.mxu0 0
    %1448 = vmatpush1.bf16.xpose.msra.mxu0 0
    %1449 = vmatprep.subr.bf16.mxu0 0
    %1450 = vmatpush1.bf16.xpose.msra.mxu0 0
    %1451 = vmatprep.mubr.bf16.mxu0 %v1338
    %1452 = vmatmul.mubr.bf16.gmra.mrb[0].mxu0 %v1337
    %v1453 = vpop.f32.mrb[0].mxu0
    %v1454 = vadd.f32 %v1414, %v1453
    %v1455 = vpop.f32.mrb[0].mxu0
    %v1456 = vpop.f32.mrb[0].mxu0
    %v1457 = vpop.f32.mrb[0].mxu0
    %1458 = vdwg.mxu0
    %1459 = vmax.xlane.f32.xlu0 %v1454
    %v1460 = vpop.xlane.xlu0 %1459
    %v1461 = vsub.f32 %v1454, %v1460
    %v1462 = vmul.f32 %v1461, 1.442695
    %v1463 = vpow.pop %v1462
    %1464 = vadd.xlane.f32.xlu0 %v1463
    %v1465 = vpop.xlane.xlu0 %1464
    %v1466 = vrcp.pop %v1465
    %v1467 = vmul.f32 %v1463, %v1466
    %v1468 = vsub.f32 %v1467, %v65
    %v1469 = vmul.f32 %v1468, 0.5
    %v1470 = vpack.c.bf16 %v1469, %v1469
    %1471 = vmatprep.subr.bf16.mxu0 %v272
    %1472 = vmatpush1.bf16.msra.mxu0 %v271
    %1473 = vmatprep.subr.bf16.mxu0 %v278
    %1474 = vmatpush1.bf16.msra.mxu0 %v277
    %1475 = vmatprep.subr.bf16.mxu0 %v284
    %1476 = vmatpush1.bf16.msra.mxu0 %v283
    %1477 = vmatprep.subr.bf16.mxu0 %v290
    %1478 = vmatpush1.bf16.msra.mxu0 %v289
    %1479 = vmatprep.subr.bf16.mxu0 %v296
    %1480 = vmatpush1.bf16.msra.mxu0 %v295
    %1481 = vmatprep.subr.bf16.mxu0 %v302
    %1482 = vmatpush1.bf16.msra.mxu0 %v301
    %1483 = vmatprep.subr.bf16.mxu0 %v308
    %1484 = vmatpush1.bf16.msra.mxu0 %v307
    %1485 = vmatprep.subr.bf16.mxu0 %v314
    %1486 = vmatpush1.bf16.msra.mxu0 %v313
    %1487 = vmatprep.subr.bf16.mxu0 0
    %1488 = vmatpush1.bf16.msra.mxu0 0
    %1489 = vmatprep.subr.bf16.mxu0 0
    %1490 = vmatpush1.bf16.msra.mxu0 0
    %1491 = vmatprep.subr.bf16.mxu0 0
    %1492 = vmatpush1.bf16.msra.mxu0 0
    %1493 = vmatprep.subr.bf16.mxu0 0
    %1494 = vmatpush1.bf16.msra.mxu0 0
    %1495 = vmatprep.subr.bf16.mxu0 0
    %1496 = vmatpush1.bf16.msra.mxu0 0
    %1497 = vmatprep.subr.bf16.mxu0 0
    %1498 = vmatpush1.bf16.msra.mxu0 0
    %1499 = vmatprep.subr.bf16.mxu0 0
    %1500 = vmatpush1.bf16.msra.mxu0 0
    %1501 = vmatprep.subr.bf16.mxu0 0
    %1502 = vmatpush1.bf16.msra.mxu0 0
    %1503 = vmatprep.mubr.bf16.mxu0 0
    %1504 = vmatmul.mubr.bf16.gmra.mrb[0].mxu0 %v1470
    %v1505 = vpop.f32.mrb[0].mxu0
    %v1506 = vadd.f32 0.0, %v1505
    %v1507 = vpop.f32.mrb[0].mxu0
    %v1508 = vadd.f32 0.0, %v1507
    %v1509 = vpop.f32.mrb[0].mxu0
    %v1510 = vpop.f32.mrb[0].mxu0
    %1511 = vdwg.mxu0
    %1512 = vmatprep.subr.bf16.mxu0 %v274
    %1513 = vmatpush1.bf16.msra.mxu0 %v273
    %1514 = vmatprep.subr.bf16.mxu0 %v280
    %1515 = vmatpush1.bf16.msra.mxu0 %v279
    %1516 = vmatprep.subr.bf16.mxu0 %v286
    %1517 = vmatpush1.bf16.msra.mxu0 %v285
    %1518 = vmatprep.subr.bf16.mxu0 %v292
    %1519 = vmatpush1.bf16.msra.mxu0 %v291
    %1520 = vmatprep.subr.bf16.mxu0 %v298
    %1521 = vmatpush1.bf16.msra.mxu0 %v297
    %1522 = vmatprep.subr.bf16.mxu0 %v304
    %1523 = vmatpush1.bf16.msra.mxu0 %v303
    %1524 = vmatprep.subr.bf16.mxu0 %v310
    %1525 = vmatpush1.bf16.msra.mxu0 %v309
    %1526 = vmatprep.subr.bf16.mxu0 %v316
    %1527 = vmatpush1.bf16.msra.mxu0 %v315
    %1528 = vmatprep.subr.bf16.mxu0 0
    %1529 = vmatpush1.bf16.msra.mxu0 0
    %1530 = vmatprep.subr.bf16.mxu0 0
    %1531 = vmatpush1.bf16.msra.mxu0 0
    %1532 = vmatprep.subr.bf16.mxu0 0
    %1533 = vmatpush1.bf16.msra.mxu0 0
    %1534 = vmatprep.subr.bf16.mxu0 0
    %1535 = vmatpush1.bf16.msra.mxu0 0
    %1536 = vmatprep.subr.bf16.mxu0 0
    %1537 = vmatpush1.bf16.msra.mxu0 0
    %1538 = vmatprep.subr.bf16.mxu0 0
    %1539 = vmatpush1.bf16.msra.mxu0 0
    %1540 = vmatprep.subr.bf16.mxu0 0
    %1541 = vmatpush1.bf16.msra.mxu0 0
    %1542 = vmatprep.subr.bf16.mxu0 0
    %1543 = vmatpush1.bf16.msra.mxu0 0
    %1544 = vmatprep.mubr.bf16.mxu0 0
    %1545 = vmatmul.mubr.bf16.gmra.mrb[0].mxu0 %v1470
    %v1546 = vpop.f32.mrb[0].mxu0
    %v1547 = vadd.f32 0.0, %v1546
    %v1548 = vpop.f32.mrb[0].mxu0
    %v1549 = vadd.f32 0.0, %v1548
    %v1550 = vpop.f32.mrb[0].mxu0
    %v1551 = vpop.f32.mrb[0].mxu0
    %1552 = vdwg.mxu0
    %1553 = vmatprep.subr.bf16.mxu0 %v276
    %1554 = vmatpush1.bf16.msra.mxu0 %v275
    %1555 = vmatprep.subr.bf16.mxu0 %v282
    %1556 = vmatpush1.bf16.msra.mxu0 %v281
    %1557 = vmatprep.subr.bf16.mxu0 %v288
    %1558 = vmatpush1.bf16.msra.mxu0 %v287
    %1559 = vmatprep.subr.bf16.mxu0 %v294
    %1560 = vmatpush1.bf16.msra.mxu0 %v293
    %1561 = vmatprep.subr.bf16.mxu0 %v300
    %1562 = vmatpush1.bf16.msra.mxu0 %v299
    %1563 = vmatprep.subr.bf16.mxu0 %v306
    %1564 = vmatpush1.bf16.msra.mxu0 %v305
    %1565 = vmatprep.subr.bf16.mxu0 %v312
    %1566 = vmatpush1.bf16.msra.mxu0 %v311
    %1567 = vmatprep.subr.bf16.mxu0 %v318
    %1568 = vmatpush1.bf16.msra.mxu0 %v317
    %1569 = vmatprep.subr.bf16.mxu0 0
    %1570 = vmatpush1.bf16.msra.mxu0 0
    %1571 = vmatprep.subr.bf16.mxu0 0
    %1572 = vmatpush1.bf16.msra.mxu0 0
    %1573 = vmatprep.subr.bf16.mxu0 0
    %1574 = vmatpush1.bf16.msra.mxu0 0
    %1575 = vmatprep.subr.bf16.mxu0 0
    %1576 = vmatpush1.bf16.msra.mxu0 0
    %1577 = vmatprep.subr.bf16.mxu0 0
    %1578 = vmatpush1.bf16.msra.mxu0 0
    %1579 = vmatprep.subr.bf16.mxu0 0
    %1580 = vmatpush1.bf16.msra.mxu0 0
    %1581 = vmatprep.subr.bf16.mxu0 0
    %1582 = vmatpush1.bf16.msra.mxu0 0
    %1583 = vmatprep.subr.bf16.mxu0 0
    %1584 = vmatpush1.bf16.msra.mxu0 0
    %1585 = vmatprep.mubr.bf16.mxu0 0
    %1586 = vmatmul.mubr.bf16.gmra.mrb[0].mxu0 %v1470
    %v1587 = vpop.f32.mrb[0].mxu0
    %v1588 = vadd.f32 0.0, %v1587
    %v1589 = vpop.f32.mrb[0].mxu0
    %v1590 = vadd.f32 0.0, %v1589
    %v1591 = vpop.f32.mrb[0].mxu0
    %v1592 = vpop.f32.mrb[0].mxu0
    %1593 = vdwg.mxu0
    %v1594 = vmul.f32 %v1506, %v1506
    %v1595 = vmul.f32 %v1508, %v1508
    %v1596 = vmul.f32 %v1547, %v1547
    %v1597 = vmul.f32 %v1549, %v1549
    %v1598 = vmul.f32 %v1588, %v1588
    %v1599 = vmul.f32 %v1590, %v1590
    %v1600 = vadd.f32 %v1594, %v1595
    %v1601 = vadd.f32 %v1600, %v1596
    %v1602 = vadd.f32 %v1601, %v1597
    %v1603 = vadd.f32 %v1602, %v1598
    %v1604 = vadd.f32 %v1603, %v1599
    %1605 = vadd.xlane.f32.xlu0 %v1604
    %v1606 = vpop.xlane.xlu0 %1605
    %v1607 = vadd.f32 %v1606, 1e-24
    %v1608 = vrsqrt.pop %v1607
    %v1609 = vmul.f32 %v1608, 0.01
    %v1610 = vmul.f32 %v1609, %v1506
    %v1611 = vmul.f32 %v1609, %v1508
    %v1612 = vmul.f32 %v1609, %v1547
    %v1613 = vmul.f32 %v1609, %v1549
    %v1614 = vmul.f32 %v1609, %v1588
    %v1615 = vmul.f32 %v1609, %v1590
    %v1616 = vsub.f32 %v1327, %v1610
    %v1617 = vsub.f32 %v1328, %v1611
    %v1618 = vsub.f32 %v1329, %v1612
    %v1619 = vsub.f32 %v1330, %v1613
    %v1620 = vsub.f32 %v1331, %v1614
    %v1621 = vsub.f32 %v1332, %v1615
    %v1622 = vsub.f32 %v1616, %v59
    %v1623 = vsub.f32 %v1617, %v60
    %v1624 = vsub.f32 %v1618, %v61
    %v1625 = vsub.f32 %v1619, %v62
    %v1626 = vsub.f32 %v1620, %v63
    %v1627 = vsub.f32 %v1621, %v64
    %v1628 = vmul.f32 %v1622, %v1622
    %v1629 = vmul.f32 %v1623, %v1623
    %v1630 = vmul.f32 %v1624, %v1624
    %v1631 = vmul.f32 %v1625, %v1625
    %v1632 = vmul.f32 %v1626, %v1626
    %v1633 = vmul.f32 %v1627, %v1627
    %v1634 = vadd.f32 %v1628, %v1629
    %v1635 = vadd.f32 %v1634, %v1630
    %v1636 = vadd.f32 %v1635, %v1631
    %v1637 = vadd.f32 %v1636, %v1632
    %v1638 = vadd.f32 %v1637, %v1633
    %1639 = vadd.xlane.f32.xlu0 %v1638
    %v1640 = vpop.xlane.xlu0 %1639
    %v1641 = vadd.f32 %v1640, 1e-24
    %v1642 = vrsqrt.pop %v1641
    %v1643 = vmul.f32 %v1642, 0.5
    %v1644 = vmin.f32 %v1643, 1.0
    %v1645 = vmul.f32 %v1622, %v1644
    %v1646 = vmul.f32 %v1623, %v1644
    %v1647 = vmul.f32 %v1624, %v1644
    %v1648 = vmul.f32 %v1625, %v1644
    %v1649 = vmul.f32 %v1626, %v1644
    %v1650 = vmul.f32 %v1627, %v1644
    %v1651 = vadd.f32 %v59, %v1645
    %v1652 = vadd.f32 %v60, %v1646
    %v1653 = vadd.f32 %v61, %v1647
    %v1654 = vadd.f32 %v62, %v1648
    %v1655 = vadd.f32 %v63, %v1649
    %v1656 = vadd.f32 %v64, %v1650
    %v1657 = vpack.c.bf16 %v1651, %v1651
    %v1658 = vpack.c.bf16 %v1652, %v1652
    %v1659 = vpack.c.bf16 %v1653, %v1653
    %v1660 = vpack.c.bf16 %v1654, %v1654
    %v1661 = vpack.c.bf16 %v1655, %v1655
    %v1662 = vpack.c.bf16 %v1656, %v1656
    %1663 = vmatprep.subr.bf16.mxu0 %v272
    %1664 = vmatpush1.bf16.xpose.msra.mxu0 %v271
    %1665 = vmatprep.subr.bf16.mxu0 %v278
    %1666 = vmatpush1.bf16.xpose.msra.mxu0 %v277
    %1667 = vmatprep.subr.bf16.mxu0 %v284
    %1668 = vmatpush1.bf16.xpose.msra.mxu0 %v283
    %1669 = vmatprep.subr.bf16.mxu0 %v290
    %1670 = vmatpush1.bf16.xpose.msra.mxu0 %v289
    %1671 = vmatprep.subr.bf16.mxu0 %v296
    %1672 = vmatpush1.bf16.xpose.msra.mxu0 %v295
    %1673 = vmatprep.subr.bf16.mxu0 %v302
    %1674 = vmatpush1.bf16.xpose.msra.mxu0 %v301
    %1675 = vmatprep.subr.bf16.mxu0 %v308
    %1676 = vmatpush1.bf16.xpose.msra.mxu0 %v307
    %1677 = vmatprep.subr.bf16.mxu0 %v314
    %1678 = vmatpush1.bf16.xpose.msra.mxu0 %v313
    %1679 = vmatprep.subr.bf16.mxu0 0
    %1680 = vmatpush1.bf16.xpose.msra.mxu0 0
    %1681 = vmatprep.subr.bf16.mxu0 0
    %1682 = vmatpush1.bf16.xpose.msra.mxu0 0
    %1683 = vmatprep.subr.bf16.mxu0 0
    %1684 = vmatpush1.bf16.xpose.msra.mxu0 0
    %1685 = vmatprep.subr.bf16.mxu0 0
    %1686 = vmatpush1.bf16.xpose.msra.mxu0 0
    %1687 = vmatprep.subr.bf16.mxu0 0
    %1688 = vmatpush1.bf16.xpose.msra.mxu0 0
    %1689 = vmatprep.subr.bf16.mxu0 0
    %1690 = vmatpush1.bf16.xpose.msra.mxu0 0
    %1691 = vmatprep.subr.bf16.mxu0 0
    %1692 = vmatpush1.bf16.xpose.msra.mxu0 0
    %1693 = vmatprep.subr.bf16.mxu0 0
    %1694 = vmatpush1.bf16.xpose.msra.mxu0 0
    %1695 = vmatprep.mubr.bf16.mxu0 %v1658
    %1696 = vmatmul.mubr.bf16.gmra.mrb[0].mxu0 %v1657
    %v1697 = vpop.f32.mrb[0].mxu0
    %v1698 = vadd.f32 %v125, %v1697
    %v1699 = vpop.f32.mrb[0].mxu0
    %v1700 = vpop.f32.mrb[0].mxu0
    %v1701 = vpop.f32.mrb[0].mxu0
    %1702 = vdwg.mxu0
    %1703 = vmatprep.subr.bf16.mxu0 %v274
    %1704 = vmatpush1.bf16.xpose.msra.mxu0 %v273
    %1705 = vmatprep.subr.bf16.mxu0 %v280
    %1706 = vmatpush1.bf16.xpose.msra.mxu0 %v279
    %1707 = vmatprep.subr.bf16.mxu0 %v286
    %1708 = vmatpush1.bf16.xpose.msra.mxu0 %v285
    %1709 = vmatprep.subr.bf16.mxu0 %v292
    %1710 = vmatpush1.bf16.xpose.msra.mxu0 %v291
    %1711 = vmatprep.subr.bf16.mxu0 %v298
    %1712 = vmatpush1.bf16.xpose.msra.mxu0 %v297
    %1713 = vmatprep.subr.bf16.mxu0 %v304
    %1714 = vmatpush1.bf16.xpose.msra.mxu0 %v303
    %1715 = vmatprep.subr.bf16.mxu0 %v310
    %1716 = vmatpush1.bf16.xpose.msra.mxu0 %v309
    %1717 = vmatprep.subr.bf16.mxu0 %v316
    %1718 = vmatpush1.bf16.xpose.msra.mxu0 %v315
    %1719 = vmatprep.subr.bf16.mxu0 0
    %1720 = vmatpush1.bf16.xpose.msra.mxu0 0
    %1721 = vmatprep.subr.bf16.mxu0 0
    %1722 = vmatpush1.bf16.xpose.msra.mxu0 0
    %1723 = vmatprep.subr.bf16.mxu0 0
    %1724 = vmatpush1.bf16.xpose.msra.mxu0 0
    %1725 = vmatprep.subr.bf16.mxu0 0
    %1726 = vmatpush1.bf16.xpose.msra.mxu0 0
    %1727 = vmatprep.subr.bf16.mxu0 0
    %1728 = vmatpush1.bf16.xpose.msra.mxu0 0
    %1729 = vmatprep.subr.bf16.mxu0 0
    %1730 = vmatpush1.bf16.xpose.msra.mxu0 0
    %1731 = vmatprep.subr.bf16.mxu0 0
    %1732 = vmatpush1.bf16.xpose.msra.mxu0 0
    %1733 = vmatprep.subr.bf16.mxu0 0
    %1734 = vmatpush1.bf16.xpose.msra.mxu0 0
    %1735 = vmatprep.mubr.bf16.mxu0 %v1660
    %1736 = vmatmul.mubr.bf16.gmra.mrb[0].mxu0 %v1659
    %v1737 = vpop.f32.mrb[0].mxu0
    %v1738 = vadd.f32 %v1698, %v1737
    %v1739 = vpop.f32.mrb[0].mxu0
    %v1740 = vpop.f32.mrb[0].mxu0
    %v1741 = vpop.f32.mrb[0].mxu0
    %1742 = vdwg.mxu0
    %1743 = vmatprep.subr.bf16.mxu0 %v276
    %1744 = vmatpush1.bf16.xpose.msra.mxu0 %v275
    %1745 = vmatprep.subr.bf16.mxu0 %v282
    %1746 = vmatpush1.bf16.xpose.msra.mxu0 %v281
    %1747 = vmatprep.subr.bf16.mxu0 %v288
    %1748 = vmatpush1.bf16.xpose.msra.mxu0 %v287
    %1749 = vmatprep.subr.bf16.mxu0 %v294
    %1750 = vmatpush1.bf16.xpose.msra.mxu0 %v293
    %1751 = vmatprep.subr.bf16.mxu0 %v300
    %1752 = vmatpush1.bf16.xpose.msra.mxu0 %v299
    %1753 = vmatprep.subr.bf16.mxu0 %v306
    %1754 = vmatpush1.bf16.xpose.msra.mxu0 %v305
    %1755 = vmatprep.subr.bf16.mxu0 %v312
    %1756 = vmatpush1.bf16.xpose.msra.mxu0 %v311
    %1757 = vmatprep.subr.bf16.mxu0 %v318
    %1758 = vmatpush1.bf16.xpose.msra.mxu0 %v317
    %1759 = vmatprep.subr.bf16.mxu0 0
    %1760 = vmatpush1.bf16.xpose.msra.mxu0 0
    %1761 = vmatprep.subr.bf16.mxu0 0
    %1762 = vmatpush1.bf16.xpose.msra.mxu0 0
    %1763 = vmatprep.subr.bf16.mxu0 0
    %1764 = vmatpush1.bf16.xpose.msra.mxu0 0
    %1765 = vmatprep.subr.bf16.mxu0 0
    %1766 = vmatpush1.bf16.xpose.msra.mxu0 0
    %1767 = vmatprep.subr.bf16.mxu0 0
    %1768 = vmatpush1.bf16.xpose.msra.mxu0 0
    %1769 = vmatprep.subr.bf16.mxu0 0
    %1770 = vmatpush1.bf16.xpose.msra.mxu0 0
    %1771 = vmatprep.subr.bf16.mxu0 0
    %1772 = vmatpush1.bf16.xpose.msra.mxu0 0
    %1773 = vmatprep.subr.bf16.mxu0 0
    %1774 = vmatpush1.bf16.xpose.msra.mxu0 0
    %1775 = vmatprep.mubr.bf16.mxu0 %v1662
    %1776 = vmatmul.mubr.bf16.gmra.mrb[0].mxu0 %v1661
    %v1777 = vpop.f32.mrb[0].mxu0
    %v1778 = vadd.f32 %v1738, %v1777
    %v1779 = vpop.f32.mrb[0].mxu0
    %v1780 = vpop.f32.mrb[0].mxu0
    %v1781 = vpop.f32.mrb[0].mxu0
    %1782 = vdwg.mxu0
    %1783 = vmax.xlane.f32.xlu0 %v1778
    %v1784 = vpop.xlane.xlu0 %1783
    %v1785 = vsub.f32 %v1778, %v1784
    %v1786 = vmul.f32 %v1785, 1.442695
    %v1787 = vpow.pop %v1786
    %1788 = vadd.xlane.f32.xlu0 %v1787
    %v1789 = vpop.xlane.xlu0 %1788
    %v1790 = vrcp.pop %v1789
    %v1791 = vmul.f32 %v1787, %v1790
    %v1792 = vsub.f32 %v1791, %v65
    %v1793 = vmul.f32 %v1792, 0.5
    %v1794 = vpack.c.bf16 %v1793, %v1793
    %1795 = vmatprep.subr.bf16.mxu0 %v272
    %1796 = vmatpush1.bf16.msra.mxu0 %v271
    %1797 = vmatprep.subr.bf16.mxu0 %v278
    %1798 = vmatpush1.bf16.msra.mxu0 %v277
    %1799 = vmatprep.subr.bf16.mxu0 %v284
    %1800 = vmatpush1.bf16.msra.mxu0 %v283
    %1801 = vmatprep.subr.bf16.mxu0 %v290
    %1802 = vmatpush1.bf16.msra.mxu0 %v289
    %1803 = vmatprep.subr.bf16.mxu0 %v296
    %1804 = vmatpush1.bf16.msra.mxu0 %v295
    %1805 = vmatprep.subr.bf16.mxu0 %v302
    %1806 = vmatpush1.bf16.msra.mxu0 %v301
    %1807 = vmatprep.subr.bf16.mxu0 %v308
    %1808 = vmatpush1.bf16.msra.mxu0 %v307
    %1809 = vmatprep.subr.bf16.mxu0 %v314
    %1810 = vmatpush1.bf16.msra.mxu0 %v313
    %1811 = vmatprep.subr.bf16.mxu0 0
    %1812 = vmatpush1.bf16.msra.mxu0 0
    %1813 = vmatprep.subr.bf16.mxu0 0
    %1814 = vmatpush1.bf16.msra.mxu0 0
    %1815 = vmatprep.subr.bf16.mxu0 0
    %1816 = vmatpush1.bf16.msra.mxu0 0
    %1817 = vmatprep.subr.bf16.mxu0 0
    %1818 = vmatpush1.bf16.msra.mxu0 0
    %1819 = vmatprep.subr.bf16.mxu0 0
    %1820 = vmatpush1.bf16.msra.mxu0 0
    %1821 = vmatprep.subr.bf16.mxu0 0
    %1822 = vmatpush1.bf16.msra.mxu0 0
    %1823 = vmatprep.subr.bf16.mxu0 0
    %1824 = vmatpush1.bf16.msra.mxu0 0
    %1825 = vmatprep.subr.bf16.mxu0 0
    %1826 = vmatpush1.bf16.msra.mxu0 0
    %1827 = vmatprep.mubr.bf16.mxu0 0
    %1828 = vmatmul.mubr.bf16.gmra.mrb[0].mxu0 %v1794
    %v1829 = vpop.f32.mrb[0].mxu0
    %v1830 = vadd.f32 0.0, %v1829
    %v1831 = vpop.f32.mrb[0].mxu0
    %v1832 = vadd.f32 0.0, %v1831
    %v1833 = vpop.f32.mrb[0].mxu0
    %v1834 = vpop.f32.mrb[0].mxu0
    %1835 = vdwg.mxu0
    %1836 = vmatprep.subr.bf16.mxu0 %v274
    %1837 = vmatpush1.bf16.msra.mxu0 %v273
    %1838 = vmatprep.subr.bf16.mxu0 %v280
    %1839 = vmatpush1.bf16.msra.mxu0 %v279
    %1840 = vmatprep.subr.bf16.mxu0 %v286
    %1841 = vmatpush1.bf16.msra.mxu0 %v285
    %1842 = vmatprep.subr.bf16.mxu0 %v292
    %1843 = vmatpush1.bf16.msra.mxu0 %v291
    %1844 = vmatprep.subr.bf16.mxu0 %v298
    %1845 = vmatpush1.bf16.msra.mxu0 %v297
    %1846 = vmatprep.subr.bf16.mxu0 %v304
    %1847 = vmatpush1.bf16.msra.mxu0 %v303
    %1848 = vmatprep.subr.bf16.mxu0 %v310
    %1849 = vmatpush1.bf16.msra.mxu0 %v309
    %1850 = vmatprep.subr.bf16.mxu0 %v316
    %1851 = vmatpush1.bf16.msra.mxu0 %v315
    %1852 = vmatprep.subr.bf16.mxu0 0
    %1853 = vmatpush1.bf16.msra.mxu0 0
    %1854 = vmatprep.subr.bf16.mxu0 0
    %1855 = vmatpush1.bf16.msra.mxu0 0
    %1856 = vmatprep.subr.bf16.mxu0 0
    %1857 = vmatpush1.bf16.msra.mxu0 0
    %1858 = vmatprep.subr.bf16.mxu0 0
    %1859 = vmatpush1.bf16.msra.mxu0 0
    %1860 = vmatprep.subr.bf16.mxu0 0
    %1861 = vmatpush1.bf16.msra.mxu0 0
    %1862 = vmatprep.subr.bf16.mxu0 0
    %1863 = vmatpush1.bf16.msra.mxu0 0
    %1864 = vmatprep.subr.bf16.mxu0 0
    %1865 = vmatpush1.bf16.msra.mxu0 0
    %1866 = vmatprep.subr.bf16.mxu0 0
    %1867 = vmatpush1.bf16.msra.mxu0 0
    %1868 = vmatprep.mubr.bf16.mxu0 0
    %1869 = vmatmul.mubr.bf16.gmra.mrb[0].mxu0 %v1794
    %v1870 = vpop.f32.mrb[0].mxu0
    %v1871 = vadd.f32 0.0, %v1870
    %v1872 = vpop.f32.mrb[0].mxu0
    %v1873 = vadd.f32 0.0, %v1872
    %v1874 = vpop.f32.mrb[0].mxu0
    %v1875 = vpop.f32.mrb[0].mxu0
    %1876 = vdwg.mxu0
    %1877 = vmatprep.subr.bf16.mxu0 %v276
    %1878 = vmatpush1.bf16.msra.mxu0 %v275
    %1879 = vmatprep.subr.bf16.mxu0 %v282
    %1880 = vmatpush1.bf16.msra.mxu0 %v281
    %1881 = vmatprep.subr.bf16.mxu0 %v288
    %1882 = vmatpush1.bf16.msra.mxu0 %v287
    %1883 = vmatprep.subr.bf16.mxu0 %v294
    %1884 = vmatpush1.bf16.msra.mxu0 %v293
    %1885 = vmatprep.subr.bf16.mxu0 %v300
    %1886 = vmatpush1.bf16.msra.mxu0 %v299
    %1887 = vmatprep.subr.bf16.mxu0 %v306
    %1888 = vmatpush1.bf16.msra.mxu0 %v305
    %1889 = vmatprep.subr.bf16.mxu0 %v312
    %1890 = vmatpush1.bf16.msra.mxu0 %v311
    %1891 = vmatprep.subr.bf16.mxu0 %v318
    %1892 = vmatpush1.bf16.msra.mxu0 %v317
    %1893 = vmatprep.subr.bf16.mxu0 0
    %1894 = vmatpush1.bf16.msra.mxu0 0
    %1895 = vmatprep.subr.bf16.mxu0 0
    %1896 = vmatpush1.bf16.msra.mxu0 0
    %1897 = vmatprep.subr.bf16.mxu0 0
    %1898 = vmatpush1.bf16.msra.mxu0 0
    %1899 = vmatprep.subr.bf16.mxu0 0
    %1900 = vmatpush1.bf16.msra.mxu0 0
    %1901 = vmatprep.subr.bf16.mxu0 0
    %1902 = vmatpush1.bf16.msra.mxu0 0
    %1903 = vmatprep.subr.bf16.mxu0 0
    %1904 = vmatpush1.bf16.msra.mxu0 0
    %1905 = vmatprep.subr.bf16.mxu0 0
    %1906 = vmatpush1.bf16.msra.mxu0 0
    %1907 = vmatprep.subr.bf16.mxu0 0
    %1908 = vmatpush1.bf16.msra.mxu0 0
    %1909 = vmatprep.mubr.bf16.mxu0 0
    %1910 = vmatmul.mubr.bf16.gmra.mrb[0].mxu0 %v1794
    %v1911 = vpop.f32.mrb[0].mxu0
    %v1912 = vadd.f32 0.0, %v1911
    %v1913 = vpop.f32.mrb[0].mxu0
    %v1914 = vadd.f32 0.0, %v1913
    %v1915 = vpop.f32.mrb[0].mxu0
    %v1916 = vpop.f32.mrb[0].mxu0
    %1917 = vdwg.mxu0
    %v1918 = vmul.f32 %v1830, %v1830
    %v1919 = vmul.f32 %v1832, %v1832
    %v1920 = vmul.f32 %v1871, %v1871
    %v1921 = vmul.f32 %v1873, %v1873
    %v1922 = vmul.f32 %v1912, %v1912
    %v1923 = vmul.f32 %v1914, %v1914
    %v1924 = vadd.f32 %v1918, %v1919
    %v1925 = vadd.f32 %v1924, %v1920
    %v1926 = vadd.f32 %v1925, %v1921
    %v1927 = vadd.f32 %v1926, %v1922
    %v1928 = vadd.f32 %v1927, %v1923
    %1929 = vadd.xlane.f32.xlu0 %v1928
    %v1930 = vpop.xlane.xlu0 %1929
    %v1931 = vadd.f32 %v1930, 1e-24
    %v1932 = vrsqrt.pop %v1931
    %v1933 = vmul.f32 %v1932, 0.01
    %v1934 = vmul.f32 %v1933, %v1830
    %v1935 = vmul.f32 %v1933, %v1832
    %v1936 = vmul.f32 %v1933, %v1871
    %v1937 = vmul.f32 %v1933, %v1873
    %v1938 = vmul.f32 %v1933, %v1912
    %v1939 = vmul.f32 %v1933, %v1914
    %v1940 = vsub.f32 %v1651, %v1934
    %v1941 = vsub.f32 %v1652, %v1935
    %v1942 = vsub.f32 %v1653, %v1936
    %v1943 = vsub.f32 %v1654, %v1937
    %v1944 = vsub.f32 %v1655, %v1938
    %v1945 = vsub.f32 %v1656, %v1939
    %v1946 = vsub.f32 %v1940, %v59
    %v1947 = vsub.f32 %v1941, %v60
    %v1948 = vsub.f32 %v1942, %v61
    %v1949 = vsub.f32 %v1943, %v62
    %v1950 = vsub.f32 %v1944, %v63
    %v1951 = vsub.f32 %v1945, %v64
    %v1952 = vmul.f32 %v1946, %v1946
    %v1953 = vmul.f32 %v1947, %v1947
    %v1954 = vmul.f32 %v1948, %v1948
    %v1955 = vmul.f32 %v1949, %v1949
    %v1956 = vmul.f32 %v1950, %v1950
    %v1957 = vmul.f32 %v1951, %v1951
    %v1958 = vadd.f32 %v1952, %v1953
    %v1959 = vadd.f32 %v1958, %v1954
    %v1960 = vadd.f32 %v1959, %v1955
    %v1961 = vadd.f32 %v1960, %v1956
    %v1962 = vadd.f32 %v1961, %v1957
    %1963 = vadd.xlane.f32.xlu0 %v1962
    %v1964 = vpop.xlane.xlu0 %1963
    %v1965 = vadd.f32 %v1964, 1e-24
    %v1966 = vrsqrt.pop %v1965
    %v1967 = vmul.f32 %v1966, 0.5
    %v1968 = vmin.f32 %v1967, 1.0
    %v1969 = vmul.f32 %v1946, %v1968
    %v1970 = vmul.f32 %v1947, %v1968
    %v1971 = vmul.f32 %v1948, %v1968
    %v1972 = vmul.f32 %v1949, %v1968
    %v1973 = vmul.f32 %v1950, %v1968
    %v1974 = vmul.f32 %v1951, %v1968
    %v1975 = vadd.f32 %v59, %v1969
    %v1976 = vadd.f32 %v60, %v1970
    %v1977 = vadd.f32 %v61, %v1971
    %v1978 = vadd.f32 %v62, %v1972
    %v1979 = vadd.f32 %v63, %v1973
    %v1980 = vadd.f32 %v64, %v1974
    %v1981 = vpack.c.bf16 %v1975, %v1975
    %v1982 = vpack.c.bf16 %v1976, %v1976
    %v1983 = vpack.c.bf16 %v1977, %v1977
    %v1984 = vpack.c.bf16 %v1978, %v1978
    %v1985 = vpack.c.bf16 %v1979, %v1979
    %v1986 = vpack.c.bf16 %v1980, %v1980
    %1987 = vmatprep.subr.bf16.mxu0 %v272
    %1988 = vmatpush1.bf16.xpose.msra.mxu0 %v271
    %1989 = vmatprep.subr.bf16.mxu0 %v278
    %1990 = vmatpush1.bf16.xpose.msra.mxu0 %v277
    %1991 = vmatprep.subr.bf16.mxu0 %v284
    %1992 = vmatpush1.bf16.xpose.msra.mxu0 %v283
    %1993 = vmatprep.subr.bf16.mxu0 %v290
    %1994 = vmatpush1.bf16.xpose.msra.mxu0 %v289
    %1995 = vmatprep.subr.bf16.mxu0 %v296
    %1996 = vmatpush1.bf16.xpose.msra.mxu0 %v295
    %1997 = vmatprep.subr.bf16.mxu0 %v302
    %1998 = vmatpush1.bf16.xpose.msra.mxu0 %v301
    %1999 = vmatprep.subr.bf16.mxu0 %v308
    %2000 = vmatpush1.bf16.xpose.msra.mxu0 %v307
    %2001 = vmatprep.subr.bf16.mxu0 %v314
    %2002 = vmatpush1.bf16.xpose.msra.mxu0 %v313
    %2003 = vmatprep.subr.bf16.mxu0 0
    %2004 = vmatpush1.bf16.xpose.msra.mxu0 0
    %2005 = vmatprep.subr.bf16.mxu0 0
    %2006 = vmatpush1.bf16.xpose.msra.mxu0 0
    %2007 = vmatprep.subr.bf16.mxu0 0
    %2008 = vmatpush1.bf16.xpose.msra.mxu0 0
    %2009 = vmatprep.subr.bf16.mxu0 0
    %2010 = vmatpush1.bf16.xpose.msra.mxu0 0
    %2011 = vmatprep.subr.bf16.mxu0 0
    %2012 = vmatpush1.bf16.xpose.msra.mxu0 0
    %2013 = vmatprep.subr.bf16.mxu0 0
    %2014 = vmatpush1.bf16.xpose.msra.mxu0 0
    %2015 = vmatprep.subr.bf16.mxu0 0
    %2016 = vmatpush1.bf16.xpose.msra.mxu0 0
    %2017 = vmatprep.subr.bf16.mxu0 0
    %2018 = vmatpush1.bf16.xpose.msra.mxu0 0
    %2019 = vmatprep.mubr.bf16.mxu0 %v1982
    %2020 = vmatmul.mubr.bf16.gmra.mrb[0].mxu0 %v1981
    %v2021 = vpop.f32.mrb[0].mxu0
    %v2022 = vadd.f32 %v125, %v2021
    %v2023 = vpop.f32.mrb[0].mxu0
    %v2024 = vpop.f32.mrb[0].mxu0
    %v2025 = vpop.f32.mrb[0].mxu0
    %2026 = vdwg.mxu0
    %2027 = vmatprep.subr.bf16.mxu0 %v274
    %2028 = vmatpush1.bf16.xpose.msra.mxu0 %v273
    %2029 = vmatprep.subr.bf16.mxu0 %v280
    %2030 = vmatpush1.bf16.xpose.msra.mxu0 %v279
    %2031 = vmatprep.subr.bf16.mxu0 %v286
    %2032 = vmatpush1.bf16.xpose.msra.mxu0 %v285
    %2033 = vmatprep.subr.bf16.mxu0 %v292
    %2034 = vmatpush1.bf16.xpose.msra.mxu0 %v291
    %2035 = vmatprep.subr.bf16.mxu0 %v298
    %2036 = vmatpush1.bf16.xpose.msra.mxu0 %v297
    %2037 = vmatprep.subr.bf16.mxu0 %v304
    %2038 = vmatpush1.bf16.xpose.msra.mxu0 %v303
    %2039 = vmatprep.subr.bf16.mxu0 %v310
    %2040 = vmatpush1.bf16.xpose.msra.mxu0 %v309
    %2041 = vmatprep.subr.bf16.mxu0 %v316
    %2042 = vmatpush1.bf16.xpose.msra.mxu0 %v315
    %2043 = vmatprep.subr.bf16.mxu0 0
    %2044 = vmatpush1.bf16.xpose.msra.mxu0 0
    %2045 = vmatprep.subr.bf16.mxu0 0
    %2046 = vmatpush1.bf16.xpose.msra.mxu0 0
    %2047 = vmatprep.subr.bf16.mxu0 0
    %2048 = vmatpush1.bf16.xpose.msra.mxu0 0
    %2049 = vmatprep.subr.bf16.mxu0 0
    %2050 = vmatpush1.bf16.xpose.msra.mxu0 0
    %2051 = vmatprep.subr.bf16.mxu0 0
    %2052 = vmatpush1.bf16.xpose.msra.mxu0 0
    %2053 = vmatprep.subr.bf16.mxu0 0
    %2054 = vmatpush1.bf16.xpose.msra.mxu0 0
    %2055 = vmatprep.subr.bf16.mxu0 0
    %2056 = vmatpush1.bf16.xpose.msra.mxu0 0
    %2057 = vmatprep.subr.bf16.mxu0 0
    %2058 = vmatpush1.bf16.xpose.msra.mxu0 0
    %2059 = vmatprep.mubr.bf16.mxu0 %v1984
    %2060 = vmatmul.mubr.bf16.gmra.mrb[0].mxu0 %v1983
    %v2061 = vpop.f32.mrb[0].mxu0
    %v2062 = vadd.f32 %v2022, %v2061
    %v2063 = vpop.f32.mrb[0].mxu0
    %v2064 = vpop.f32.mrb[0].mxu0
    %v2065 = vpop.f32.mrb[0].mxu0
    %2066 = vdwg.mxu0
    %2067 = vmatprep.subr.bf16.mxu0 %v276
    %2068 = vmatpush1.bf16.xpose.msra.mxu0 %v275
    %2069 = vmatprep.subr.bf16.mxu0 %v282
    %2070 = vmatpush1.bf16.xpose.msra.mxu0 %v281
    %2071 = vmatprep.subr.bf16.mxu0 %v288
    %2072 = vmatpush1.bf16.xpose.msra.mxu0 %v287
    %2073 = vmatprep.subr.bf16.mxu0 %v294
    %2074 = vmatpush1.bf16.xpose.msra.mxu0 %v293
    %2075 = vmatprep.subr.bf16.mxu0 %v300
    %2076 = vmatpush1.bf16.xpose.msra.mxu0 %v299
    %2077 = vmatprep.subr.bf16.mxu0 %v306
    %2078 = vmatpush1.bf16.xpose.msra.mxu0 %v305
    %2079 = vmatprep.subr.bf16.mxu0 %v312
    %2080 = vmatpush1.bf16.xpose.msra.mxu0 %v311
    %2081 = vmatprep.subr.bf16.mxu0 %v318
    %2082 = vmatpush1.bf16.xpose.msra.mxu0 %v317
    %2083 = vmatprep.subr.bf16.mxu0 0
    %2084 = vmatpush1.bf16.xpose.msra.mxu0 0
    %2085 = vmatprep.subr.bf16.mxu0 0
    %2086 = vmatpush1.bf16.xpose.msra.mxu0 0
    %2087 = vmatprep.subr.bf16.mxu0 0
    %2088 = vmatpush1.bf16.xpose.msra.mxu0 0
    %2089 = vmatprep.subr.bf16.mxu0 0
    %2090 = vmatpush1.bf16.xpose.msra.mxu0 0
    %2091 = vmatprep.subr.bf16.mxu0 0
    %2092 = vmatpush1.bf16.xpose.msra.mxu0 0
    %2093 = vmatprep.subr.bf16.mxu0 0
    %2094 = vmatpush1.bf16.xpose.msra.mxu0 0
    %2095 = vmatprep.subr.bf16.mxu0 0
    %2096 = vmatpush1.bf16.xpose.msra.mxu0 0
    %2097 = vmatprep.subr.bf16.mxu0 0
    %2098 = vmatpush1.bf16.xpose.msra.mxu0 0
    %2099 = vmatprep.mubr.bf16.mxu0 %v1986
    %2100 = vmatmul.mubr.bf16.gmra.mrb[0].mxu0 %v1985
    %v2101 = vpop.f32.mrb[0].mxu0
    %v2102 = vadd.f32 %v2062, %v2101
    %v2103 = vpop.f32.mrb[0].mxu0
    %v2104 = vpop.f32.mrb[0].mxu0
    %v2105 = vpop.f32.mrb[0].mxu0
    %2106 = vdwg.mxu0
    %2107 = vmax.xlane.f32.xlu0 %v2102
    %v2108 = vpop.xlane.xlu0 %2107
    %v2109 = vsub.f32 %v2102, %v2108
    %v2110 = vmul.f32 %v2109, 1.442695
    %v2111 = vpow.pop %v2110
    %2112 = vadd.xlane.f32.xlu0 %v2111
    %v2113 = vpop.xlane.xlu0 %2112
    %v2114 = vrcp.pop %v2113
    %v2115 = vmul.f32 %v2111, %v2114
    %v2116 = vsub.f32 %v2115, %v65
    %v2117 = vmul.f32 %v2116, 0.5
    %v2118 = vpack.c.bf16 %v2117, %v2117
    %2119 = vmatprep.subr.bf16.mxu0 %v272
    %2120 = vmatpush1.bf16.msra.mxu0 %v271
    %2121 = vmatprep.subr.bf16.mxu0 %v278
    %2122 = vmatpush1.bf16.msra.mxu0 %v277
    %2123 = vmatprep.subr.bf16.mxu0 %v284
    %2124 = vmatpush1.bf16.msra.mxu0 %v283
    %2125 = vmatprep.subr.bf16.mxu0 %v290
    %2126 = vmatpush1.bf16.msra.mxu0 %v289
    %2127 = vmatprep.subr.bf16.mxu0 %v296
    %2128 = vmatpush1.bf16.msra.mxu0 %v295
    %2129 = vmatprep.subr.bf16.mxu0 %v302
    %2130 = vmatpush1.bf16.msra.mxu0 %v301
    %2131 = vmatprep.subr.bf16.mxu0 %v308
    %2132 = vmatpush1.bf16.msra.mxu0 %v307
    %2133 = vmatprep.subr.bf16.mxu0 %v314
    %2134 = vmatpush1.bf16.msra.mxu0 %v313
    %2135 = vmatprep.subr.bf16.mxu0 0
    %2136 = vmatpush1.bf16.msra.mxu0 0
    %2137 = vmatprep.subr.bf16.mxu0 0
    %2138 = vmatpush1.bf16.msra.mxu0 0
    %2139 = vmatprep.subr.bf16.mxu0 0
    %2140 = vmatpush1.bf16.msra.mxu0 0
    %2141 = vmatprep.subr.bf16.mxu0 0
    %2142 = vmatpush1.bf16.msra.mxu0 0
    %2143 = vmatprep.subr.bf16.mxu0 0
    %2144 = vmatpush1.bf16.msra.mxu0 0
    %2145 = vmatprep.subr.bf16.mxu0 0
    %2146 = vmatpush1.bf16.msra.mxu0 0
    %2147 = vmatprep.subr.bf16.mxu0 0
    %2148 = vmatpush1.bf16.msra.mxu0 0
    %2149 = vmatprep.subr.bf16.mxu0 0
    %2150 = vmatpush1.bf16.msra.mxu0 0
    %2151 = vmatprep.mubr.bf16.mxu0 0
    %2152 = vmatmul.mubr.bf16.gmra.mrb[0].mxu0 %v2118
    %v2153 = vpop.f32.mrb[0].mxu0
    %v2154 = vadd.f32 0.0, %v2153
    %v2155 = vpop.f32.mrb[0].mxu0
    %v2156 = vadd.f32 0.0, %v2155
    %v2157 = vpop.f32.mrb[0].mxu0
    %v2158 = vpop.f32.mrb[0].mxu0
    %2159 = vdwg.mxu0
    %2160 = vmatprep.subr.bf16.mxu0 %v274
    %2161 = vmatpush1.bf16.msra.mxu0 %v273
    %2162 = vmatprep.subr.bf16.mxu0 %v280
    %2163 = vmatpush1.bf16.msra.mxu0 %v279
    %2164 = vmatprep.subr.bf16.mxu0 %v286
    %2165 = vmatpush1.bf16.msra.mxu0 %v285
    %2166 = vmatprep.subr.bf16.mxu0 %v292
    %2167 = vmatpush1.bf16.msra.mxu0 %v291
    %2168 = vmatprep.subr.bf16.mxu0 %v298
    %2169 = vmatpush1.bf16.msra.mxu0 %v297
    %2170 = vmatprep.subr.bf16.mxu0 %v304
    %2171 = vmatpush1.bf16.msra.mxu0 %v303
    %2172 = vmatprep.subr.bf16.mxu0 %v310
    %2173 = vmatpush1.bf16.msra.mxu0 %v309
    %2174 = vmatprep.subr.bf16.mxu0 %v316
    %2175 = vmatpush1.bf16.msra.mxu0 %v315
    %2176 = vmatprep.subr.bf16.mxu0 0
    %2177 = vmatpush1.bf16.msra.mxu0 0
    %2178 = vmatprep.subr.bf16.mxu0 0
    %2179 = vmatpush1.bf16.msra.mxu0 0
    %2180 = vmatprep.subr.bf16.mxu0 0
    %2181 = vmatpush1.bf16.msra.mxu0 0
    %2182 = vmatprep.subr.bf16.mxu0 0
    %2183 = vmatpush1.bf16.msra.mxu0 0
    %2184 = vmatprep.subr.bf16.mxu0 0
    %2185 = vmatpush1.bf16.msra.mxu0 0
    %2186 = vmatprep.subr.bf16.mxu0 0
    %2187 = vmatpush1.bf16.msra.mxu0 0
    %2188 = vmatprep.subr.bf16.mxu0 0
    %2189 = vmatpush1.bf16.msra.mxu0 0
    %2190 = vmatprep.subr.bf16.mxu0 0
    %2191 = vmatpush1.bf16.msra.mxu0 0
    %2192 = vmatprep.mubr.bf16.mxu0 0
    %2193 = vmatmul.mubr.bf16.gmra.mrb[0].mxu0 %v2118
    %v2194 = vpop.f32.mrb[0].mxu0
    %v2195 = vadd.f32 0.0, %v2194
    %v2196 = vpop.f32.mrb[0].mxu0
    %v2197 = vadd.f32 0.0, %v2196
    %v2198 = vpop.f32.mrb[0].mxu0
    %v2199 = vpop.f32.mrb[0].mxu0
    %2200 = vdwg.mxu0
    %2201 = vmatprep.subr.bf16.mxu0 %v276
    %2202 = vmatpush1.bf16.msra.mxu0 %v275
    %2203 = vmatprep.subr.bf16.mxu0 %v282
    %2204 = vmatpush1.bf16.msra.mxu0 %v281
    %2205 = vmatprep.subr.bf16.mxu0 %v288
    %2206 = vmatpush1.bf16.msra.mxu0 %v287
    %2207 = vmatprep.subr.bf16.mxu0 %v294
    %2208 = vmatpush1.bf16.msra.mxu0 %v293
    %2209 = vmatprep.subr.bf16.mxu0 %v300
    %2210 = vmatpush1.bf16.msra.mxu0 %v299
    %2211 = vmatprep.subr.bf16.mxu0 %v306
    %2212 = vmatpush1.bf16.msra.mxu0 %v305
    %2213 = vmatprep.subr.bf16.mxu0 %v312
    %2214 = vmatpush1.bf16.msra.mxu0 %v311
    %2215 = vmatprep.subr.bf16.mxu0 %v318
    %2216 = vmatpush1.bf16.msra.mxu0 %v317
    %2217 = vmatprep.subr.bf16.mxu0 0
    %2218 = vmatpush1.bf16.msra.mxu0 0
    %2219 = vmatprep.subr.bf16.mxu0 0
    %2220 = vmatpush1.bf16.msra.mxu0 0
    %2221 = vmatprep.subr.bf16.mxu0 0
    %2222 = vmatpush1.bf16.msra.mxu0 0
    %2223 = vmatprep.subr.bf16.mxu0 0
    %2224 = vmatpush1.bf16.msra.mxu0 0
    %2225 = vmatprep.subr.bf16.mxu0 0
    %2226 = vmatpush1.bf16.msra.mxu0 0
    %2227 = vmatprep.subr.bf16.mxu0 0
    %2228 = vmatpush1.bf16.msra.mxu0 0
    %2229 = vmatprep.subr.bf16.mxu0 0
    %2230 = vmatpush1.bf16.msra.mxu0 0
    %2231 = vmatprep.subr.bf16.mxu0 0
    %2232 = vmatpush1.bf16.msra.mxu0 0
    %2233 = vmatprep.mubr.bf16.mxu0 0
    %2234 = vmatmul.mubr.bf16.gmra.mrb[0].mxu0 %v2118
    %v2235 = vpop.f32.mrb[0].mxu0
    %v2236 = vadd.f32 0.0, %v2235
    %v2237 = vpop.f32.mrb[0].mxu0
    %v2238 = vadd.f32 0.0, %v2237
    %v2239 = vpop.f32.mrb[0].mxu0
    %v2240 = vpop.f32.mrb[0].mxu0
    %2241 = vdwg.mxu0
    %v2242 = vmul.f32 %v2154, %v2154
    %v2243 = vmul.f32 %v2156, %v2156
    %v2244 = vmul.f32 %v2195, %v2195
    %v2245 = vmul.f32 %v2197, %v2197
    %v2246 = vmul.f32 %v2236, %v2236
    %v2247 = vmul.f32 %v2238, %v2238
    %v2248 = vadd.f32 %v2242, %v2243
    %v2249 = vadd.f32 %v2248, %v2244
    %v2250 = vadd.f32 %v2249, %v2245
    %v2251 = vadd.f32 %v2250, %v2246
    %v2252 = vadd.f32 %v2251, %v2247
    %2253 = vadd.xlane.f32.xlu0 %v2252
    %v2254 = vpop.xlane.xlu0 %2253
    %v2255 = vadd.f32 %v2254, 1e-24
    %v2256 = vrsqrt.pop %v2255
    %v2257 = vmul.f32 %v2256, 0.01
    %v2258 = vmul.f32 %v2257, %v2154
    %v2259 = vmul.f32 %v2257, %v2156
    %v2260 = vmul.f32 %v2257, %v2195
    %v2261 = vmul.f32 %v2257, %v2197
    %v2262 = vmul.f32 %v2257, %v2236
    %v2263 = vmul.f32 %v2257, %v2238
    %v2264 = vsub.f32 %v1975, %v2258
    %v2265 = vsub.f32 %v1976, %v2259
    %v2266 = vsub.f32 %v1977, %v2260
    %v2267 = vsub.f32 %v1978, %v2261
    %v2268 = vsub.f32 %v1979, %v2262
    %v2269 = vsub.f32 %v1980, %v2263
    %v2270 = vsub.f32 %v2264, %v59
    %v2271 = vsub.f32 %v2265, %v60
    %v2272 = vsub.f32 %v2266, %v61
    %v2273 = vsub.f32 %v2267, %v62
    %v2274 = vsub.f32 %v2268, %v63
    %v2275 = vsub.f32 %v2269, %v64
    %v2276 = vmul.f32 %v2270, %v2270
    %v2277 = vmul.f32 %v2271, %v2271
    %v2278 = vmul.f32 %v2272, %v2272
    %v2279 = vmul.f32 %v2273, %v2273
    %v2280 = vmul.f32 %v2274, %v2274
    %v2281 = vmul.f32 %v2275, %v2275
    %v2282 = vadd.f32 %v2276, %v2277
    %v2283 = vadd.f32 %v2282, %v2278
    %v2284 = vadd.f32 %v2283, %v2279
    %v2285 = vadd.f32 %v2284, %v2280
    %v2286 = vadd.f32 %v2285, %v2281
    %2287 = vadd.xlane.f32.xlu0 %v2286
    %v2288 = vpop.xlane.xlu0 %2287
    %v2289 = vadd.f32 %v2288, 1e-24
    %v2290 = vrsqrt.pop %v2289
    %v2291 = vmul.f32 %v2290, 0.5
    %v2292 = vmin.f32 %v2291, 1.0
    %v2293 = vmul.f32 %v2270, %v2292
    %v2294 = vmul.f32 %v2271, %v2292
    %v2295 = vmul.f32 %v2272, %v2292
    %v2296 = vmul.f32 %v2273, %v2292
    %v2297 = vmul.f32 %v2274, %v2292
    %v2298 = vmul.f32 %v2275, %v2292
    %v2299 = vadd.f32 %v59, %v2293
    %v2300 = vadd.f32 %v60, %v2294
    %v2301 = vadd.f32 %v61, %v2295
    %v2302 = vadd.f32 %v62, %v2296
    %v2303 = vadd.f32 %v63, %v2297
    %v2304 = vadd.f32 %v64, %v2298
    %v2305 = vpack.c.bf16 %v2299, %v2299
    %v2306 = vpack.c.bf16 %v2300, %v2300
    %v2307 = vpack.c.bf16 %v2301, %v2301
    %v2308 = vpack.c.bf16 %v2302, %v2302
    %v2309 = vpack.c.bf16 %v2303, %v2303
    %v2310 = vpack.c.bf16 %v2304, %v2304
    %2311 = vmatprep.subr.bf16.mxu0 %v272
    %2312 = vmatpush1.bf16.xpose.msra.mxu0 %v271
    %2313 = vmatprep.subr.bf16.mxu0 %v278
    %2314 = vmatpush1.bf16.xpose.msra.mxu0 %v277
    %2315 = vmatprep.subr.bf16.mxu0 %v284
    %2316 = vmatpush1.bf16.xpose.msra.mxu0 %v283
    %2317 = vmatprep.subr.bf16.mxu0 %v290
    %2318 = vmatpush1.bf16.xpose.msra.mxu0 %v289
    %2319 = vmatprep.subr.bf16.mxu0 %v296
    %2320 = vmatpush1.bf16.xpose.msra.mxu0 %v295
    %2321 = vmatprep.subr.bf16.mxu0 %v302
    %2322 = vmatpush1.bf16.xpose.msra.mxu0 %v301
    %2323 = vmatprep.subr.bf16.mxu0 %v308
    %2324 = vmatpush1.bf16.xpose.msra.mxu0 %v307
    %2325 = vmatprep.subr.bf16.mxu0 %v314
    %2326 = vmatpush1.bf16.xpose.msra.mxu0 %v313
    %2327 = vmatprep.subr.bf16.mxu0 0
    %2328 = vmatpush1.bf16.xpose.msra.mxu0 0
    %2329 = vmatprep.subr.bf16.mxu0 0
    %2330 = vmatpush1.bf16.xpose.msra.mxu0 0
    %2331 = vmatprep.subr.bf16.mxu0 0
    %2332 = vmatpush1.bf16.xpose.msra.mxu0 0
    %2333 = vmatprep.subr.bf16.mxu0 0
    %2334 = vmatpush1.bf16.xpose.msra.mxu0 0
    %2335 = vmatprep.subr.bf16.mxu0 0
    %2336 = vmatpush1.bf16.xpose.msra.mxu0 0
    %2337 = vmatprep.subr.bf16.mxu0 0
    %2338 = vmatpush1.bf16.xpose.msra.mxu0 0
    %2339 = vmatprep.subr.bf16.mxu0 0
    %2340 = vmatpush1.bf16.xpose.msra.mxu0 0
    %2341 = vmatprep.subr.bf16.mxu0 0
    %2342 = vmatpush1.bf16.xpose.msra.mxu0 0
    %2343 = vmatprep.mubr.bf16.mxu0 %v2306
    %2344 = vmatmul.mubr.bf16.gmra.mrb[0].mxu0 %v2305
    %v2345 = vpop.f32.mrb[0].mxu0
    %v2346 = vadd.f32 %v125, %v2345
    %v2347 = vpop.f32.mrb[0].mxu0
    %v2348 = vpop.f32.mrb[0].mxu0
    %v2349 = vpop.f32.mrb[0].mxu0
    %2350 = vdwg.mxu0
    %2351 = vmatprep.subr.bf16.mxu0 %v274
    %2352 = vmatpush1.bf16.xpose.msra.mxu0 %v273
    %2353 = vmatprep.subr.bf16.mxu0 %v280
    %2354 = vmatpush1.bf16.xpose.msra.mxu0 %v279
    %2355 = vmatprep.subr.bf16.mxu0 %v286
    %2356 = vmatpush1.bf16.xpose.msra.mxu0 %v285
    %2357 = vmatprep.subr.bf16.mxu0 %v292
    %2358 = vmatpush1.bf16.xpose.msra.mxu0 %v291
    %2359 = vmatprep.subr.bf16.mxu0 %v298
    %2360 = vmatpush1.bf16.xpose.msra.mxu0 %v297
    %2361 = vmatprep.subr.bf16.mxu0 %v304
    %2362 = vmatpush1.bf16.xpose.msra.mxu0 %v303
    %2363 = vmatprep.subr.bf16.mxu0 %v310
    %2364 = vmatpush1.bf16.xpose.msra.mxu0 %v309
    %2365 = vmatprep.subr.bf16.mxu0 %v316
    %2366 = vmatpush1.bf16.xpose.msra.mxu0 %v315
    %2367 = vmatprep.subr.bf16.mxu0 0
    %2368 = vmatpush1.bf16.xpose.msra.mxu0 0
    %2369 = vmatprep.subr.bf16.mxu0 0
    %2370 = vmatpush1.bf16.xpose.msra.mxu0 0
    %2371 = vmatprep.subr.bf16.mxu0 0
    %2372 = vmatpush1.bf16.xpose.msra.mxu0 0
    %2373 = vmatprep.subr.bf16.mxu0 0
    %2374 = vmatpush1.bf16.xpose.msra.mxu0 0
    %2375 = vmatprep.subr.bf16.mxu0 0
    %2376 = vmatpush1.bf16.xpose.msra.mxu0 0
    %2377 = vmatprep.subr.bf16.mxu0 0
    %2378 = vmatpush1.bf16.xpose.msra.mxu0 0
    %2379 = vmatprep.subr.bf16.mxu0 0
    %2380 = vmatpush1.bf16.xpose.msra.mxu0 0
    %2381 = vmatprep.subr.bf16.mxu0 0
    %2382 = vmatpush1.bf16.xpose.msra.mxu0 0
    %2383 = vmatprep.mubr.bf16.mxu0 %v2308
    %2384 = vmatmul.mubr.bf16.gmra.mrb[0].mxu0 %v2307
    %v2385 = vpop.f32.mrb[0].mxu0
    %v2386 = vadd.f32 %v2346, %v2385
    %v2387 = vpop.f32.mrb[0].mxu0
    %v2388 = vpop.f32.mrb[0].mxu0
    %v2389 = vpop.f32.mrb[0].mxu0
    %2390 = vdwg.mxu0
    %2391 = vmatprep.subr.bf16.mxu0 %v276
    %2392 = vmatpush1.bf16.xpose.msra.mxu0 %v275
    %2393 = vmatprep.subr.bf16.mxu0 %v282
    %2394 = vmatpush1.bf16.xpose.msra.mxu0 %v281
    %2395 = vmatprep.subr.bf16.mxu0 %v288
    %2396 = vmatpush1.bf16.xpose.msra.mxu0 %v287
    %2397 = vmatprep.subr.bf16.mxu0 %v294
    %2398 = vmatpush1.bf16.xpose.msra.mxu0 %v293
    %2399 = vmatprep.subr.bf16.mxu0 %v300
    %2400 = vmatpush1.bf16.xpose.msra.mxu0 %v299
    %2401 = vmatprep.subr.bf16.mxu0 %v306
    %2402 = vmatpush1.bf16.xpose.msra.mxu0 %v305
    %2403 = vmatprep.subr.bf16.mxu0 %v312
    %2404 = vmatpush1.bf16.xpose.msra.mxu0 %v311
    %2405 = vmatprep.subr.bf16.mxu0 %v318
    %2406 = vmatpush1.bf16.xpose.msra.mxu0 %v317
    %2407 = vmatprep.subr.bf16.mxu0 0
    %2408 = vmatpush1.bf16.xpose.msra.mxu0 0
    %2409 = vmatprep.subr.bf16.mxu0 0
    %2410 = vmatpush1.bf16.xpose.msra.mxu0 0
    %2411 = vmatprep.subr.bf16.mxu0 0
    %2412 = vmatpush1.bf16.xpose.msra.mxu0 0
    %2413 = vmatprep.subr.bf16.mxu0 0
    %2414 = vmatpush1.bf16.xpose.msra.mxu0 0
    %2415 = vmatprep.subr.bf16.mxu0 0
    %2416 = vmatpush1.bf16.xpose.msra.mxu0 0
    %2417 = vmatprep.subr.bf16.mxu0 0
    %2418 = vmatpush1.bf16.xpose.msra.mxu0 0
    %2419 = vmatprep.subr.bf16.mxu0 0
    %2420 = vmatpush1.bf16.xpose.msra.mxu0 0
    %2421 = vmatprep.subr.bf16.mxu0 0
    %2422 = vmatpush1.bf16.xpose.msra.mxu0 0
    %2423 = vmatprep.mubr.bf16.mxu0 %v2310
    %2424 = vmatmul.mubr.bf16.gmra.mrb[0].mxu0 %v2309
    %v2425 = vpop.f32.mrb[0].mxu0
    %v2426 = vadd.f32 %v2386, %v2425
    %v2427 = vpop.f32.mrb[0].mxu0
    %v2428 = vpop.f32.mrb[0].mxu0
    %v2429 = vpop.f32.mrb[0].mxu0
    %2430 = vdwg.mxu0
    %2431 = vmax.xlane.f32.xlu0 %v2426
    %v2432 = vpop.xlane.xlu0 %2431
    %v2433 = vsub.f32 %v2426, %v2432
    %v2434 = vmul.f32 %v2433, 1.442695
    %v2435 = vpow.pop %v2434
    %2436 = vadd.xlane.f32.xlu0 %v2435
    %v2437 = vpop.xlane.xlu0 %2436
    %v2438 = vrcp.pop %v2437
    %v2439 = vmul.f32 %v2435, %v2438
    %v2440 = vsub.f32 %v2439, %v65
    %v2441 = vmul.f32 %v2440, 0.5
    %v2442 = vpack.c.bf16 %v2441, %v2441
    %2443 = vmatprep.subr.bf16.mxu0 %v272
    %2444 = vmatpush1.bf16.msra.mxu0 %v271
    %2445 = vmatprep.subr.bf16.mxu0 %v278
    %2446 = vmatpush1.bf16.msra.mxu0 %v277
    %2447 = vmatprep.subr.bf16.mxu0 %v284
    %2448 = vmatpush1.bf16.msra.mxu0 %v283
    %2449 = vmatprep.subr.bf16.mxu0 %v290
    %2450 = vmatpush1.bf16.msra.mxu0 %v289
    %2451 = vmatprep.subr.bf16.mxu0 %v296
    %2452 = vmatpush1.bf16.msra.mxu0 %v295
    %2453 = vmatprep.subr.bf16.mxu0 %v302
    %2454 = vmatpush1.bf16.msra.mxu0 %v301
    %2455 = vmatprep.subr.bf16.mxu0 %v308
    %2456 = vmatpush1.bf16.msra.mxu0 %v307
    %2457 = vmatprep.subr.bf16.mxu0 %v314
    %2458 = vmatpush1.bf16.msra.mxu0 %v313
    %2459 = vmatprep.subr.bf16.mxu0 0
    %2460 = vmatpush1.bf16.msra.mxu0 0
    %2461 = vmatprep.subr.bf16.mxu0 0
    %2462 = vmatpush1.bf16.msra.mxu0 0
    %2463 = vmatprep.subr.bf16.mxu0 0
    %2464 = vmatpush1.bf16.msra.mxu0 0
    %2465 = vmatprep.subr.bf16.mxu0 0
    %2466 = vmatpush1.bf16.msra.mxu0 0
    %2467 = vmatprep.subr.bf16.mxu0 0
    %2468 = vmatpush1.bf16.msra.mxu0 0
    %2469 = vmatprep.subr.bf16.mxu0 0
    %2470 = vmatpush1.bf16.msra.mxu0 0
    %2471 = vmatprep.subr.bf16.mxu0 0
    %2472 = vmatpush1.bf16.msra.mxu0 0
    %2473 = vmatprep.subr.bf16.mxu0 0
    %2474 = vmatpush1.bf16.msra.mxu0 0
    %2475 = vmatprep.mubr.bf16.mxu0 0
    %2476 = vmatmul.mubr.bf16.gmra.mrb[0].mxu0 %v2442
    %v2477 = vpop.f32.mrb[0].mxu0
    %v2478 = vadd.f32 0.0, %v2477
    %v2479 = vpop.f32.mrb[0].mxu0
    %v2480 = vadd.f32 0.0, %v2479
    %v2481 = vpop.f32.mrb[0].mxu0
    %v2482 = vpop.f32.mrb[0].mxu0
    %2483 = vdwg.mxu0
    %2484 = vmatprep.subr.bf16.mxu0 %v274
    %2485 = vmatpush1.bf16.msra.mxu0 %v273
    %2486 = vmatprep.subr.bf16.mxu0 %v280
    %2487 = vmatpush1.bf16.msra.mxu0 %v279
    %2488 = vmatprep.subr.bf16.mxu0 %v286
    %2489 = vmatpush1.bf16.msra.mxu0 %v285
    %2490 = vmatprep.subr.bf16.mxu0 %v292
    %2491 = vmatpush1.bf16.msra.mxu0 %v291
    %2492 = vmatprep.subr.bf16.mxu0 %v298
    %2493 = vmatpush1.bf16.msra.mxu0 %v297
    %2494 = vmatprep.subr.bf16.mxu0 %v304
    %2495 = vmatpush1.bf16.msra.mxu0 %v303
    %2496 = vmatprep.subr.bf16.mxu0 %v310
    %2497 = vmatpush1.bf16.msra.mxu0 %v309
    %2498 = vmatprep.subr.bf16.mxu0 %v316
    %2499 = vmatpush1.bf16.msra.mxu0 %v315
    %2500 = vmatprep.subr.bf16.mxu0 0
    %2501 = vmatpush1.bf16.msra.mxu0 0
    %2502 = vmatprep.subr.bf16.mxu0 0
    %2503 = vmatpush1.bf16.msra.mxu0 0
    %2504 = vmatprep.subr.bf16.mxu0 0
    %2505 = vmatpush1.bf16.msra.mxu0 0
    %2506 = vmatprep.subr.bf16.mxu0 0
    %2507 = vmatpush1.bf16.msra.mxu0 0
    %2508 = vmatprep.subr.bf16.mxu0 0
    %2509 = vmatpush1.bf16.msra.mxu0 0
    %2510 = vmatprep.subr.bf16.mxu0 0
    %2511 = vmatpush1.bf16.msra.mxu0 0
    %2512 = vmatprep.subr.bf16.mxu0 0
    %2513 = vmatpush1.bf16.msra.mxu0 0
    %2514 = vmatprep.subr.bf16.mxu0 0
    %2515 = vmatpush1.bf16.msra.mxu0 0
    %2516 = vmatprep.mubr.bf16.mxu0 0
    %2517 = vmatmul.mubr.bf16.gmra.mrb[0].mxu0 %v2442
    %v2518 = vpop.f32.mrb[0].mxu0
    %v2519 = vadd.f32 0.0, %v2518
    %v2520 = vpop.f32.mrb[0].mxu0
    %v2521 = vadd.f32 0.0, %v2520
    %v2522 = vpop.f32.mrb[0].mxu0
    %v2523 = vpop.f32.mrb[0].mxu0
    %2524 = vdwg.mxu0
    %2525 = vmatprep.subr.bf16.mxu0 %v276
    %2526 = vmatpush1.bf16.msra.mxu0 %v275
    %2527 = vmatprep.subr.bf16.mxu0 %v282
    %2528 = vmatpush1.bf16.msra.mxu0 %v281
    %2529 = vmatprep.subr.bf16.mxu0 %v288
    %2530 = vmatpush1.bf16.msra.mxu0 %v287
    %2531 = vmatprep.subr.bf16.mxu0 %v294
    %2532 = vmatpush1.bf16.msra.mxu0 %v293
    %2533 = vmatprep.subr.bf16.mxu0 %v300
    %2534 = vmatpush1.bf16.msra.mxu0 %v299
    %2535 = vmatprep.subr.bf16.mxu0 %v306
    %2536 = vmatpush1.bf16.msra.mxu0 %v305
    %2537 = vmatprep.subr.bf16.mxu0 %v312
    %2538 = vmatpush1.bf16.msra.mxu0 %v311
    %2539 = vmatprep.subr.bf16.mxu0 %v318
    %2540 = vmatpush1.bf16.msra.mxu0 %v317
    %2541 = vmatprep.subr.bf16.mxu0 0
    %2542 = vmatpush1.bf16.msra.mxu0 0
    %2543 = vmatprep.subr.bf16.mxu0 0
    %2544 = vmatpush1.bf16.msra.mxu0 0
    %2545 = vmatprep.subr.bf16.mxu0 0
    %2546 = vmatpush1.bf16.msra.mxu0 0
    %2547 = vmatprep.subr.bf16.mxu0 0
    %2548 = vmatpush1.bf16.msra.mxu0 0
    %2549 = vmatprep.subr.bf16.mxu0 0
    %2550 = vmatpush1.bf16.msra.mxu0 0
    %2551 = vmatprep.subr.bf16.mxu0 0
    %2552 = vmatpush1.bf16.msra.mxu0 0
    %2553 = vmatprep.subr.bf16.mxu0 0
    %2554 = vmatpush1.bf16.msra.mxu0 0
    %2555 = vmatprep.subr.bf16.mxu0 0
    %2556 = vmatpush1.bf16.msra.mxu0 0
    %2557 = vmatprep.mubr.bf16.mxu0 0
    %2558 = vmatmul.mubr.bf16.gmra.mrb[0].mxu0 %v2442
    %v2559 = vpop.f32.mrb[0].mxu0
    %v2560 = vadd.f32 0.0, %v2559
    %v2561 = vpop.f32.mrb[0].mxu0
    %v2562 = vadd.f32 0.0, %v2561
    %v2563 = vpop.f32.mrb[0].mxu0
    %v2564 = vpop.f32.mrb[0].mxu0
    %2565 = vdwg.mxu0
    %v2566 = vmul.f32 %v2478, %v2478
    %v2567 = vmul.f32 %v2480, %v2480
    %v2568 = vmul.f32 %v2519, %v2519
    %v2569 = vmul.f32 %v2521, %v2521
    %v2570 = vmul.f32 %v2560, %v2560
    %v2571 = vmul.f32 %v2562, %v2562
    %v2572 = vadd.f32 %v2566, %v2567
    %v2573 = vadd.f32 %v2572, %v2568
    %v2574 = vadd.f32 %v2573, %v2569
    %v2575 = vadd.f32 %v2574, %v2570
    %v2576 = vadd.f32 %v2575, %v2571
    %2577 = vadd.xlane.f32.xlu0 %v2576
    %v2578 = vpop.xlane.xlu0 %2577
    %v2579 = vadd.f32 %v2578, 1e-24
    %v2580 = vrsqrt.pop %v2579
    %v2581 = vmul.f32 %v2580, 0.01
    %v2582 = vmul.f32 %v2581, %v2478
    %v2583 = vmul.f32 %v2581, %v2480
    %v2584 = vmul.f32 %v2581, %v2519
    %v2585 = vmul.f32 %v2581, %v2521
    %v2586 = vmul.f32 %v2581, %v2560
    %v2587 = vmul.f32 %v2581, %v2562
    %v2588 = vsub.f32 %v2299, %v2582
    %v2589 = vsub.f32 %v2300, %v2583
    %v2590 = vsub.f32 %v2301, %v2584
    %v2591 = vsub.f32 %v2302, %v2585
    %v2592 = vsub.f32 %v2303, %v2586
    %v2593 = vsub.f32 %v2304, %v2587
    %v2594 = vsub.f32 %v2588, %v59
    %v2595 = vsub.f32 %v2589, %v60
    %v2596 = vsub.f32 %v2590, %v61
    %v2597 = vsub.f32 %v2591, %v62
    %v2598 = vsub.f32 %v2592, %v63
    %v2599 = vsub.f32 %v2593, %v64
    %v2600 = vmul.f32 %v2594, %v2594
    %v2601 = vmul.f32 %v2595, %v2595
    %v2602 = vmul.f32 %v2596, %v2596
    %v2603 = vmul.f32 %v2597, %v2597
    %v2604 = vmul.f32 %v2598, %v2598
    %v2605 = vmul.f32 %v2599, %v2599
    %v2606 = vadd.f32 %v2600, %v2601
    %v2607 = vadd.f32 %v2606, %v2602
    %v2608 = vadd.f32 %v2607, %v2603
    %v2609 = vadd.f32 %v2608, %v2604
    %v2610 = vadd.f32 %v2609, %v2605
    %2611 = vadd.xlane.f32.xlu0 %v2610
    %v2612 = vpop.xlane.xlu0 %2611
    %v2613 = vadd.f32 %v2612, 1e-24
    %v2614 = vrsqrt.pop %v2613
    %v2615 = vmul.f32 %v2614, 0.5
    %v2616 = vmin.f32 %v2615, 1.0
    %v2617 = vmul.f32 %v2594, %v2616
    %v2618 = vmul.f32 %v2595, %v2616
    %v2619 = vmul.f32 %v2596, %v2616
    %v2620 = vmul.f32 %v2597, %v2616
    %v2621 = vmul.f32 %v2598, %v2616
    %v2622 = vmul.f32 %v2599, %v2616
    %v2623 = vadd.f32 %v59, %v2617
    %v2624 = vadd.f32 %v60, %v2618
    %v2625 = vadd.f32 %v61, %v2619
    %v2626 = vadd.f32 %v62, %v2620
    %v2627 = vadd.f32 %v63, %v2621
    %v2628 = vadd.f32 %v64, %v2622
    %v2629 = vpack.c.bf16 %v2623, %v2623
    %v2630 = vpack.c.bf16 %v2624, %v2624
    %v2631 = vpack.c.bf16 %v2625, %v2625
    %v2632 = vpack.c.bf16 %v2626, %v2626
    %v2633 = vpack.c.bf16 %v2627, %v2627
    %v2634 = vpack.c.bf16 %v2628, %v2628
    %2635 = vmatprep.subr.bf16.mxu0 %v272
    %2636 = vmatpush1.bf16.xpose.msra.mxu0 %v271
    %2637 = vmatprep.subr.bf16.mxu0 %v278
    %2638 = vmatpush1.bf16.xpose.msra.mxu0 %v277
    %2639 = vmatprep.subr.bf16.mxu0 %v284
    %2640 = vmatpush1.bf16.xpose.msra.mxu0 %v283
    %2641 = vmatprep.subr.bf16.mxu0 %v290
    %2642 = vmatpush1.bf16.xpose.msra.mxu0 %v289
    %2643 = vmatprep.subr.bf16.mxu0 %v296
    %2644 = vmatpush1.bf16.xpose.msra.mxu0 %v295
    %2645 = vmatprep.subr.bf16.mxu0 %v302
    %2646 = vmatpush1.bf16.xpose.msra.mxu0 %v301
    %2647 = vmatprep.subr.bf16.mxu0 %v308
    %2648 = vmatpush1.bf16.xpose.msra.mxu0 %v307
    %2649 = vmatprep.subr.bf16.mxu0 %v314
    %2650 = vmatpush1.bf16.xpose.msra.mxu0 %v313
    %2651 = vmatprep.subr.bf16.mxu0 0
    %2652 = vmatpush1.bf16.xpose.msra.mxu0 0
    %2653 = vmatprep.subr.bf16.mxu0 0
    %2654 = vmatpush1.bf16.xpose.msra.mxu0 0
    %2655 = vmatprep.subr.bf16.mxu0 0
    %2656 = vmatpush1.bf16.xpose.msra.mxu0 0
    %2657 = vmatprep.subr.bf16.mxu0 0
    %2658 = vmatpush1.bf16.xpose.msra.mxu0 0
    %2659 = vmatprep.subr.bf16.mxu0 0
    %2660 = vmatpush1.bf16.xpose.msra.mxu0 0
    %2661 = vmatprep.subr.bf16.mxu0 0
    %2662 = vmatpush1.bf16.xpose.msra.mxu0 0
    %2663 = vmatprep.subr.bf16.mxu0 0
    %2664 = vmatpush1.bf16.xpose.msra.mxu0 0
    %2665 = vmatprep.subr.bf16.mxu0 0
    %2666 = vmatpush1.bf16.xpose.msra.mxu0 0
    %2667 = vmatprep.mubr.bf16.mxu0 %v2630
    %2668 = vmatmul.mubr.bf16.gmra.mrb[0].mxu0 %v2629
    %v2669 = vpop.f32.mrb[0].mxu0
    %v2670 = vadd.f32 %v125, %v2669
    %v2671 = vpop.f32.mrb[0].mxu0
    %v2672 = vpop.f32.mrb[0].mxu0
    %v2673 = vpop.f32.mrb[0].mxu0
    %2674 = vdwg.mxu0
    %2675 = vmatprep.subr.bf16.mxu0 %v274
    %2676 = vmatpush1.bf16.xpose.msra.mxu0 %v273
    %2677 = vmatprep.subr.bf16.mxu0 %v280
    %2678 = vmatpush1.bf16.xpose.msra.mxu0 %v279
    %2679 = vmatprep.subr.bf16.mxu0 %v286
    %2680 = vmatpush1.bf16.xpose.msra.mxu0 %v285
    %2681 = vmatprep.subr.bf16.mxu0 %v292
    %2682 = vmatpush1.bf16.xpose.msra.mxu0 %v291
    %2683 = vmatprep.subr.bf16.mxu0 %v298
    %2684 = vmatpush1.bf16.xpose.msra.mxu0 %v297
    %2685 = vmatprep.subr.bf16.mxu0 %v304
    %2686 = vmatpush1.bf16.xpose.msra.mxu0 %v303
    %2687 = vmatprep.subr.bf16.mxu0 %v310
    %2688 = vmatpush1.bf16.xpose.msra.mxu0 %v309
    %2689 = vmatprep.subr.bf16.mxu0 %v316
    %2690 = vmatpush1.bf16.xpose.msra.mxu0 %v315
    %2691 = vmatprep.subr.bf16.mxu0 0
    %2692 = vmatpush1.bf16.xpose.msra.mxu0 0
    %2693 = vmatprep.subr.bf16.mxu0 0
    %2694 = vmatpush1.bf16.xpose.msra.mxu0 0
    %2695 = vmatprep.subr.bf16.mxu0 0
    %2696 = vmatpush1.bf16.xpose.msra.mxu0 0
    %2697 = vmatprep.subr.bf16.mxu0 0
    %2698 = vmatpush1.bf16.xpose.msra.mxu0 0
    %2699 = vmatprep.subr.bf16.mxu0 0
    %2700 = vmatpush1.bf16.xpose.msra.mxu0 0
    %2701 = vmatprep.subr.bf16.mxu0 0
    %2702 = vmatpush1.bf16.xpose.msra.mxu0 0
    %2703 = vmatprep.subr.bf16.mxu0 0
    %2704 = vmatpush1.bf16.xpose.msra.mxu0 0
    %2705 = vmatprep.subr.bf16.mxu0 0
    %2706 = vmatpush1.bf16.xpose.msra.mxu0 0
    %2707 = vmatprep.mubr.bf16.mxu0 %v2632
    %2708 = vmatmul.mubr.bf16.gmra.mrb[0].mxu0 %v2631
    %v2709 = vpop.f32.mrb[0].mxu0
    %v2710 = vadd.f32 %v2670, %v2709
    %v2711 = vpop.f32.mrb[0].mxu0
    %v2712 = vpop.f32.mrb[0].mxu0
    %v2713 = vpop.f32.mrb[0].mxu0
    %2714 = vdwg.mxu0
    %2715 = vmatprep.subr.bf16.mxu0 %v276
    %2716 = vmatpush1.bf16.xpose.msra.mxu0 %v275
    %2717 = vmatprep.subr.bf16.mxu0 %v282
    %2718 = vmatpush1.bf16.xpose.msra.mxu0 %v281
    %2719 = vmatprep.subr.bf16.mxu0 %v288
    %2720 = vmatpush1.bf16.xpose.msra.mxu0 %v287
    %2721 = vmatprep.subr.bf16.mxu0 %v294
    %2722 = vmatpush1.bf16.xpose.msra.mxu0 %v293
    %2723 = vmatprep.subr.bf16.mxu0 %v300
    %2724 = vmatpush1.bf16.xpose.msra.mxu0 %v299
    %2725 = vmatprep.subr.bf16.mxu0 %v306
    %2726 = vmatpush1.bf16.xpose.msra.mxu0 %v305
    %2727 = vmatprep.subr.bf16.mxu0 %v312
    %2728 = vmatpush1.bf16.xpose.msra.mxu0 %v311
    %2729 = vmatprep.subr.bf16.mxu0 %v318
    %2730 = vmatpush1.bf16.xpose.msra.mxu0 %v317
    %2731 = vmatprep.subr.bf16.mxu0 0
    %2732 = vmatpush1.bf16.xpose.msra.mxu0 0
    %2733 = vmatprep.subr.bf16.mxu0 0
    %2734 = vmatpush1.bf16.xpose.msra.mxu0 0
    %2735 = vmatprep.subr.bf16.mxu0 0
    %2736 = vmatpush1.bf16.xpose.msra.mxu0 0
    %2737 = vmatprep.subr.bf16.mxu0 0
    %2738 = vmatpush1.bf16.xpose.msra.mxu0 0
    %2739 = vmatprep.subr.bf16.mxu0 0
    %2740 = vmatpush1.bf16.xpose.msra.mxu0 0
    %2741 = vmatprep.subr.bf16.mxu0 0
    %2742 = vmatpush1.bf16.xpose.msra.mxu0 0
    %2743 = vmatprep.subr.bf16.mxu0 0
    %2744 = vmatpush1.bf16.xpose.msra.mxu0 0
    %2745 = vmatprep.subr.bf16.mxu0 0
    %2746 = vmatpush1.bf16.xpose.msra.mxu0 0
    %2747 = vmatprep.mubr.bf16.mxu0 %v2634
    %2748 = vmatmul.mubr.bf16.gmra.mrb[0].mxu0 %v2633
    %v2749 = vpop.f32.mrb[0].mxu0
    %v2750 = vadd.f32 %v2710, %v2749
    %v2751 = vpop.f32.mrb[0].mxu0
    %v2752 = vpop.f32.mrb[0].mxu0
    %v2753 = vpop.f32.mrb[0].mxu0
    %2754 = vdwg.mxu0
    %2755 = vmax.xlane.f32.xlu0 %v2750
    %v2756 = vpop.xlane.xlu0 %2755
    %v2757 = vsub.f32 %v2750, %v2756
    %v2758 = vmul.f32 %v2757, 1.442695
    %v2759 = vpow.pop %v2758
    %2760 = vadd.xlane.f32.xlu0 %v2759
    %v2761 = vpop.xlane.xlu0 %2760
    %v2762 = vrcp.pop %v2761
    %v2763 = vmul.f32 %v2759, %v2762
    %v2764 = vsub.f32 %v2763, %v65
    %v2765 = vmul.f32 %v2764, 0.5
    %v2766 = vpack.c.bf16 %v2765, %v2765
    %2767 = vmatprep.subr.bf16.mxu0 %v272
    %2768 = vmatpush1.bf16.msra.mxu0 %v271
    %2769 = vmatprep.subr.bf16.mxu0 %v278
    %2770 = vmatpush1.bf16.msra.mxu0 %v277
    %2771 = vmatprep.subr.bf16.mxu0 %v284
    %2772 = vmatpush1.bf16.msra.mxu0 %v283
    %2773 = vmatprep.subr.bf16.mxu0 %v290
    %2774 = vmatpush1.bf16.msra.mxu0 %v289
    %2775 = vmatprep.subr.bf16.mxu0 %v296
    %2776 = vmatpush1.bf16.msra.mxu0 %v295
    %2777 = vmatprep.subr.bf16.mxu0 %v302
    %2778 = vmatpush1.bf16.msra.mxu0 %v301
    %2779 = vmatprep.subr.bf16.mxu0 %v308
    %2780 = vmatpush1.bf16.msra.mxu0 %v307
    %2781 = vmatprep.subr.bf16.mxu0 %v314
    %2782 = vmatpush1.bf16.msra.mxu0 %v313
    %2783 = vmatprep.subr.bf16.mxu0 0
    %2784 = vmatpush1.bf16.msra.mxu0 0
    %2785 = vmatprep.subr.bf16.mxu0 0
    %2786 = vmatpush1.bf16.msra.mxu0 0
    %2787 = vmatprep.subr.bf16.mxu0 0
    %2788 = vmatpush1.bf16.msra.mxu0 0
    %2789 = vmatprep.subr.bf16.mxu0 0
    %2790 = vmatpush1.bf16.msra.mxu0 0
    %2791 = vmatprep.subr.bf16.mxu0 0
    %2792 = vmatpush1.bf16.msra.mxu0 0
    %2793 = vmatprep.subr.bf16.mxu0 0
    %2794 = vmatpush1.bf16.msra.mxu0 0
    %2795 = vmatprep.subr.bf16.mxu0 0
    %2796 = vmatpush1.bf16.msra.mxu0 0
    %2797 = vmatprep.subr.bf16.mxu0 0
    %2798 = vmatpush1.bf16.msra.mxu0 0
    %2799 = vmatprep.mubr.bf16.mxu0 0
    %2800 = vmatmul.mubr.bf16.gmra.mrb[0].mxu0 %v2766
    %v2801 = vpop.f32.mrb[0].mxu0
    %v2802 = vadd.f32 0.0, %v2801
    %v2803 = vpop.f32.mrb[0].mxu0
    %v2804 = vadd.f32 0.0, %v2803
    %v2805 = vpop.f32.mrb[0].mxu0
    %v2806 = vpop.f32.mrb[0].mxu0
    %2807 = vdwg.mxu0
    %2808 = vmatprep.subr.bf16.mxu0 %v274
    %2809 = vmatpush1.bf16.msra.mxu0 %v273
    %2810 = vmatprep.subr.bf16.mxu0 %v280
    %2811 = vmatpush1.bf16.msra.mxu0 %v279
    %2812 = vmatprep.subr.bf16.mxu0 %v286
    %2813 = vmatpush1.bf16.msra.mxu0 %v285
    %2814 = vmatprep.subr.bf16.mxu0 %v292
    %2815 = vmatpush1.bf16.msra.mxu0 %v291
    %2816 = vmatprep.subr.bf16.mxu0 %v298
    %2817 = vmatpush1.bf16.msra.mxu0 %v297
    %2818 = vmatprep.subr.bf16.mxu0 %v304
    %2819 = vmatpush1.bf16.msra.mxu0 %v303
    %2820 = vmatprep.subr.bf16.mxu0 %v310
    %2821 = vmatpush1.bf16.msra.mxu0 %v309
    %2822 = vmatprep.subr.bf16.mxu0 %v316
    %2823 = vmatpush1.bf16.msra.mxu0 %v315
    %2824 = vmatprep.subr.bf16.mxu0 0
    %2825 = vmatpush1.bf16.msra.mxu0 0
    %2826 = vmatprep.subr.bf16.mxu0 0
    %2827 = vmatpush1.bf16.msra.mxu0 0
    %2828 = vmatprep.subr.bf16.mxu0 0
    %2829 = vmatpush1.bf16.msra.mxu0 0
    %2830 = vmatprep.subr.bf16.mxu0 0
    %2831 = vmatpush1.bf16.msra.mxu0 0
    %2832 = vmatprep.subr.bf16.mxu0 0
    %2833 = vmatpush1.bf16.msra.mxu0 0
    %2834 = vmatprep.subr.bf16.mxu0 0
    %2835 = vmatpush1.bf16.msra.mxu0 0
    %2836 = vmatprep.subr.bf16.mxu0 0
    %2837 = vmatpush1.bf16.msra.mxu0 0
    %2838 = vmatprep.subr.bf16.mxu0 0
    %2839 = vmatpush1.bf16.msra.mxu0 0
    %2840 = vmatprep.mubr.bf16.mxu0 0
    %2841 = vmatmul.mubr.bf16.gmra.mrb[0].mxu0 %v2766
    %v2842 = vpop.f32.mrb[0].mxu0
    %v2843 = vadd.f32 0.0, %v2842
    %v2844 = vpop.f32.mrb[0].mxu0
    %v2845 = vadd.f32 0.0, %v2844
    %v2846 = vpop.f32.mrb[0].mxu0
    %v2847 = vpop.f32.mrb[0].mxu0
    %2848 = vdwg.mxu0
    %2849 = vmatprep.subr.bf16.mxu0 %v276
    %2850 = vmatpush1.bf16.msra.mxu0 %v275
    %2851 = vmatprep.subr.bf16.mxu0 %v282
    %2852 = vmatpush1.bf16.msra.mxu0 %v281
    %2853 = vmatprep.subr.bf16.mxu0 %v288
    %2854 = vmatpush1.bf16.msra.mxu0 %v287
    %2855 = vmatprep.subr.bf16.mxu0 %v294
    %2856 = vmatpush1.bf16.msra.mxu0 %v293
    %2857 = vmatprep.subr.bf16.mxu0 %v300
    %2858 = vmatpush1.bf16.msra.mxu0 %v299
    %2859 = vmatprep.subr.bf16.mxu0 %v306
    %2860 = vmatpush1.bf16.msra.mxu0 %v305
    %2861 = vmatprep.subr.bf16.mxu0 %v312
    %2862 = vmatpush1.bf16.msra.mxu0 %v311
    %2863 = vmatprep.subr.bf16.mxu0 %v318
    %2864 = vmatpush1.bf16.msra.mxu0 %v317
    %2865 = vmatprep.subr.bf16.mxu0 0
    %2866 = vmatpush1.bf16.msra.mxu0 0
    %2867 = vmatprep.subr.bf16.mxu0 0
    %2868 = vmatpush1.bf16.msra.mxu0 0
    %2869 = vmatprep.subr.bf16.mxu0 0
    %2870 = vmatpush1.bf16.msra.mxu0 0
    %2871 = vmatprep.subr.bf16.mxu0 0
    %2872 = vmatpush1.bf16.msra.mxu0 0
    %2873 = vmatprep.subr.bf16.mxu0 0
    %2874 = vmatpush1.bf16.msra.mxu0 0
    %2875 = vmatprep.subr.bf16.mxu0 0
    %2876 = vmatpush1.bf16.msra.mxu0 0
    %2877 = vmatprep.subr.bf16.mxu0 0
    %2878 = vmatpush1.bf16.msra.mxu0 0
    %2879 = vmatprep.subr.bf16.mxu0 0
    %2880 = vmatpush1.bf16.msra.mxu0 0
    %2881 = vmatprep.mubr.bf16.mxu0 0
    %2882 = vmatmul.mubr.bf16.gmra.mrb[0].mxu0 %v2766
    %v2883 = vpop.f32.mrb[0].mxu0
    %v2884 = vadd.f32 0.0, %v2883
    %v2885 = vpop.f32.mrb[0].mxu0
    %v2886 = vadd.f32 0.0, %v2885
    %v2887 = vpop.f32.mrb[0].mxu0
    %v2888 = vpop.f32.mrb[0].mxu0
    %2889 = vdwg.mxu0
    %v2890 = vmul.f32 %v2802, %v2802
    %v2891 = vmul.f32 %v2804, %v2804
    %v2892 = vmul.f32 %v2843, %v2843
    %v2893 = vmul.f32 %v2845, %v2845
    %v2894 = vmul.f32 %v2884, %v2884
    %v2895 = vmul.f32 %v2886, %v2886
    %v2896 = vadd.f32 %v2890, %v2891
    %v2897 = vadd.f32 %v2896, %v2892
    %v2898 = vadd.f32 %v2897, %v2893
    %v2899 = vadd.f32 %v2898, %v2894
    %v2900 = vadd.f32 %v2899, %v2895
    %2901 = vadd.xlane.f32.xlu0 %v2900
    %v2902 = vpop.xlane.xlu0 %2901
    %v2903 = vadd.f32 %v2902, 1e-24
    %v2904 = vrsqrt.pop %v2903
    %v2905 = vmul.f32 %v2904, 0.01
    %v2906 = vmul.f32 %v2905, %v2802
    %v2907 = vmul.f32 %v2905, %v2804
    %v2908 = vmul.f32 %v2905, %v2843
    %v2909 = vmul.f32 %v2905, %v2845
    %v2910 = vmul.f32 %v2905, %v2884
    %v2911 = vmul.f32 %v2905, %v2886
    %v2912 = vsub.f32 %v2623, %v2906
    %v2913 = vsub.f32 %v2624, %v2907
    %v2914 = vsub.f32 %v2625, %v2908
    %v2915 = vsub.f32 %v2626, %v2909
    %v2916 = vsub.f32 %v2627, %v2910
    %v2917 = vsub.f32 %v2628, %v2911
    %v2918 = vsub.f32 %v2912, %v59
    %v2919 = vsub.f32 %v2913, %v60
    %v2920 = vsub.f32 %v2914, %v61
    %v2921 = vsub.f32 %v2915, %v62
    %v2922 = vsub.f32 %v2916, %v63
    %v2923 = vsub.f32 %v2917, %v64
    %v2924 = vmul.f32 %v2918, %v2918
    %v2925 = vmul.f32 %v2919, %v2919
    %v2926 = vmul.f32 %v2920, %v2920
    %v2927 = vmul.f32 %v2921, %v2921
    %v2928 = vmul.f32 %v2922, %v2922
    %v2929 = vmul.f32 %v2923, %v2923
    %v2930 = vadd.f32 %v2924, %v2925
    %v2931 = vadd.f32 %v2930, %v2926
    %v2932 = vadd.f32 %v2931, %v2927
    %v2933 = vadd.f32 %v2932, %v2928
    %v2934 = vadd.f32 %v2933, %v2929
    %2935 = vadd.xlane.f32.xlu0 %v2934
    %v2936 = vpop.xlane.xlu0 %2935
    %v2937 = vadd.f32 %v2936, 1e-24
    %v2938 = vrsqrt.pop %v2937
    %v2939 = vmul.f32 %v2938, 0.5
    %v2940 = vmin.f32 %v2939, 1.0
    %v2941 = vmul.f32 %v2918, %v2940
    %v2942 = vmul.f32 %v2919, %v2940
    %v2943 = vmul.f32 %v2920, %v2940
    %v2944 = vmul.f32 %v2921, %v2940
    %v2945 = vmul.f32 %v2922, %v2940
    %v2946 = vmul.f32 %v2923, %v2940
    %v2947 = vadd.f32 %v59, %v2941
    %v2948 = vadd.f32 %v60, %v2942
    %v2949 = vadd.f32 %v61, %v2943
    %v2950 = vadd.f32 %v62, %v2944
    %v2951 = vadd.f32 %v63, %v2945
    %v2952 = vadd.f32 %v64, %v2946
    %2953 = vst [vmem:[#allocation8] sm:$0xff] %v2947
    %2954 = vst [vmem:[#allocation8 + $0x8] sm:$0xff] %v2948
    %2955 = vst [vmem:[#allocation8 + $0x10] sm:$0xff] %v2949
    %2956 = vst [vmem:[#allocation8 + $0x18] sm:$0xff] %v2950
    %2957 = vst [vmem:[#allocation8 + $0x20] sm:$0xff] %v2951
    %2958 = vst [vmem:[#allocation8 + $0x28] sm:$0xff] %v2952
    %2959 = vst [vmem:[#allocation9] sm:$0xff] %v2750
    // Predicated region
    $region30: #{tpu_custom_call.1} parent=1 // pred_check
      _
    $region31: #{tpu_custom_call.1} parent=1 // pred_check_branch
      %2961 = sbr.rel (0) target = $region33
    $region32: #{tpu_custom_call.1} parent=1 // pred_region
      %s2963 = ssub.s32 768, 768
      %2964 = vsyncadd [#allocation4], %s2963
      %s2966 = sshll.u32 [#allocation8], 4
      %s2967 = int_to_ptr.vmem [resolvable:$true] %s2966
      %2969 = dma.vmem_to_hbm [thread:$0]  %s2967, 768, %s4, [#allocation4]
    $region33: #{tpu_custom_call.1} parent=1 // pred_fallthru
      _
    // Predicated region
    $region34: #{tpu_custom_call.1} parent=1 // pred_check
      _
    $region35: #{tpu_custom_call.1} parent=1 // pred_check_branch
      %2971 = sbr.rel (0) target = $region37
    $region36: #{tpu_custom_call.1} parent=1 // pred_region
      %s2973 = ssub.s32 128, 128
      %2974 = vsyncadd [#allocation10], %s2973
      %s2976 = sshll.u32 [#allocation9], 4
      %s2977 = int_to_ptr.vmem [resolvable:$true] %s2976
      %2979 = dma.vmem_to_hbm [thread:$0]  %s2977, 128, %s5, [#allocation10]
    $region37: #{tpu_custom_call.1} parent=1 // pred_fallthru
      _
    // Predicated region
    $region38: #{tpu_custom_call.1} parent=1 // pred_check
      _
    $region39: #{tpu_custom_call.1} parent=1 // pred_check_branch
      %2981 = sbr.rel (0) target = $region41
    $region40: #{tpu_custom_call.1} parent=1 // pred_region
      %2982 = dma.done [#allocation4], 768
    $region41: #{tpu_custom_call.1} parent=1 // pred_fallthru
      _
    // Predicated region
    $region42: #{tpu_custom_call.1} parent=1 // pred_check
      _
    $region43: #{tpu_custom_call.1} parent=1 // pred_check_branch
      %2984 = sbr.rel (0) target = $region45
    $region44: #{tpu_custom_call.1} parent=1 // pred_region
      %2985 = dma.done [#allocation10], 128
    $region45: #{tpu_custom_call.1} parent=1 // pred_fallthru
      _
    %2986 = vsyncpa [#allocation3], 1
    %2987 = vsyncpa [#allocation6], 1
    %2988 = vsyncpa [#allocation4], 1
    %2989 = vsyncpa [#allocation10], 1

</llo_original>
